<compile_context>
chip_gen: v7x
topology: tpu7x:2x2x1
jax: 0.10.0
libtpu: 0.0.40
codegen_flags: <defaults>
</compile_context>

<pallas_src>
import functools
import math

import jax
import jax.numpy as jnp
from jax import lax
from jax.experimental import pallas as pl
from jax.experimental.pallas import tpu as pltpu


# ----------------------------------------------------------------------------
# Pallas kernel: conv-as-matmul  Y = relu(X @ W + b), grid over batch images.
# X: (1, M, K) bf16 patches, W: (K, N) bf16, b: (1, N) f32 -> Y: (1, M, N) bf16
# ----------------------------------------------------------------------------
def _conv_mm_kernel(x_ref, w_ref, b_ref, o_ref):
    acc = jnp.dot(x_ref[0], w_ref[...], preferred_element_type=jnp.float32)
    acc = jnp.maximum(acc + b_ref[...], 0.0)
    o_ref[0] = acc.astype(o_ref.dtype)


def conv_matmul(patches, w, b):
    """relu(patches:(B,M,K) @ w:(K,N) + b:(N,)) -> (B,M,N) bf16."""
    B, M, K = patches.shape
    K2, N = w.shape
    assert K == K2
    flops = 2 * B * M * K * N
    bytes_accessed = (patches.size * patches.dtype.itemsize
                      + w.size * w.dtype.itemsize
                      + b.size * 4 + B * M * N * 2)
    return pl.pallas_call(
        _conv_mm_kernel,
        out_shape=jax.ShapeDtypeStruct((B, M, N), jnp.bfloat16),
        grid=(B,),
        in_specs=[
            pl.BlockSpec((1, M, K), lambda i: (i, 0, 0)),   # per-image patches
            pl.BlockSpec((K, N), lambda i: (0, 0)),          # weight resident
            pl.BlockSpec((1, N), lambda i: (0, 0)),          # bias
        ],
        out_specs=pl.BlockSpec((1, M, N), lambda i: (i, 0, 0)),
        compiler_params=pltpu.CompilerParams(
            dimension_semantics=("parallel",)),               # v7x: 2 TCs
        cost_estimate=pl.CostEstimate(flops=flops, transcendentals=0,
                                      bytes_accessed=bytes_accessed),
    )(patches, w, b.reshape(1, N))


# ----------------------------------------------------------------------------
# Conv2d (valid, stride s) = NHWC im2col (slice+concat glue) + Pallas matmul.
# TODO(synk): move the strided-window patch extraction in-kernel so the patch
# matrix never round-trips through HBM.
# ----------------------------------------------------------------------------
def conv_layer(x, w2d, b, *, kh, kw, stride):
    """x: (B,H,W,C) bf16 NHWC; w2d: (kh*kw*C, OC) bf16, rows in (kh,kw,c) order."""
    B, H, W, C = x.shape
    oh = (H - kh) // stride + 1
    ow = (W - kw) // stride + 1
    cols = []
    for i in range(kh):
        for j in range(kw):
            cols.append(x[:, i:i + stride * oh:stride,
                          j:j + stride * ow:stride, :])
    patches = jnp.concatenate(cols, axis=-1)                 # (B,oh,ow,kh*kw*C)
    patches = patches.reshape(B, oh * ow, kh * kw * C)       # contiguous, free
    assert patches.shape[-1] == w2d.shape[0]
    out = conv_matmul(patches, w2d, b)                       # (B,oh*ow,OC) bf16
    return out.reshape(B, oh, ow, w2d.shape[1])              # contiguous, free


# ----------------------------------------------------------------------------
# Pallas kernel: fused  y = relu(x @ W1 + b1) @ W2 + b2
# Grid = (n-blocks of W1 columns, k-blocks of the contraction), k innermost.
# W1 is streamed/double-buffered in (block_k, 128) bf16 tiles; the hidden
# activation never leaves VMEM; FC2 accumulates into a persistent scratch.
# ----------------------------------------------------------------------------
def _fc_fused_kernel(x_ref, w1_ref, b1_ref, w2_ref, b2_ref, o_ref,
                     h_acc, y_acc):
    n, k = pl.program_id(0), pl.program_id(1)
    last_k = k == pl.num_programs(1) - 1
    last_n = n == pl.num_programs(0) - 1

    @pl.when((n == 0) & (k == 0))
    def _():
        y_acc[...] = jnp.zeros_like(y_acc)

    @pl.when(k == 0)
    def _():
        h_acc[...] = jnp.zeros_like(h_acc)

    # Partial FC1: (B, block_k) @ (block_k, block_n), f32 accumulation.
    h_acc[...] += jnp.dot(x_ref[...], w1_ref[...],
                          preferred_element_type=jnp.float32)

    @pl.when(last_k)
    def _():
        h = jnp.maximum(h_acc[...] + b1_ref[...], 0.0)        # (B, block_n) f32
        y_acc[...] += jnp.dot(h.astype(jnp.bfloat16), w2_ref[...],
                              preferred_element_type=jnp.float32)

    @pl.when(last_k & last_n)
    def _():
        o_ref[...] = (y_acc[...] + b2_ref[...]).astype(o_ref.dtype)


def fc1_fc2_fused(x, w1, b1_2d, w2, b2_2d, *, block_n=128, k_blocks=2):
    B, K = x.shape
    K2, Hd = w1.shape                    # (3328, 512)
    Hd2, NP = w2.shape                   # (512, 128)  (out_num padded to 128)
    assert K == K2 and Hd == Hd2
    assert Hd % block_n == 0 and K % k_blocks == 0
    block_k = K // k_blocks
    assert block_k % 128 == 0, "FC K-blocks must stay lane aligned"
    flops = 2 * B * K * Hd + 2 * B * Hd * NP
    bytes_accessed = (w1.size * 2 + w2.size * 2
                      + x.size * x.dtype.itemsize
                      + b1_2d.size * 4 + b2_2d.size * 4 + B * NP * 4)
    return pl.pallas_call(
        _fc_fused_kernel,
        out_shape=jax.ShapeDtypeStruct((B, NP), jnp.float32),
        grid=(Hd // block_n, k_blocks),                   # n outer, k innermost
        in_specs=[
            pl.BlockSpec((B, block_k), lambda n, k: (0, k)),         # x
            pl.BlockSpec((block_k, block_n), lambda n, k: (k, n)),   # W1 stream
            pl.BlockSpec((1, block_n), lambda n, k: (0, n)),         # b1
            pl.BlockSpec((block_n, NP), lambda n, k: (n, 0)),        # W2 stream
            pl.BlockSpec((1, NP), lambda n, k: (0, 0)),              # b2
        ],
        out_specs=pl.BlockSpec((B, NP), lambda n, k: (0, 0)),
        scratch_shapes=[pltpu.VMEM((B, block_n), jnp.float32),       # h_acc
                        pltpu.VMEM((B, NP), jnp.float32)],           # y_acc
        compiler_params=pltpu.CompilerParams(
            dimension_semantics=("arbitrary", "arbitrary")),
        cost_estimate=pl.CostEstimate(flops=flops, transcendentals=0,
                                      bytes_accessed=bytes_accessed),
    )(x, w1, b1_2d, w2, b2_2d)


# ----------------------------------------------------------------------------
# Parameters: torch-layout init + one-time repack into kernel layout
# ----------------------------------------------------------------------------
def init_params(in_channel=4, out_num=6, seed=0):
    layers = [32, 64, 64]
    key = jax.random.PRNGKey(seed)
    ks = jax.random.split(key, 10)

    def w_init(k, shape, fan_in):
        return jax.random.normal(k, shape, jnp.float32) * (1.0 / math.sqrt(fan_in))

    p = {}
    p["c1_w"] = w_init(ks[0], (layers[0], in_channel, 8, 8), in_channel * 64)
    p["c1_b"] = w_init(ks[1], (layers[0],), in_channel * 64)
    p["c2_w"] = w_init(ks[2], (layers[1], layers[0], 4, 4), layers[0] * 16)
    p["c2_b"] = w_init(ks[3], (layers[1],), layers[0] * 16)
    p["c3_w"] = w_init(ks[4], (layers[2], layers[1], 3, 3), layers[1] * 9)
    p["c3_b"] = w_init(ks[5], (layers[2],), layers[1] * 9)
    p["l1_w"] = w_init(ks[6], (7 * 7 * layers[2], 512), 7 * 7 * layers[2])  # (in,out)
    p["l1_b"] = w_init(ks[7], (512,), 7 * 7 * layers[2])
    p["l2_w"] = w_init(ks[8], (512, out_num), 512)                          # (in,out)
    p["l2_b"] = w_init(ks[9], (out_num,), 512)
    return p


def prepare_params(p, out_num=6, lane_pad=128, fc_k_pad=3328):
    """One-time host-side repack: torch layout -> kernel layout (bf16 weights)."""
    wdt = jnp.bfloat16

    def conv_w(w, ic_pad, oc_pad):
        OC, IC, KH, KW = w.shape
        w = jnp.transpose(w, (2, 3, 1, 0))                    # (KH,KW,IC,OC)
        if ic_pad > IC:
            w = jnp.pad(w, ((0, 0), (0, 0), (0, ic_pad - IC), (0, 0)))
        w = w.reshape(KH * KW * ic_pad, OC)                   # rows: (kh,kw,c)
        if oc_pad > OC:
            w = jnp.pad(w, ((0, 0), (0, oc_pad - OC)))
        return w.astype(wdt)

    def pad_vec(v, n):
        return jnp.pad(v, (0, n - v.shape[0])) if n > v.shape[0] else v

    oc1 = 64                                   # conv1 OC padded only 32 -> 64
    kp = {}
    kp["c1_w"] = conv_w(p["c1_w"], p["c1_w"].shape[1], oc1)          # (256, 64)
    kp["c1_b"] = pad_vec(p["c1_b"], oc1)                             # (64,) f32
    kp["c2_w"] = conv_w(p["c2_w"], oc1, p["c2_w"].shape[0])          # (1024,64)
    kp["c2_b"] = p["c2_b"]
    kp["c3_w"] = conv_w(p["c3_w"], p["c2_w"].shape[0], p["c3_w"].shape[0])  # (576,64)
    kp["c3_b"] = p["c3_b"]

    # FC1: permute rows once from torch (C,H,W) flatten order to NHWC (H,W,C)
    # order, then zero-pad K 3136 -> 3328 (= 26*128) for lane-aligned K-blocks.
    C, Hs, Ws = p["c3_w"].shape[0], 7, 7
    cc = jnp.arange(C)[None, None, :]
    hh = jnp.arange(Hs)[:, None, None]
    ww = jnp.arange(Ws)[None, :, None]
    perm = (cc * (Hs * Ws) + hh * Ws + ww).reshape(-1)     # [h,w,c] -> c*49+h*7+w
    w1 = p["l1_w"][perm, :]                                          # (3136, 512)
    w1 = jnp.pad(w1, ((0, fc_k_pad - w1.shape[0]), (0, 0)))          # (3328, 512)
    kp["l1_w"] = w1.astype(wdt)
    kp["l1_b"] = p["l1_b"].reshape(1, 512)
    # FC2: pad output lanes out_num -> 128 (sliced back outside the kernel).
    kp["l2_w"] = jnp.pad(p["l2_w"], ((0, 0), (0, lane_pad - out_num))).astype(wdt)
    kp["l2_b"] = jnp.pad(p["l2_b"], (0, lane_pad - out_num)).reshape(1, lane_pad)
    return kp


# ----------------------------------------------------------------------------
# Forward pass (Net.forward), NCHW input like PyTorch
# ----------------------------------------------------------------------------
@functools.partial(jax.jit, static_argnames=("out_num",))
def net_forward(kp, x, out_num=6):
    x = jnp.transpose(x, (0, 2, 3, 1)).astype(jnp.bfloat16)      # NCHW->NHWC once
    x = conv_layer(x, kp["c1_w"], kp["c1_b"], kh=8, kw=8, stride=4)   # (B,20,20,64)
    x = conv_layer(x, kp["c2_w"], kp["c2_b"], kh=4, kw=4, stride=2)   # (B, 9, 9,64)
    x = conv_layer(x, kp["c3_w"], kp["c3_b"], kh=3, kw=3, stride=1)   # (B, 7, 7,64)
    x = x.reshape(x.shape[0], -1)                               # (B,3136) (h,w,c)
    k_pad = kp["l1_w"].shape[0]
    x = jnp.pad(x, ((0, 0), (0, k_pad - x.shape[1])))           # (B,3328) bf16
    y = fc1_fc2_fused(x, kp["l1_w"], kp["l1_b"], kp["l2_w"], kp["l2_b"])  # (B,128)
    return y[:, :out_num]                                       # (B, out_num)


# ----------------------------------------------------------------------------
# Pure-JAX f32 reference (torch-layout params) for correctness check only
# ----------------------------------------------------------------------------
def net_forward_ref(p, x):
    dn = lax.conv_dimension_numbers(x.shape, p["c1_w"].shape, ("NCHW", "OIHW", "NCHW"))

    def conv(x, w, b, s):
        y = lax.conv_general_dilated(x, w, (s, s), "VALID", dimension_numbers=dn)
        return jnp.maximum(y + b[None, :, None, None], 0.0)

    x = conv(x, p["c1_w"], p["c1_b"], 4)
    x = conv(x, p["c2_w"], p["c2_b"], 2)
    x = conv(x, p["c3_w"], p["c3_b"], 1)
    x = x.reshape(x.shape[0], -1)
    x = jnp.maximum(x @ p["l1_w"] + p["l1_b"], 0.0)
    return x @ p["l2_w"] + p["l2_b"]


if __name__ == "__main__":
    B, C, H, W = 2, 4, 84, 84      # 84x84 is required by the hard-coded 7*7*64 flatten
    OUT = 6
    key = jax.random.PRNGKey(0)
    x = jax.random.normal(key, (B, C, H, W), jnp.float32)

    params = init_params(in_channel=C, out_num=OUT, seed=0)
    kparams = jax.tree_util.tree_map(jax.block_until_ready,
                                     prepare_params(params, out_num=OUT))

    y = jax.block_until_ready(net_forward(kparams, x, out_num=OUT))
    assert y.shape == (B, OUT) and y.dtype == jnp.float32

    y_ref = jax.block_until_ready(net_forward_ref(params, x))
    # bf16 weights + bf16 inter-layer activations vs f32 reference -> ~1% noise.
    if not jnp.allclose(y, y_ref, rtol=3e-2, atol=3e-2):
        raise AssertionError("Pallas forward does not match reference")

    print("KERNEL_OK")
</pallas_src>

<mosaic_0001>
module attributes {stable_mosaic.version = 11 : i64} {
  func.func @_conv_mm_kernel(%arg0: i32, %arg1: memref<1x400x256xbf16, #tpu.memory_space<vmem>>, %arg2: memref<256x64xbf16, #tpu.memory_space<vmem>>, %arg3: memref<1x64xf32, #tpu.memory_space<vmem>>, %arg4: memref<1x400x64xbf16, #tpu.memory_space<vmem>>) attributes {dimension_semantics = [#tpu.dimension_semantics<parallel>], iteration_bounds = array<i64: 2>, scalar_prefetch = 0 : i64, scratch_operands = 0 : i64, tpu.core_type = #tpu.core_type<tc>, window_params = [{transform_indices = @transform_0, window_bounds = array<i64: 1, 400, 256>}, {pipeline_mode = #tpu.pipeline_mode<synchronous>, transform_indices = @transform_1, window_bounds = array<i64: 256, 64>}, {pipeline_mode = #tpu.pipeline_mode<synchronous>, transform_indices = @transform_2, window_bounds = array<i64: 1, 64>}, {transform_indices = @transform_3, window_bounds = array<i64: 1, 400, 64>}]} {
    %c0 = arith.constant 0 : index
    %c0_0 = arith.constant 0 : index
    %c0_1 = arith.constant 0 : index
    %0 = vector.load %arg1[%c0, %c0_0, %c0_1] : memref<1x400x256xbf16, #tpu.memory_space<vmem>>, vector<1x400x256xbf16>
    %1 = vector.shape_cast %0 : vector<1x400x256xbf16> to vector<400x256xbf16>
    %c0_2 = arith.constant 0 : index
    %c0_3 = arith.constant 0 : index
    %2 = vector.load %arg2[%c0_2, %c0_3] : memref<256x64xbf16, #tpu.memory_space<vmem>>, vector<256x64xbf16>
    %cst = arith.constant dense<0.000000e+00> : vector<400x64xf32>
    %3 = tpu.matmul %1, %2, %cst {dimension_numbers = #tpu.dot_dimension_numbers<[1], [0], [0], [1], [0, 0, 1, 1], [], []>} : vector<400x256xbf16>, vector<256x64xbf16>, vector<400x64xf32> -> vector<400x64xf32>
    %c0_4 = arith.constant 0 : index
    %c0_5 = arith.constant 0 : index
    %4 = vector.load %arg3[%c0_4, %c0_5] : memref<1x64xf32, #tpu.memory_space<vmem>>, vector<1x64xf32>
    %5 = vector.broadcast %4 : vector<1x64xf32> to vector<400x64xf32>
    %6 = arith.addf %3, %5 : vector<400x64xf32>
    %cst_6 = arith.constant 0.000000e+00 : f32
    %7 = vector.broadcast %cst_6 : f32 to vector<400x64xf32>
    %8 = arith.maximumf %6, %7 : vector<400x64xf32>
    %9 = arith.truncf %8 : vector<400x64xf32> to vector<400x64xbf16>
    %c0_7 = arith.constant 0 : index
    %c0_8 = arith.constant 0 : index
    %c0_9 = arith.constant 0 : index
    %10 = vector.load %arg4[%c0_7, %c0_8, %c0_9] : memref<1x400x64xbf16, #tpu.memory_space<vmem>>, vector<1x400x64xbf16>
    %11 = vector.shape_cast %10 : vector<1x400x64xbf16> to vector<400x64xbf16>
    %12 = vector.shape_cast %9 : vector<400x64xbf16> to vector<1x400x64xbf16>
    tpu.vector_store %arg4[%c0_7, %c0_8, %c0_9], %12 {strides = array<i32>} : memref<1x400x64xbf16, #tpu.memory_space<vmem>>, vector<1x400x64xbf16>,
    return
  }
  func.func @transform_0(%arg0: i32) -> (i32, i32, i32) {
    %c0_i32 = arith.constant 0 : i32
    %c0_i32_0 = arith.constant 0 : i32
    %c0_i32_1 = arith.constant 0 : i32
    return %arg0, %c0_i32, %c0_i32_0 : i32, i32, i32
  }
  func.func @transform_1(%arg0: i32) -> (i32, i32) {
    %c0_i32 = arith.constant 0 : i32
    %c0_i32_0 = arith.constant 0 : i32
    %c0_i32_1 = arith.constant 0 : i32
    return %c0_i32, %c0_i32_0 : i32, i32
  }
  func.func @transform_2(%arg0: i32) -> (i32, i32) {
    %c0_i32 = arith.constant 0 : i32
    %c0_i32_0 = arith.constant 0 : i32
    %c0_i32_1 = arith.constant 0 : i32
    return %c0_i32, %c0_i32_0 : i32, i32
  }
  func.func @transform_3(%arg0: i32) -> (i32, i32, i32) {
    %c0_i32 = arith.constant 0 : i32
    %c0_i32_0 = arith.constant 0 : i32
    %c0_i32_1 = arith.constant 0 : i32
    return %arg0, %c0_i32, %c0_i32_0 : i32, i32, i32
  }
}

module attributes {stable_mosaic.version = 11 : i64} {
  func.func @_conv_mm_kernel(%arg0: i32, %arg1: memref<1x81x1024xbf16, #tpu.memory_space<vmem>>, %arg2: memref<1024x64xbf16, #tpu.memory_space<vmem>>, %arg3: memref<1x64xf32, #tpu.memory_space<vmem>>, %arg4: memref<1x81x64xbf16, #tpu.memory_space<vmem>>) attributes {dimension_semantics = [#tpu.dimension_semantics<parallel>], iteration_bounds = array<i64: 2>, scalar_prefetch = 0 : i64, scratch_operands = 0 : i64, tpu.core_type = #tpu.core_type<tc>, window_params = [{transform_indices = @transform_0, window_bounds = array<i64: 1, 81, 1024>}, {pipeline_mode = #tpu.pipeline_mode<synchronous>, transform_indices = @transform_1, window_bounds = array<i64: 1024, 64>}, {pipeline_mode = #tpu.pipeline_mode<synchronous>, transform_indices = @transform_2, window_bounds = array<i64: 1, 64>}, {transform_indices = @transform_3, window_bounds = array<i64: 1, 81, 64>}]} {
    %c0 = arith.constant 0 : index
    %c0_0 = arith.constant 0 : index
    %c0_1 = arith.constant 0 : index
    %0 = vector.load %arg1[%c0, %c0_0, %c0_1] : memref<1x81x1024xbf16, #tpu.memory_space<vmem>>, vector<1x81x1024xbf16>
    %1 = vector.shape_cast %0 : vector<1x81x1024xbf16> to vector<81x1024xbf16>
    %c0_2 = arith.constant 0 : index
    %c0_3 = arith.constant 0 : index
    %2 = vector.load %arg2[%c0_2, %c0_3] : memref<1024x64xbf16, #tpu.memory_space<vmem>>, vector<1024x64xbf16>
    %cst = arith.constant dense<0.000000e+00> : vector<81x64xf32>
    %3 = tpu.matmul %1, %2, %cst {dimension_numbers = #tpu.dot_dimension_numbers<[1], [0], [0], [1], [0, 0, 1, 1], [], []>} : vector<81x1024xbf16>, vector<1024x64xbf16>, vector<81x64xf32> -> vector<81x64xf32>
    %c0_4 = arith.constant 0 : index
    %c0_5 = arith.constant 0 : index
    %4 = vector.load %arg3[%c0_4, %c0_5] : memref<1x64xf32, #tpu.memory_space<vmem>>, vector<1x64xf32>
    %5 = vector.broadcast %4 : vector<1x64xf32> to vector<81x64xf32>
    %6 = arith.addf %3, %5 : vector<81x64xf32>
    %cst_6 = arith.constant 0.000000e+00 : f32
    %7 = vector.broadcast %cst_6 : f32 to vector<81x64xf32>
    %8 = arith.maximumf %6, %7 : vector<81x64xf32>
    %9 = arith.truncf %8 : vector<81x64xf32> to vector<81x64xbf16>
    %c0_7 = arith.constant 0 : index
    %c0_8 = arith.constant 0 : index
    %c0_9 = arith.constant 0 : index
    %10 = vector.load %arg4[%c0_7, %c0_8, %c0_9] : memref<1x81x64xbf16, #tpu.memory_space<vmem>>, vector<1x81x64xbf16>
    %11 = vector.shape_cast %10 : vector<1x81x64xbf16> to vector<81x64xbf16>
    %12 = vector.shape_cast %9 : vector<81x64xbf16> to vector<1x81x64xbf16>
    tpu.vector_store %arg4[%c0_7, %c0_8, %c0_9], %12 {strides = array<i32>} : memref<1x81x64xbf16, #tpu.memory_space<vmem>>, vector<1x81x64xbf16>,
    return
  }
  func.func @transform_0(%arg0: i32) -> (i32, i32, i32) {
    %c0_i32 = arith.constant 0 : i32
    %c0_i32_0 = arith.constant 0 : i32
    %c0_i32_1 = arith.constant 0 : i32
    return %arg0, %c0_i32, %c0_i32_0 : i32, i32, i32
  }
  func.func @transform_1(%arg0: i32) -> (i32, i32) {
    %c0_i32 = arith.constant 0 : i32
    %c0_i32_0 = arith.constant 0 : i32
    %c0_i32_1 = arith.constant 0 : i32
    return %c0_i32, %c0_i32_0 : i32, i32
  }
  func.func @transform_2(%arg0: i32) -> (i32, i32) {
    %c0_i32 = arith.constant 0 : i32
    %c0_i32_0 = arith.constant 0 : i32
    %c0_i32_1 = arith.constant 0 : i32
    return %c0_i32, %c0_i32_0 : i32, i32
  }
  func.func @transform_3(%arg0: i32) -> (i32, i32, i32) {
    %c0_i32 = arith.constant 0 : i32
    %c0_i32_0 = arith.constant 0 : i32
    %c0_i32_1 = arith.constant 0 : i32
    return %arg0, %c0_i32, %c0_i32_0 : i32, i32, i32
  }
}

module attributes {stable_mosaic.version = 11 : i64} {
  func.func @_conv_mm_kernel(%arg0: i32, %arg1: memref<1x49x576xbf16, #tpu.memory_space<vmem>>, %arg2: memref<576x64xbf16, #tpu.memory_space<vmem>>, %arg3: memref<1x64xf32, #tpu.memory_space<vmem>>, %arg4: memref<1x49x64xbf16, #tpu.memory_space<vmem>>) attributes {dimension_semantics = [#tpu.dimension_semantics<parallel>], iteration_bounds = array<i64: 2>, scalar_prefetch = 0 : i64, scratch_operands = 0 : i64, tpu.core_type = #tpu.core_type<tc>, window_params = [{transform_indices = @transform_0, window_bounds = array<i64: 1, 49, 576>}, {pipeline_mode = #tpu.pipeline_mode<synchronous>, transform_indices = @transform_1, window_bounds = array<i64: 576, 64>}, {pipeline_mode = #tpu.pipeline_mode<synchronous>, transform_indices = @transform_2, window_bounds = array<i64: 1, 64>}, {transform_indices = @transform_3, window_bounds = array<i64: 1, 49, 64>}]} {
    %c0 = arith.constant 0 : index
    %c0_0 = arith.constant 0 : index
    %c0_1 = arith.constant 0 : index
    %0 = vector.load %arg1[%c0, %c0_0, %c0_1] : memref<1x49x576xbf16, #tpu.memory_space<vmem>>, vector<1x49x576xbf16>
    %1 = vector.shape_cast %0 : vector<1x49x576xbf16> to vector<49x576xbf16>
    %c0_2 = arith.constant 0 : index
    %c0_3 = arith.constant 0 : index
    %2 = vector.load %arg2[%c0_2, %c0_3] : memref<576x64xbf16, #tpu.memory_space<vmem>>, vector<576x64xbf16>
    %cst = arith.constant dense<0.000000e+00> : vector<49x64xf32>
    %3 = tpu.matmul %1, %2, %cst {dimension_numbers = #tpu.dot_dimension_numbers<[1], [0], [0], [1], [0, 0, 1, 1], [], []>} : vector<49x576xbf16>, vector<576x64xbf16>, vector<49x64xf32> -> vector<49x64xf32>
    %c0_4 = arith.constant 0 : index
    %c0_5 = arith.constant 0 : index
    %4 = vector.load %arg3[%c0_4, %c0_5] : memref<1x64xf32, #tpu.memory_space<vmem>>, vector<1x64xf32>
    %5 = vector.broadcast %4 : vector<1x64xf32> to vector<49x64xf32>
    %6 = arith.addf %3, %5 : vector<49x64xf32>
    %cst_6 = arith.constant 0.000000e+00 : f32
    %7 = vector.broadcast %cst_6 : f32 to vector<49x64xf32>
    %8 = arith.maximumf %6, %7 : vector<49x64xf32>
    %9 = arith.truncf %8 : vector<49x64xf32> to vector<49x64xbf16>
    %c0_7 = arith.constant 0 : index
    %c0_8 = arith.constant 0 : index
    %c0_9 = arith.constant 0 : index
    %10 = vector.load %arg4[%c0_7, %c0_8, %c0_9] : memref<1x49x64xbf16, #tpu.memory_space<vmem>>, vector<1x49x64xbf16>
    %11 = vector.shape_cast %10 : vector<1x49x64xbf16> to vector<49x64xbf16>
    %12 = vector.shape_cast %9 : vector<49x64xbf16> to vector<1x49x64xbf16>
    tpu.vector_store %arg4[%c0_7, %c0_8, %c0_9], %12 {strides = array<i32>} : memref<1x49x64xbf16, #tpu.memory_space<vmem>>, vector<1x49x64xbf16>,
    return
  }
  func.func @transform_0(%arg0: i32) -> (i32, i32, i32) {
    %c0_i32 = arith.constant 0 : i32
    %c0_i32_0 = arith.constant 0 : i32
    %c0_i32_1 = arith.constant 0 : i32
    return %arg0, %c0_i32, %c0_i32_0 : i32, i32, i32
  }
  func.func @transform_1(%arg0: i32) -> (i32, i32) {
    %c0_i32 = arith.constant 0 : i32
    %c0_i32_0 = arith.constant 0 : i32
    %c0_i32_1 = arith.constant 0 : i32
    return %c0_i32, %c0_i32_0 : i32, i32
  }
  func.func @transform_2(%arg0: i32) -> (i32, i32) {
    %c0_i32 = arith.constant 0 : i32
    %c0_i32_0 = arith.constant 0 : i32
    %c0_i32_1 = arith.constant 0 : i32
    return %c0_i32, %c0_i32_0 : i32, i32
  }
  func.func @transform_3(%arg0: i32) -> (i32, i32, i32) {
    %c0_i32 = arith.constant 0 : i32
    %c0_i32_0 = arith.constant 0 : i32
    %c0_i32_1 = arith.constant 0 : i32
    return %arg0, %c0_i32, %c0_i32_0 : i32, i32, i32
  }
}

module attributes {stable_mosaic.version = 11 : i64} {
  func.func @_fc_fused_kernel(%arg0: i32, %arg1: i32, %arg2: memref<2x1664xbf16, #tpu.memory_space<vmem>>, %arg3: memref<1664x128xbf16, #tpu.memory_space<vmem>>, %arg4: memref<1x128xf32, #tpu.memory_space<vmem>>, %arg5: memref<128x128xbf16, #tpu.memory_space<vmem>>, %arg6: memref<1x128xf32, #tpu.memory_space<vmem>>, %arg7: memref<2x128xf32, #tpu.memory_space<vmem>>, %arg8: memref<2x128xf32, #tpu.memory_space<vmem>>, %arg9: memref<2x128xf32, #tpu.memory_space<vmem>>) attributes {dimension_semantics = [#tpu.dimension_semantics<arbitrary>, #tpu.dimension_semantics<arbitrary>], iteration_bounds = array<i64: 4, 2>, scalar_prefetch = 0 : i64, scratch_operands = 2 : i64, tpu.core_type = #tpu.core_type<tc>, window_params = [{transform_indices = @transform_0, window_bounds = array<i64: 2, 1664>}, {transform_indices = @transform_1, window_bounds = array<i64: 1664, 128>}, {transform_indices = @transform_2, window_bounds = array<i64: 1, 128>}, {transform_indices = @transform_3, window_bounds = array<i64: 128, 128>}, {pipeline_mode = #tpu.pipeline_mode<synchronous>, transform_indices = @transform_4, window_bounds = array<i64: 1, 128>}, {pipeline_mode = #tpu.pipeline_mode<synchronous>, transform_indices = @transform_5, window_bounds = array<i64: 2, 128>}]} {
    %c1_i32 = arith.constant 1 : i32
    %0 = arith.cmpi eq, %arg1, %c1_i32 : i32
    %c3_i32 = arith.constant 3 : i32
    %1 = arith.cmpi eq, %arg0, %c3_i32 : i32
    %c0_i32 = arith.constant 0 : i32
    %2 = arith.cmpi eq, %arg0, %c0_i32 : i32
    %c0_i32_0 = arith.constant 0 : i32
    %3 = arith.cmpi eq, %arg1, %c0_i32_0 : i32
    %4 = arith.andi %2, %3 : i1
    %5 = arith.extui %4 : i1 to i32
    %c0_i32_1 = arith.constant 0 : i32
    %6 = arith.cmpi ne, %5, %c0_i32_1 : i32
    scf.if %6 {
      %cst_13 = arith.constant 0.000000e+00 : f32
      %21 = vector.broadcast %cst_13 : f32 to vector<2x128xf32>
      %c0_14 = arith.constant 0 : index
      %c0_15 = arith.constant 0 : index
      %22 = vector.load %arg9[%c0_14, %c0_15] : memref<2x128xf32, #tpu.memory_space<vmem>>, vector<2x128xf32>
      tpu.vector_store %arg9[%c0_14, %c0_15], %21 {strides = array<i32>} : memref<2x128xf32, #tpu.memory_space<vmem>>, vector<2x128xf32>,
    } else {
    }
    %c0_i32_2 = arith.constant 0 : i32
    %7 = arith.cmpi eq, %arg1, %c0_i32_2 : i32
    %8 = arith.extui %7 : i1 to i32
    %c0_i32_3 = arith.constant 0 : i32
    %9 = arith.cmpi ne, %8, %c0_i32_3 : i32
    scf.if %9 {
      %cst_13 = arith.constant 0.000000e+00 : f32
      %21 = vector.broadcast %cst_13 : f32 to vector<2x128xf32>
      %c0_14 = arith.constant 0 : index
      %c0_15 = arith.constant 0 : index
      %22 = vector.load %arg8[%c0_14, %c0_15] : memref<2x128xf32, #tpu.memory_space<vmem>>, vector<2x128xf32>
      tpu.vector_store %arg8[%c0_14, %c0_15], %21 {strides = array<i32>} : memref<2x128xf32, #tpu.memory_space<vmem>>, vector<2x128xf32>,
    } else {
    }
    %c0 = arith.constant 0 : index
    %c0_4 = arith.constant 0 : index
    %10 = vector.load %arg8[%c0, %c0_4] : memref<2x128xf32, #tpu.memory_space<vmem>>, vector<2x128xf32>
    %c0_5 = arith.constant 0 : index
    %c0_6 = arith.constant 0 : index
    %11 = vector.load %arg2[%c0_5, %c0_6] : memref<2x1664xbf16, #tpu.memory_space<vmem>>, vector<2x1664xbf16>
    %c0_7 = arith.constant 0 : index
    %c0_8 = arith.constant 0 : index
    %12 = vector.load %arg3[%c0_7, %c0_8] : memref<1664x128xbf16, #tpu.memory_space<vmem>>, vector<1664x128xbf16>
    %cst = arith.constant dense<0.000000e+00> : vector<2x128xf32>
    %13 = tpu.matmul %11, %12, %cst {dimension_numbers = #tpu.dot_dimension_numbers<[1], [0], [0], [1], [0, 0, 1, 1], [], []>} : vector<2x1664xbf16>, vector<1664x128xbf16>, vector<2x128xf32> -> vector<2x128xf32>
    %14 = arith.addf %10, %13 : vector<2x128xf32>
    %c0_9 = arith.constant 0 : index
    %c0_10 = arith.constant 0 : index
    %15 = vector.load %arg8[%c0_9, %c0_10] : memref<2x128xf32, #tpu.memory_space<vmem>>, vector<2x128xf32>
    tpu.vector_store %arg8[%c0_9, %c0_10], %14 {strides = array<i32>} : memref<2x128xf32, #tpu.memory_space<vmem>>, vector<2x128xf32>,
    %16 = arith.extui %0 : i1 to i32
    %c0_i32_11 = arith.constant 0 : i32
    %17 = arith.cmpi ne, %16, %c0_i32_11 : i32
    scf.if %17 {
      %c0_13 = arith.constant 0 : index
      %c0_14 = arith.constant 0 : index
      %21 = vector.load %arg8[%c0_13, %c0_14] : memref<2x128xf32, #tpu.memory_space<vmem>>, vector<2x128xf32>
      %c0_15 = arith.constant 0 : index
      %c0_16 = arith.constant 0 : index
      %22 = vector.load %arg4[%c0_15, %c0_16] : memref<1x128xf32, #tpu.memory_space<vmem>>, vector<1x128xf32>
      %23 = vector.broadcast %22 : vector<1x128xf32> to vector<2x128xf32>
      %24 = arith.addf %21, %23 : vector<2x128xf32>
      %cst_17 = arith.constant 0.000000e+00 : f32
      %25 = vector.broadcast %cst_17 : f32 to vector<2x128xf32>
      %26 = arith.maximumf %24, %25 : vector<2x128xf32>
      %c0_18 = arith.constant 0 : index
      %c0_19 = arith.constant 0 : index
      %27 = vector.load %arg9[%c0_18, %c0_19] : memref<2x128xf32, #tpu.memory_space<vmem>>, vector<2x128xf32>
      %28 = arith.truncf %26 : vector<2x128xf32> to vector<2x128xbf16>
      %c0_20 = arith.constant 0 : index
      %c0_21 = arith.constant 0 : index
      %29 = vector.load %arg5[%c0_20, %c0_21] : memref<128x128xbf16, #tpu.memory_space<vmem>>, vector<128x128xbf16>
      %cst_22 = arith.constant dense<0.000000e+00> : vector<2x128xf32>
      %30 = tpu.matmul %28, %29, %cst_22 {dimension_numbers = #tpu.dot_dimension_numbers<[1], [0], [0], [1], [0, 0, 1, 1], [], []>} : vector<2x128xbf16>, vector<128x128xbf16>, vector<2x128xf32> -> vector<2x128xf32>
      %31 = arith.addf %27, %30 : vector<2x128xf32>
      %c0_23 = arith.constant 0 : index
      %c0_24 = arith.constant 0 : index
      %32 = vector.load %arg9[%c0_23, %c0_24] : memref<2x128xf32, #tpu.memory_space<vmem>>, vector<2x128xf32>
      tpu.vector_store %arg9[%c0_23, %c0_24], %31 {strides = array<i32>} : memref<2x128xf32, #tpu.memory_space<vmem>>, vector<2x128xf32>,
    } else {
    }
    %18 = arith.andi %0, %1 : i1
    %19 = arith.extui %18 : i1 to i32
    %c0_i32_12 = arith.constant 0 : i32
    %20 = arith.cmpi ne, %19, %c0_i32_12 : i32
    scf.if %20 {
      %c0_13 = arith.constant 0 : index
      %c0_14 = arith.constant 0 : index
      %21 = vector.load %arg9[%c0_13, %c0_14] : memref<2x128xf32, #tpu.memory_space<vmem>>, vector<2x128xf32>
      %c0_15 = arith.constant 0 : index
      %c0_16 = arith.constant 0 : index
      %22 = vector.load %arg6[%c0_15, %c0_16] : memref<1x128xf32, #tpu.memory_space<vmem>>, vector<1x128xf32>
      %23 = vector.broadcast %22 : vector<1x128xf32> to vector<2x128xf32>
      %24 = arith.addf %21, %23 : vector<2x128xf32>
      %c0_17 = arith.constant 0 : index
      %c0_18 = arith.constant 0 : index
      %25 = vector.load %arg7[%c0_17, %c0_18] : memref<2x128xf32, #tpu.memory_space<vmem>>, vector<2x128xf32>
      tpu.vector_store %arg7[%c0_17, %c0_18], %24 {strides = array<i32>} : memref<2x128xf32, #tpu.memory_space<vmem>>, vector<2x128xf32>,
    } else {
    }
    return
  }
  func.func @transform_0(%arg0: i32, %arg1: i32) -> (i32, i32) {
    %c0_i32 = arith.constant 0 : i32
    %c0_i32_0 = arith.constant 0 : i32
    return %c0_i32, %arg1 : i32, i32
  }
  func.func @transform_1(%arg0: i32, %arg1: i32) -> (i32, i32) {
    %c0_i32 = arith.constant 0 : i32
    return %arg1, %arg0 : i32, i32
  }
  func.func @transform_2(%arg0: i32, %arg1: i32) -> (i32, i32) {
    %c0_i32 = arith.constant 0 : i32
    %c0_i32_0 = arith.constant 0 : i32
    return %c0_i32, %arg0 : i32, i32
  }
  func.func @transform_3(%arg0: i32, %arg1: i32) -> (i32, i32) {
    %c0_i32 = arith.constant 0 : i32
    %c0_i32_0 = arith.constant 0 : i32
    return %arg0, %c0_i32 : i32, i32
  }
  func.func @transform_4(%arg0: i32, %arg1: i32) -> (i32, i32) {
    %c0_i32 = arith.constant 0 : i32
    %c0_i32_0 = arith.constant 0 : i32
    %c0_i32_1 = arith.constant 0 : i32
    return %c0_i32, %c0_i32_0 : i32, i32
  }
  func.func @transform_5(%arg0: i32, %arg1: i32) -> (i32, i32) {
    %c0_i32 = arith.constant 0 : i32
    %c0_i32_0 = arith.constant 0 : i32
    %c0_i32_1 = arith.constant 0 : i32
    return %c0_i32, %c0_i32_0 : i32, i32
  }
}

</mosaic_0001>

<llo_original>
// kernel: net_forward.4
$region0: #{net_forward.4}
  #allocation0 [shape = 'u32[]', space=smem, size = 0x4, offset = 0x4, fixed_abs, tag = 'smem constant byte address 0x4 - core index']
  #allocation1 [shape = 'u32[144,128]{1,0:T(1,128)}', space=vmem, size = 0x12000, scoped, tag = 'internal scratch']
  %s0 = inlined_call_operand.vmem [shape: bf16[2,400,256], index: 0, kind: input, shape index: {}]
  %s1 = inlined_call_operand.vmem [shape: bf16[256,64], index: 1, kind: input, shape index: {}]
  %s2 = inlined_call_operand.vmem [shape: f32[1,64], index: 2, kind: input, shape index: {}]
  %s3 = inlined_call_operand.vmem [shape: bf16[2,400,64], index: 3, kind: output, shape index: {}]
  %s4 = sld [smem:[#allocation0]]
  $region45: #{net_forward.4} parent=0
    _
  %s6 = ssub.s32 1, %s4
  %s7 = scalar_select 0, %s6, %s4
  loop: start=0, step=1, limit=4
  $region2: #{net_forward.4} parent=0 // loop_pre_header
    _
  $region3: #{net_forward.4} parent=0 // loop_header
    %s9 = sphi 0, %s13
    %p10 = scmp.ge.s32.totalorder %s9, 4
    %s19 = sphi 0, %s21
    %s22 = sphi 0, %s19
    %s23 = sphi 0, %s22
    %s39 = sphi 0, %s23
    %s43 = sphi 0, %s43
    %s45 = sphi 0, %s43
    %s46 = sphi 0, %s45
    %s60 = sphi 0, %s46
    %s64 = sphi 0, %s64
    %s66 = sphi 0, %s64
    %s67 = sphi 0, %s66
    %s81 = sphi 0, %s67
    %s87 = sphi 0, %s89
    %s90 = sphi 0, %s87
    %s91 = sphi 0, %s90
    %s107 = sphi 0, %s91
  $region4: #{net_forward.4} parent=0 // loop_header_branch
    %12 = sbr.rel (%p10) target = $region8
  $region5: #{net_forward.4} parent=0 // loop_body
    %s14 = ssub.s32 %s9, 1
    %s15 = ssub.s32 %s9, 2
    %s16 = sadd.s32 %s9, 1
    %s17 = ssub.s32 %s9, %s16
    %p18 = scmp.eq.s32.totalorder %s17, 0
    %s20 = sadd.s32 %s19, 1
    %s21 = scalar_select %p18, %s19, %s20
    %p24 = pneg %p18
    %p25 = scmp.eq.s32.totalorder %s9, 1
    %p26 = por %p24, %p25
    %p27 = scmp.ne.s32.totalorder %s19, %s22
    %p28 = scmp.eq.s32.totalorder %s9, 0
    %p29 = por %p27, %p28
    %p30 = scmp.ne.s32.totalorder %s19, %s22
    %p31 = scmp.eq.s32.totalorder %s14, 1
    %p32 = por %p30, %p31
    %p33 = scmp.ne.s32.totalorder %s22, %s23
    %p34 = scmp.eq.s32.totalorder %s14, 0
    %p35 = por %p33, %p34
    %p36 = scmp.ne.s32.totalorder %s22, %s23
    %p37 = scmp.eq.s32.totalorder %s15, 1
    %p38 = por %p36, %p37
    %p40 = scmp.ne.s32.totalorder %s23, %s39
    %p41 = scmp.eq.s32.totalorder %s15, 0
    %p42 = por %p40, %p41
    %s44 = sadd.s32 %s43, 1
    %p47 = scmp.eq.s32.totalorder %s9, 1
    %p48 = scmp.ne.s32.totalorder %s43, %s45
    %p49 = scmp.eq.s32.totalorder %s9, 0
    %p50 = por %p48, %p49
    %p51 = scmp.ne.s32.totalorder %s43, %s45
    %p52 = scmp.eq.s32.totalorder %s14, 1
    %p53 = por %p51, %p52
    %p54 = scmp.ne.s32.totalorder %s45, %s46
    %p55 = scmp.eq.s32.totalorder %s14, 0
    %p56 = por %p54, %p55
    %p57 = scmp.ne.s32.totalorder %s45, %s46
    %p58 = scmp.eq.s32.totalorder %s15, 1
    %p59 = por %p57, %p58
    %p61 = scmp.ne.s32.totalorder %s46, %s60
    %p62 = scmp.eq.s32.totalorder %s15, 0
    %p63 = por %p61, %p62
    %s65 = sadd.s32 %s64, 1
    %p68 = scmp.eq.s32.totalorder %s9, 1
    %p69 = scmp.ne.s32.totalorder %s64, %s66
    %p70 = scmp.eq.s32.totalorder %s9, 0
    %p71 = por %p69, %p70
    %p72 = scmp.ne.s32.totalorder %s64, %s66
    %p73 = scmp.eq.s32.totalorder %s14, 1
    %p74 = por %p72, %p73
    %p75 = scmp.ne.s32.totalorder %s66, %s67
    %p76 = scmp.eq.s32.totalorder %s14, 0
    %p77 = por %p75, %p76
    %p78 = scmp.ne.s32.totalorder %s66, %s67
    %p79 = scmp.eq.s32.totalorder %s15, 1
    %p80 = por %p78, %p79
    %p82 = scmp.ne.s32.totalorder %s67, %s81
    %p83 = scmp.eq.s32.totalorder %s15, 0
    %p84 = por %p82, %p83
    %s85 = ssub.s32 %s9, %s16
    %p86 = scmp.eq.s32.totalorder %s85, 0
    %s88 = sadd.s32 %s87, 1
    %s89 = scalar_select %p86, %s87, %s88
    %p92 = pneg %p86
    %p93 = scmp.eq.s32.totalorder %s9, 1
    %p94 = por %p92, %p93
    %p95 = scmp.ne.s32.totalorder %s87, %s90
    %p96 = scmp.eq.s32.totalorder %s9, 0
    %p97 = por %p95, %p96
    %p98 = scmp.ne.s32.totalorder %s87, %s90
    %p99 = scmp.eq.s32.totalorder %s14, 1
    %p100 = por %p98, %p99
    %p101 = scmp.ne.s32.totalorder %s90, %s91
    %p102 = scmp.eq.s32.totalorder %s14, 0
    %p103 = por %p101, %p102
    %p104 = scmp.ne.s32.totalorder %s90, %s91
    %p105 = scmp.eq.s32.totalorder %s15, 1
    %p106 = por %p104, %p105
    %p108 = scmp.ne.s32.totalorder %s91, %s107
    %p109 = scmp.eq.s32.totalorder %s15, 0
    %p110 = por %p108, %p109
    %p111 = scmp.le.s32.totalorder 1, %s9
    %p112 = scmp.lt.s32.totalorder %s9, 3
    %p113 = pnand %p111, %p112
    %p114 = pneg %p113
    // Predicated region
    $region9: #{net_forward.4} parent=5 // pred_check
      _
    $region10: #{net_forward.4} parent=5 // pred_check_branch
      %116 = sbr.rel (%p113) target = $region12
    $region11: #{net_forward.4} parent=5 // pred_region
      %s117 = ssub.s32 %s9, 1
      // Predicated region
      $region13: #{net_forward.4} parent=11 // pred_check
        %p118 = pneg %p56
      $region14: #{net_forward.4} parent=11 // pred_check_branch
        %120 = sbr.rel (%p118) target = $region16
      $region15: #{net_forward.4} parent=11 // pred_region
        _
      $region16: #{net_forward.4} parent=11 // pred_fallthru
        _
      // Predicated region
      $region17: #{net_forward.4} parent=11 // pred_check
        %p121 = pneg %p77
      $region18: #{net_forward.4} parent=11 // pred_check_branch
        %123 = sbr.rel (%p121) target = $region20
      $region19: #{net_forward.4} parent=11 // pred_region
        _
      $region20: #{net_forward.4} parent=11 // pred_fallthru
        _
    $region12: #{net_forward.4} parent=5 // pred_fallthru
      _
    %p124 = scmp.lt.s32.totalorder %s9, 2
    // Predicated region
    $region21: #{net_forward.4} parent=5 // pred_check
      %p125 = pneg %p124
    $region22: #{net_forward.4} parent=5 // pred_check_branch
      %127 = sbr.rel (%p125) target = $region24
    $region23: #{net_forward.4} parent=5 // pred_region
      // Predicated region
      $region25: #{net_forward.4} parent=23 // pred_check
        %p128 = pneg %p29
      $region26: #{net_forward.4} parent=23 // pred_check_branch
        %130 = sbr.rel (%p128) target = $region28
      $region27: #{net_forward.4} parent=23 // pred_region
        %p131 = scmp.lt.s32.totalorder %s9, 1
        %s132 = scalar_select %p131, %s9, 1
        %s133 = smul.addr %s132, 100
        %s134 = smul.addr %s133, 4
        %s135 = scalar_lea.vmem %s0, %s134
      $region28: #{net_forward.4} parent=23 // pred_fallthru
        _
    $region24: #{net_forward.4} parent=5 // pred_fallthru
      _
    %p136 = scmp.le.s32.totalorder 1, %s9
    %p137 = scmp.lt.s32.totalorder %s9, 3
    %p138 = pnand %p136, %p137
    %p139 = pneg %p138
    // Predicated region
    $region29: #{net_forward.4} parent=5 // pred_check
      _
    $region30: #{net_forward.4} parent=5 // pred_check_branch
      %141 = sbr.rel (%p138) target = $region32
    $region31: #{net_forward.4} parent=5 // pred_region
      %s142 = ssub.s32 %s9, 1
      %p143 = scmp.lt.s32.totalorder %s14, 1
      %s144 = scalar_select %p143, %s14, 1
      %s145 = smul.addr %s144, 100
      %s146 = smul.addr %s145, 4
      %s147 = scalar_lea.vmem %s0, %s146
      %p148 = pneg %p35
      %p149 = pneg %p32
      %p150 = pneg %p56
      %p151 = pneg %p53
      %p152 = pneg %p77
      %p153 = pneg %p74
      %p154 = pneg %p103
      %p155 = pneg %p100
      %p156 = scmp.lt.s32.totalorder %s14, 1
      %s157 = scalar_select %p156, %s14, 1
      %s158 = smul.addr %s157, 50
      %s159 = smul.addr %s158, 4
      %s160 = scalar_lea.vmem %s3, %s159
      %p161 = scmp.lt.s32.totalorder %s14, 1
      %s162 = scalar_select %p161, %s14, 1
      %s163 = smul.addr %s162, 100
      %s164 = smul.addr %s163, 4
      %s165 = scalar_lea.vmem %s0, %s164
      %p166 = scmp.lt.s32.totalorder %s14, 1
      %s167 = scalar_select %p166, %s14, 1
      %s168 = smul.addr %s167, 50
      %s169 = smul.addr %s168, 4
      %s170 = scalar_lea.vmem %s3, %s169
      %v172 = vld [vmem:[%s165] sm:$0xff]
      %v173 = vld [vmem:[%s165 + $0x8] sm:$0xff]
      %v174 = vld [vmem:[%s165 + $0x10] sm:$0xff]
      %v175 = vld [vmem:[%s165 + $0x18] sm:$0xff]
      %v176 = vld [vmem:[%s165 + $0x20] sm:$0xff]
      %v177 = vld [vmem:[%s165 + $0x28] sm:$0xff]
      %v178 = vld [vmem:[%s165 + $0x30] sm:$0xff]
      %v179 = vld [vmem:[%s165 + $0x38] sm:$0xff]
      %v180 = vld [vmem:[%s165 + $0x40] sm:$0xff]
      %v181 = vld [vmem:[%s165 + $0x48] sm:$0xff]
      %v182 = vld [vmem:[%s165 + $0x50] sm:$0xff]
      %v183 = vld [vmem:[%s165 + $0x58] sm:$0xff]
      %v184 = vld [vmem:[%s165 + $0x60] sm:$0xff]
      %v185 = vld [vmem:[%s165 + $0x68] sm:$0xff]
      %v186 = vld [vmem:[%s165 + $0x70] sm:$0xff]
      %v187 = vld [vmem:[%s165 + $0x78] sm:$0xff]
      %v188 = vld [vmem:[%s165 + $0x80] sm:$0xff]
      %v189 = vld [vmem:[%s165 + $0x88] sm:$0xff]
      %v190 = vld [vmem:[%s165 + $0x90] sm:$0xff]
      %v191 = vld [vmem:[%s165 + $0x98] sm:$0xff]
      %v192 = vld [vmem:[%s165 + $0xa0] sm:$0xff]
      %v193 = vld [vmem:[%s165 + $0xa8] sm:$0xff]
      %v194 = vld [vmem:[%s165 + $0xb0] sm:$0xff]
      %v195 = vld [vmem:[%s165 + $0xb8] sm:$0xff]
      %v196 = vld [vmem:[%s165 + $0xc0] sm:$0xff]
      %v197 = vld [vmem:[%s165 + $0xc8] sm:$0xff]
      %v198 = vld [vmem:[%s165 + $0xd0] sm:$0xff]
      %v199 = vld [vmem:[%s165 + $0xd8] sm:$0xff]
      %v200 = vld [vmem:[%s165 + $0xe0] sm:$0xff]
      %v201 = vld [vmem:[%s165 + $0xe8] sm:$0xff]
      %v202 = vld [vmem:[%s165 + $0xf0] sm:$0xff]
      %v203 = vld [vmem:[%s165 + $0xf8] sm:$0xff]
      %v204 = vld [vmem:[%s165 + $0x100] sm:$0xff]
      %v205 = vld [vmem:[%s165 + $0x108] sm:$0xff]
      %v206 = vld [vmem:[%s165 + $0x110] sm:$0xff]
      %v207 = vld [vmem:[%s165 + $0x118] sm:$0xff]
      %v208 = vld [vmem:[%s165 + $0x120] sm:$0xff]
      %v209 = vld [vmem:[%s165 + $0x128] sm:$0xff]
      %v210 = vld [vmem:[%s165 + $0x130] sm:$0xff]
      %v211 = vld [vmem:[%s165 + $0x138] sm:$0xff]
      %v212 = vld [vmem:[%s165 + $0x140] sm:$0xff]
      %v213 = vld [vmem:[%s165 + $0x148] sm:$0xff]
      %v214 = vld [vmem:[%s165 + $0x150] sm:$0xff]
      %v215 = vld [vmem:[%s165 + $0x158] sm:$0xff]
      %v216 = vld [vmem:[%s165 + $0x160] sm:$0xff]
      %v217 = vld [vmem:[%s165 + $0x168] sm:$0xff]
      %v218 = vld [vmem:[%s165 + $0x170] sm:$0xff]
      %v219 = vld [vmem:[%s165 + $0x178] sm:$0xff]
      %v220 = vld [vmem:[%s165 + $0x180] sm:$0xff]
      %v221 = vld [vmem:[%s165 + $0x188] sm:$0xff]
      %v222 = vld [vmem:[%s1] sm:$0xf]
      %v223 = vld [vmem:[%s1 + $0x4] sm:$0xf]
      %v224 = vld [vmem:[%s1 + $0x8] sm:$0xf]
      %v225 = vld [vmem:[%s1 + $0xc] sm:$0xf]
      %v226 = vld [vmem:[%s1 + $0x10] sm:$0xf]
      %v227 = vld [vmem:[%s1 + $0x14] sm:$0xf]
      %v228 = vld [vmem:[%s1 + $0x18] sm:$0xf]
      %v229 = vld [vmem:[%s1 + $0x1c] sm:$0xf]
      %v230 = vld [vmem:[%s1 + $0x20] sm:$0xf]
      %v231 = vld [vmem:[%s1 + $0x24] sm:$0xf]
      %v232 = vld [vmem:[%s1 + $0x28] sm:$0xf]
      %v233 = vld [vmem:[%s1 + $0x2c] sm:$0xf]
      %v234 = vld [vmem:[%s1 + $0x30] sm:$0xf]
      %v235 = vld [vmem:[%s1 + $0x34] sm:$0xf]
      %v236 = vld [vmem:[%s1 + $0x38] sm:$0xf]
      %v237 = vld [vmem:[%s1 + $0x3c] sm:$0xf]
      %v238 = vld [vmem:[%s1 + $0x40] sm:$0xf]
      %v239 = vld [vmem:[%s1 + $0x44] sm:$0xf]
      %v240 = vld [vmem:[%s1 + $0x48] sm:$0xf]
      %v241 = vld [vmem:[%s1 + $0x4c] sm:$0xf]
      %v242 = vld [vmem:[%s1 + $0x50] sm:$0xf]
      %v243 = vld [vmem:[%s1 + $0x54] sm:$0xf]
      %v244 = vld [vmem:[%s1 + $0x58] sm:$0xf]
      %v245 = vld [vmem:[%s1 + $0x5c] sm:$0xf]
      %v246 = vld [vmem:[%s1 + $0x60] sm:$0xf]
      %v247 = vld [vmem:[%s1 + $0x64] sm:$0xf]
      %v248 = vld [vmem:[%s1 + $0x68] sm:$0xf]
      %v249 = vld [vmem:[%s1 + $0x6c] sm:$0xf]
      %v250 = vld [vmem:[%s1 + $0x70] sm:$0xf]
      %v251 = vld [vmem:[%s1 + $0x74] sm:$0xf]
      %v252 = vld [vmem:[%s1 + $0x78] sm:$0xf]
      %v253 = vld [vmem:[%s1 + $0x7c] sm:$0xf]
      %v254 = vld [vmem:[%s2] sm:$0x1]
      %v256 = vlaneseq
      %v257 = vshrl.u32 %v256, 7
      %v258 = vsub.s32 0, %v257
      %v259 = vrot.slane %v254, %v258
      %v311 = vunpack.c.l.b16 %v172
      %v312 = vunpack.c.h.b16 %v172
      %v313 = vunpack.c.l.b16 %v173
      %v314 = vunpack.c.h.b16 %v173
      %v315 = vunpack.c.l.b16 %v174
      %v316 = vunpack.c.h.b16 %v174
      %v317 = vunpack.c.l.b16 %v175
      %v318 = vunpack.c.h.b16 %v175
      %v319 = vunpack.c.l.b16 %v176
      %v320 = vunpack.c.h.b16 %v176
      %v321 = vunpack.c.l.b16 %v177
      %v322 = vunpack.c.h.b16 %v177
      %v323 = vunpack.c.l.b16 %v178
      %v324 = vunpack.c.h.b16 %v178
      %v325 = vunpack.c.l.b16 %v179
      %v326 = vunpack.c.h.b16 %v179
      %v327 = vunpack.c.l.b16 %v180
      %v328 = vunpack.c.h.b16 %v180
      %v329 = vunpack.c.l.b16 %v181
      %v330 = vunpack.c.h.b16 %v181
      %v331 = vunpack.c.l.b16 %v182
      %v332 = vunpack.c.h.b16 %v182
      %v333 = vunpack.c.l.b16 %v183
      %v334 = vunpack.c.h.b16 %v183
      %v335 = vunpack.c.l.b16 %v184
      %v336 = vunpack.c.h.b16 %v184
      %v337 = vunpack.c.l.b16 %v185
      %v338 = vunpack.c.h.b16 %v185
      %v339 = vunpack.c.l.b16 %v186
      %v340 = vunpack.c.h.b16 %v186
      %v341 = vunpack.c.l.b16 %v187
      %v342 = vunpack.c.h.b16 %v187
      %v343 = vunpack.c.l.b16 %v188
      %v344 = vunpack.c.h.b16 %v188
      %v345 = vunpack.c.l.b16 %v189
      %v346 = vunpack.c.h.b16 %v189
      %v347 = vunpack.c.l.b16 %v190
      %v348 = vunpack.c.h.b16 %v190
      %v349 = vunpack.c.l.b16 %v191
      %v350 = vunpack.c.h.b16 %v191
      %v351 = vunpack.c.l.b16 %v192
      %v352 = vunpack.c.h.b16 %v192
      %v353 = vunpack.c.l.b16 %v193
      %v354 = vunpack.c.h.b16 %v193
      %v355 = vunpack.c.l.b16 %v194
      %v356 = vunpack.c.h.b16 %v194
      %v357 = vunpack.c.l.b16 %v195
      %v358 = vunpack.c.h.b16 %v195
      %v359 = vunpack.c.l.b16 %v196
      %v360 = vunpack.c.h.b16 %v196
      %v361 = vunpack.c.l.b16 %v197
      %v362 = vunpack.c.h.b16 %v197
      %v363 = vunpack.c.l.b16 %v198
      %v364 = vunpack.c.h.b16 %v198
      %v365 = vunpack.c.l.b16 %v199
      %v366 = vunpack.c.h.b16 %v199
      %v367 = vunpack.c.l.b16 %v200
      %v368 = vunpack.c.h.b16 %v200
      %v369 = vunpack.c.l.b16 %v201
      %v370 = vunpack.c.h.b16 %v201
      %v371 = vunpack.c.l.b16 %v202
      %v372 = vunpack.c.h.b16 %v202
      %v373 = vunpack.c.l.b16 %v203
      %v374 = vunpack.c.h.b16 %v203
      %v375 = vunpack.c.l.b16 %v204
      %v376 = vunpack.c.h.b16 %v204
      %v377 = vunpack.c.l.b16 %v205
      %v378 = vunpack.c.h.b16 %v205
      %v379 = vunpack.c.l.b16 %v206
      %v380 = vunpack.c.h.b16 %v206
      %v381 = vunpack.c.l.b16 %v207
      %v382 = vunpack.c.h.b16 %v207
      %v383 = vunpack.c.l.b16 %v208
      %v384 = vunpack.c.h.b16 %v208
      %v385 = vunpack.c.l.b16 %v209
      %v386 = vunpack.c.h.b16 %v209
      %v387 = vunpack.c.l.b16 %v210
      %v388 = vunpack.c.h.b16 %v210
      %v389 = vunpack.c.l.b16 %v211
      %v390 = vunpack.c.h.b16 %v211
      %v391 = vunpack.c.l.b16 %v212
      %v392 = vunpack.c.h.b16 %v212
      %v393 = vunpack.c.l.b16 %v213
      %v394 = vunpack.c.h.b16 %v213
      %v395 = vunpack.c.l.b16 %v214
      %v396 = vunpack.c.h.b16 %v214
      %v397 = vunpack.c.l.b16 %v215
      %v398 = vunpack.c.h.b16 %v215
      %v399 = vunpack.c.l.b16 %v216
      %v400 = vunpack.c.h.b16 %v216
      %v401 = vunpack.c.l.b16 %v217
      %v402 = vunpack.c.h.b16 %v217
      %v403 = vunpack.c.l.b16 %v218
      %v404 = vunpack.c.h.b16 %v218
      %v405 = vunpack.c.l.b16 %v219
      %v406 = vunpack.c.h.b16 %v219
      %v407 = vunpack.c.l.b16 %v220
      %v408 = vunpack.c.h.b16 %v220
      %v409 = vunpack.c.l.b16 %v221
      %v410 = vunpack.c.h.b16 %v221
      %v411 = vpack.c.b16 %v313, %v311
      %v412 = vpack.c.b16 %v314, %v312
      %v413 = vpack.c.b16 %v317, %v315
      %v414 = vpack.c.b16 %v318, %v316
      %v415 = vpack.c.b16 %v321, %v319
      %v416 = vpack.c.b16 %v322, %v320
      %v417 = vpack.c.b16 %v325, %v323
      %v418 = vpack.c.b16 %v326, %v324
      %v419 = vpack.c.b16 %v329, %v327
      %v420 = vpack.c.b16 %v330, %v328
      %v421 = vpack.c.b16 %v333, %v331
      %v422 = vpack.c.b16 %v334, %v332
      %v423 = vpack.c.b16 %v337, %v335
      %v424 = vpack.c.b16 %v338, %v336
      %v425 = vpack.c.b16 %v341, %v339
      %v426 = vpack.c.b16 %v342, %v340
      %v427 = vpack.c.b16 %v345, %v343
      %v428 = vpack.c.b16 %v346, %v344
      %v429 = vpack.c.b16 %v349, %v347
      %v430 = vpack.c.b16 %v350, %v348
      %v431 = vpack.c.b16 %v353, %v351
      %v432 = vpack.c.b16 %v354, %v352
      %v433 = vpack.c.b16 %v357, %v355
      %v434 = vpack.c.b16 %v358, %v356
      %v435 = vpack.c.b16 %v361, %v359
      %v436 = vpack.c.b16 %v362, %v360
      %v437 = vpack.c.b16 %v365, %v363
      %v438 = vpack.c.b16 %v366, %v364
      %v439 = vpack.c.b16 %v369, %v367
      %v440 = vpack.c.b16 %v370, %v368
      %v441 = vpack.c.b16 %v373, %v371
      %v442 = vpack.c.b16 %v374, %v372
      %v443 = vpack.c.b16 %v377, %v375
      %v444 = vpack.c.b16 %v378, %v376
      %v445 = vpack.c.b16 %v381, %v379
      %v446 = vpack.c.b16 %v382, %v380
      %v447 = vpack.c.b16 %v385, %v383
      %v448 = vpack.c.b16 %v386, %v384
      %v449 = vpack.c.b16 %v389, %v387
      %v450 = vpack.c.b16 %v390, %v388
      %v451 = vpack.c.b16 %v393, %v391
      %v452 = vpack.c.b16 %v394, %v392
      %v453 = vpack.c.b16 %v397, %v395
      %v454 = vpack.c.b16 %v398, %v396
      %v455 = vpack.c.b16 %v401, %v399
      %v456 = vpack.c.b16 %v402, %v400
      %v457 = vpack.c.b16 %v405, %v403
      %v458 = vpack.c.b16 %v406, %v404
      %v459 = vpack.c.b16 %v409, %v407
      %v460 = vpack.c.b16 %v410, %v408
      %v543 = vunpack.c.l.b16 %v222
      %v544 = vunpack.c.l.b16 %v223
      %v545 = vunpack.c.l.b16 %v224
      %v546 = vunpack.c.l.b16 %v225
      %v547 = vunpack.c.l.b16 %v226
      %v548 = vunpack.c.l.b16 %v227
      %v549 = vunpack.c.l.b16 %v228
      %v550 = vunpack.c.l.b16 %v229
      %v551 = vunpack.c.l.b16 %v230
      %v552 = vunpack.c.l.b16 %v231
      %v553 = vunpack.c.l.b16 %v232
      %v554 = vunpack.c.l.b16 %v233
      %v555 = vunpack.c.l.b16 %v234
      %v556 = vunpack.c.l.b16 %v235
      %v557 = vunpack.c.l.b16 %v236
      %v558 = vunpack.c.l.b16 %v237
      %v559 = vunpack.c.l.b16 %v238
      %v560 = vunpack.c.l.b16 %v239
      %v561 = vunpack.c.l.b16 %v240
      %v562 = vunpack.c.l.b16 %v241
      %v563 = vunpack.c.l.b16 %v242
      %v564 = vunpack.c.l.b16 %v243
      %v565 = vunpack.c.l.b16 %v244
      %v566 = vunpack.c.l.b16 %v245
      %v567 = vunpack.c.l.b16 %v246
      %v568 = vunpack.c.l.b16 %v247
      %v569 = vunpack.c.l.b16 %v248
      %v570 = vunpack.c.l.b16 %v249
      %v571 = vunpack.c.l.b16 %v250
      %v572 = vunpack.c.l.b16 %v251
      %v573 = vunpack.c.l.b16 %v252
      %v574 = vunpack.c.l.b16 %v253
      %v575 = vpack.c.b16 %v544, %v543
      %v576 = vpack.c.b16 %v546, %v545
      %v577 = vpack.c.b16 %v548, %v547
      %v578 = vpack.c.b16 %v550, %v549
      %v579 = vpack.c.b16 %v552, %v551
      %v580 = vpack.c.b16 %v554, %v553
      %v581 = vpack.c.b16 %v556, %v555
      %v582 = vpack.c.b16 %v558, %v557
      %v583 = vpack.c.b16 %v560, %v559
      %v584 = vpack.c.b16 %v562, %v561
      %v585 = vpack.c.b16 %v564, %v563
      %v586 = vpack.c.b16 %v566, %v565
      %v587 = vpack.c.b16 %v568, %v567
      %v588 = vpack.c.b16 %v570, %v569
      %v589 = vpack.c.b16 %v572, %v571
      %v590 = vpack.c.b16 %v574, %v573
      %607 = vmatprep.subr.bf16.mxu0 0
      %608 = vmatpush1.bf16.msra.mxu0 %v575
      %609 = vmatprep.subr.bf16.mxu0 0
      %610 = vmatpush1.bf16.msra.mxu0 %v576
      %611 = vmatprep.subr.bf16.mxu0 0
      %612 = vmatpush1.bf16.msra.mxu0 %v577
      %613 = vmatprep.subr.bf16.mxu0 0
      %614 = vmatpush1.bf16.msra.mxu0 %v578
      %615 = vmatprep.subr.bf16.mxu0 0
      %616 = vmatpush1.bf16.msra.mxu0 %v579
      %617 = vmatprep.subr.bf16.mxu0 0
      %618 = vmatpush1.bf16.msra.mxu0 %v580
      %619 = vmatprep.subr.bf16.mxu0 0
      %620 = vmatpush1.bf16.msra.mxu0 %v581
      %621 = vmatprep.subr.bf16.mxu0 0
      %622 = vmatpush1.bf16.msra.mxu0 %v582
      %623 = vmatprep.subr.bf16.mxu0 0
      %624 = vmatpush1.bf16.msra.mxu0 %v583
      %625 = vmatprep.subr.bf16.mxu0 0
      %626 = vmatpush1.bf16.msra.mxu0 %v584
      %627 = vmatprep.subr.bf16.mxu0 0
      %628 = vmatpush1.bf16.msra.mxu0 %v585
      %629 = vmatprep.subr.bf16.mxu0 0
      %630 = vmatpush1.bf16.msra.mxu0 %v586
      %631 = vmatprep.subr.bf16.mxu0 0
      %632 = vmatpush1.bf16.msra.mxu0 %v587
      %633 = vmatprep.subr.bf16.mxu0 0
      %634 = vmatpush1.bf16.msra.mxu0 %v588
      %635 = vmatprep.subr.bf16.mxu0 0
      %636 = vmatpush1.bf16.msra.mxu0 %v589
      %637 = vmatprep.subr.bf16.mxu0 0
      %638 = vmatpush1.bf16.msra.mxu0 %v590
      %639 = vmatprep.mubr.bf16.mxu0 %v412
      %640 = vmatmul.mubr.bf16.gmra.mrb[0].mxu0 %v411
      %v641 = vpop.f32.mrb[0].mxu0
      %v642 = vadd.f32 %v259, %v641
      %v643 = vpop.f32.mrb[0].mxu0
      %v644 = vpop.f32.mrb[0].mxu0
      %v645 = vadd.f32 %v259, %v644
      %v646 = vpop.f32.mrb[0].mxu0
      %647 = vmatprep.mubr.bf16.mxu0 %v414
      %648 = vmatmul.mubr.bf16.gmra.mrb[0].mxu0 %v413
      %v649 = vpop.f32.mrb[0].mxu0
      %v650 = vadd.f32 %v259, %v649
      %v651 = vpop.f32.mrb[0].mxu0
      %v652 = vpop.f32.mrb[0].mxu0
      %v653 = vadd.f32 %v259, %v652
      %v654 = vpop.f32.mrb[0].mxu0
      %655 = vmatprep.mubr.bf16.mxu0 %v416
      %656 = vmatmul.mubr.bf16.gmra.mrb[0].mxu0 %v415
      %v657 = vpop.f32.mrb[0].mxu0
      %v658 = vadd.f32 %v259, %v657
      %v659 = vpop.f32.mrb[0].mxu0
      %v660 = vpop.f32.mrb[0].mxu0
      %v661 = vadd.f32 %v259, %v660
      %v662 = vpop.f32.mrb[0].mxu0
      %663 = vmatprep.mubr.bf16.mxu0 %v418
      %664 = vmatmul.mubr.bf16.gmra.mrb[0].mxu0 %v417
      %v665 = vpop.f32.mrb[0].mxu0
      %v666 = vadd.f32 %v259, %v665
      %v667 = vpop.f32.mrb[0].mxu0
      %v668 = vpop.f32.mrb[0].mxu0
      %v669 = vadd.f32 %v259, %v668
      %v670 = vpop.f32.mrb[0].mxu0
      %671 = vmatprep.mubr.bf16.mxu0 %v420
      %672 = vmatmul.mubr.bf16.gmra.mrb[0].mxu0 %v419
      %v673 = vpop.f32.mrb[0].mxu0
      %v674 = vadd.f32 %v259, %v673
      %v675 = vpop.f32.mrb[0].mxu0
      %v676 = vpop.f32.mrb[0].mxu0
      %v677 = vadd.f32 %v259, %v676
      %v678 = vpop.f32.mrb[0].mxu0
      %679 = vmatprep.mubr.bf16.mxu0 %v422
      %680 = vmatmul.mubr.bf16.gmra.mrb[0].mxu0 %v421
      %v681 = vpop.f32.mrb[0].mxu0
      %v682 = vadd.f32 %v259, %v681
      %v683 = vpop.f32.mrb[0].mxu0
      %v684 = vpop.f32.mrb[0].mxu0
      %v685 = vadd.f32 %v259, %v684
      %v686 = vpop.f32.mrb[0].mxu0
      %687 = vmatprep.mubr.bf16.mxu0 %v424
      %688 = vmatmul.mubr.bf16.gmra.mrb[0].mxu0 %v423
      %v689 = vpop.f32.mrb[0].mxu0
      %v690 = vadd.f32 %v259, %v689
      %v691 = vpop.f32.mrb[0].mxu0
      %v692 = vpop.f32.mrb[0].mxu0
      %v693 = vadd.f32 %v259, %v692
      %v694 = vpop.f32.mrb[0].mxu0
      %695 = vmatprep.mubr.bf16.mxu0 %v426
      %696 = vmatmul.mubr.bf16.gmra.mrb[0].mxu0 %v425
      %v697 = vpop.f32.mrb[0].mxu0
      %v698 = vadd.f32 %v259, %v697
      %v699 = vpop.f32.mrb[0].mxu0
      %v700 = vpop.f32.mrb[0].mxu0
      %v701 = vadd.f32 %v259, %v700
      %v702 = vpop.f32.mrb[0].mxu0
      %703 = vmatprep.mubr.bf16.mxu0 %v428
      %704 = vmatmul.mubr.bf16.gmra.mrb[0].mxu0 %v427
      %v705 = vpop.f32.mrb[0].mxu0
      %v706 = vadd.f32 %v259, %v705
      %v707 = vpop.f32.mrb[0].mxu0
      %v708 = vpop.f32.mrb[0].mxu0
      %v709 = vadd.f32 %v259, %v708
      %v710 = vpop.f32.mrb[0].mxu0
      %711 = vmatprep.mubr.bf16.mxu0 %v430
      %712 = vmatmul.mubr.bf16.gmra.mrb[0].mxu0 %v429
      %v713 = vpop.f32.mrb[0].mxu0
      %v714 = vadd.f32 %v259, %v713
      %v715 = vpop.f32.mrb[0].mxu0
      %v716 = vpop.f32.mrb[0].mxu0
      %v717 = vadd.f32 %v259, %v716
      %v718 = vpop.f32.mrb[0].mxu0
      %719 = vmatprep.mubr.bf16.mxu0 %v432
      %720 = vmatmul.mubr.bf16.gmra.mrb[0].mxu0 %v431
      %v721 = vpop.f32.mrb[0].mxu0
      %v722 = vadd.f32 %v259, %v721
      %v723 = vpop.f32.mrb[0].mxu0
      %v724 = vpop.f32.mrb[0].mxu0
      %v725 = vadd.f32 %v259, %v724
      %v726 = vpop.f32.mrb[0].mxu0
      %727 = vmatprep.mubr.bf16.mxu0 %v434
      %728 = vmatmul.mubr.bf16.gmra.mrb[0].mxu0 %v433
      %v729 = vpop.f32.mrb[0].mxu0
      %v730 = vadd.f32 %v259, %v729
      %v731 = vpop.f32.mrb[0].mxu0
      %v732 = vpop.f32.mrb[0].mxu0
      %v733 = vadd.f32 %v259, %v732
      %v734 = vpop.f32.mrb[0].mxu0
      %735 = vmatprep.mubr.bf16.mxu0 %v436
      %736 = vmatmul.mubr.bf16.gmra.mrb[0].mxu0 %v435
      %v737 = vpop.f32.mrb[0].mxu0
      %v738 = vadd.f32 %v259, %v737
      %v739 = vpop.f32.mrb[0].mxu0
      %v740 = vpop.f32.mrb[0].mxu0
      %v741 = vadd.f32 %v259, %v740
      %v742 = vpop.f32.mrb[0].mxu0
      %743 = vmatprep.mubr.bf16.mxu0 %v438
      %744 = vmatmul.mubr.bf16.gmra.mrb[0].mxu0 %v437
      %v745 = vpop.f32.mrb[0].mxu0
      %v746 = vadd.f32 %v259, %v745
      %v747 = vpop.f32.mrb[0].mxu0
      %v748 = vpop.f32.mrb[0].mxu0
      %v749 = vadd.f32 %v259, %v748
      %v750 = vpop.f32.mrb[0].mxu0
      %751 = vmatprep.mubr.bf16.mxu0 %v440
      %752 = vmatmul.mubr.bf16.gmra.mrb[0].mxu0 %v439
      %v753 = vpop.f32.mrb[0].mxu0
      %v754 = vadd.f32 %v259, %v753
      %v755 = vpop.f32.mrb[0].mxu0
      %v756 = vpop.f32.mrb[0].mxu0
      %v757 = vadd.f32 %v259, %v756
      %v758 = vpop.f32.mrb[0].mxu0
      %759 = vmatprep.mubr.bf16.mxu0 %v442
      %760 = vmatmul.mubr.bf16.gmra.mrb[0].mxu0 %v441
      %v761 = vpop.f32.mrb[0].mxu0
      %v762 = vadd.f32 %v259, %v761
      %v763 = vpop.f32.mrb[0].mxu0
      %v764 = vpop.f32.mrb[0].mxu0
      %v765 = vadd.f32 %v259, %v764
      %v766 = vpop.f32.mrb[0].mxu0
      %767 = vmatprep.mubr.bf16.mxu0 %v444
      %768 = vmatmul.mubr.bf16.gmra.mrb[0].mxu0 %v443
      %v769 = vpop.f32.mrb[0].mxu0
      %v770 = vadd.f32 %v259, %v769
      %v771 = vpop.f32.mrb[0].mxu0
      %v772 = vpop.f32.mrb[0].mxu0
      %v773 = vadd.f32 %v259, %v772
      %v774 = vpop.f32.mrb[0].mxu0
      %775 = vmatprep.mubr.bf16.mxu0 %v446
      %776 = vmatmul.mubr.bf16.gmra.mrb[0].mxu0 %v445
      %v777 = vpop.f32.mrb[0].mxu0
      %v778 = vadd.f32 %v259, %v777
      %v779 = vpop.f32.mrb[0].mxu0
      %v780 = vpop.f32.mrb[0].mxu0
      %v781 = vadd.f32 %v259, %v780
      %v782 = vpop.f32.mrb[0].mxu0
      %783 = vmatprep.mubr.bf16.mxu0 %v448
      %784 = vmatmul.mubr.bf16.gmra.mrb[0].mxu0 %v447
      %v785 = vpop.f32.mrb[0].mxu0
      %v786 = vadd.f32 %v259, %v785
      %v787 = vpop.f32.mrb[0].mxu0
      %v788 = vpop.f32.mrb[0].mxu0
      %v789 = vadd.f32 %v259, %v788
      %v790 = vpop.f32.mrb[0].mxu0
      %791 = vmatprep.mubr.bf16.mxu0 %v450
      %792 = vmatmul.mubr.bf16.gmra.mrb[0].mxu0 %v449
      %v793 = vpop.f32.mrb[0].mxu0
      %v794 = vadd.f32 %v259, %v793
      %v795 = vpop.f32.mrb[0].mxu0
      %v796 = vpop.f32.mrb[0].mxu0
      %v797 = vadd.f32 %v259, %v796
      %v798 = vpop.f32.mrb[0].mxu0
      %799 = vmatprep.mubr.bf16.mxu0 %v452
      %800 = vmatmul.mubr.bf16.gmra.mrb[0].mxu0 %v451
      %v801 = vpop.f32.mrb[0].mxu0
      %v802 = vadd.f32 %v259, %v801
      %v803 = vpop.f32.mrb[0].mxu0
      %v804 = vpop.f32.mrb[0].mxu0
      %v805 = vadd.f32 %v259, %v804
      %v806 = vpop.f32.mrb[0].mxu0
      %807 = vmatprep.mubr.bf16.mxu0 %v454
      %808 = vmatmul.mubr.bf16.gmra.mrb[0].mxu0 %v453
      %v809 = vpop.f32.mrb[0].mxu0
      %v810 = vadd.f32 %v259, %v809
      %v811 = vpop.f32.mrb[0].mxu0
      %v812 = vpop.f32.mrb[0].mxu0
      %v813 = vadd.f32 %v259, %v812
      %v814 = vpop.f32.mrb[0].mxu0
      %815 = vmatprep.mubr.bf16.mxu0 %v456
      %816 = vmatmul.mubr.bf16.gmra.mrb[0].mxu0 %v455
      %v817 = vpop.f32.mrb[0].mxu0
      %v818 = vadd.f32 %v259, %v817
      %v819 = vpop.f32.mrb[0].mxu0
      %v820 = vpop.f32.mrb[0].mxu0
      %v821 = vadd.f32 %v259, %v820
      %v822 = vpop.f32.mrb[0].mxu0
      %823 = vmatprep.mubr.bf16.mxu0 %v458
      %824 = vmatmul.mubr.bf16.gmra.mrb[0].mxu0 %v457
      %v825 = vpop.f32.mrb[0].mxu0
      %v826 = vadd.f32 %v259, %v825
      %v827 = vpop.f32.mrb[0].mxu0
      %v828 = vpop.f32.mrb[0].mxu0
      %v829 = vadd.f32 %v259, %v828
      %v830 = vpop.f32.mrb[0].mxu0
      %831 = vmatprep.mubr.bf16.mxu0 %v460
      %832 = vmatmul.mubr.bf16.gmra.mrb[0].mxu0 %v459
      %v833 = vpop.f32.mrb[0].mxu0
      %v834 = vadd.f32 %v259, %v833
      %v835 = vpop.f32.mrb[0].mxu0
      %v836 = vpop.f32.mrb[0].mxu0
      %v837 = vadd.f32 %v259, %v836
      %v838 = vpop.f32.mrb[0].mxu0
      %839 = vdwg.mxu0
      %v840 = vmax.f32 %v642, 0.0
      %v841 = vmax.f32 %v645, 0.0
      %v842 = vmax.f32 %v650, 0.0
      %v843 = vmax.f32 %v653, 0.0
      %v844 = vmax.f32 %v658, 0.0
      %v845 = vmax.f32 %v661, 0.0
      %v846 = vmax.f32 %v666, 0.0
      %v847 = vmax.f32 %v669, 0.0
      %v848 = vmax.f32 %v674, 0.0
      %v849 = vmax.f32 %v677, 0.0
      %v850 = vmax.f32 %v682, 0.0
      %v851 = vmax.f32 %v685, 0.0
      %v852 = vmax.f32 %v690, 0.0
      %v853 = vmax.f32 %v693, 0.0
      %v854 = vmax.f32 %v698, 0.0
      %v855 = vmax.f32 %v701, 0.0
      %v856 = vmax.f32 %v706, 0.0
      %v857 = vmax.f32 %v709, 0.0
      %v858 = vmax.f32 %v714, 0.0
      %v859 = vmax.f32 %v717, 0.0
      %v860 = vmax.f32 %v722, 0.0
      %v861 = vmax.f32 %v725, 0.0
      %v862 = vmax.f32 %v730, 0.0
      %v863 = vmax.f32 %v733, 0.0
      %v864 = vmax.f32 %v738, 0.0
      %v865 = vmax.f32 %v741, 0.0
      %v866 = vmax.f32 %v746, 0.0
      %v867 = vmax.f32 %v749, 0.0
      %v868 = vmax.f32 %v754, 0.0
      %v869 = vmax.f32 %v757, 0.0
      %v870 = vmax.f32 %v762, 0.0
      %v871 = vmax.f32 %v765, 0.0
      %v872 = vmax.f32 %v770, 0.0
      %v873 = vmax.f32 %v773, 0.0
      %v874 = vmax.f32 %v778, 0.0
      %v875 = vmax.f32 %v781, 0.0
      %v876 = vmax.f32 %v786, 0.0
      %v877 = vmax.f32 %v789, 0.0
      %v878 = vmax.f32 %v794, 0.0
      %v879 = vmax.f32 %v797, 0.0
      %v880 = vmax.f32 %v802, 0.0
      %v881 = vmax.f32 %v805, 0.0
      %v882 = vmax.f32 %v810, 0.0
      %v883 = vmax.f32 %v813, 0.0
      %v884 = vmax.f32 %v818, 0.0
      %v885 = vmax.f32 %v821, 0.0
      %v886 = vmax.f32 %v826, 0.0
      %v887 = vmax.f32 %v829, 0.0
      %v888 = vmax.f32 %v834, 0.0
      %v889 = vmax.f32 %v837, 0.0
      %v890 = vpack.c.bf16 %v841, %v840
      %v891 = vpack.c.bf16 %v843, %v842
      %v892 = vpack.c.bf16 %v845, %v844
      %v893 = vpack.c.bf16 %v847, %v846
      %v894 = vpack.c.bf16 %v849, %v848
      %v895 = vpack.c.bf16 %v851, %v850
      %v896 = vpack.c.bf16 %v853, %v852
      %v897 = vpack.c.bf16 %v855, %v854
      %v898 = vpack.c.bf16 %v857, %v856
      %v899 = vpack.c.bf16 %v859, %v858
      %v900 = vpack.c.bf16 %v861, %v860
      %v901 = vpack.c.bf16 %v863, %v862
      %v902 = vpack.c.bf16 %v865, %v864
      %v903 = vpack.c.bf16 %v867, %v866
      %v904 = vpack.c.bf16 %v869, %v868
      %v905 = vpack.c.bf16 %v871, %v870
      %v906 = vpack.c.bf16 %v873, %v872
      %v907 = vpack.c.bf16 %v875, %v874
      %v908 = vpack.c.bf16 %v877, %v876
      %v909 = vpack.c.bf16 %v879, %v878
      %v910 = vpack.c.bf16 %v881, %v880
      %v911 = vpack.c.bf16 %v883, %v882
      %v912 = vpack.c.bf16 %v885, %v884
      %v913 = vpack.c.bf16 %v887, %v886
      %v914 = vpack.c.bf16 %v889, %v888
      %v940 = vunpack.c.l.b16 %v890
      %v941 = vunpack.c.h.b16 %v890
      %v942 = vunpack.c.l.b16 %v891
      %v943 = vunpack.c.h.b16 %v891
      %v944 = vunpack.c.l.b16 %v892
      %v945 = vunpack.c.h.b16 %v892
      %v946 = vunpack.c.l.b16 %v893
      %v947 = vunpack.c.h.b16 %v893
      %v948 = vunpack.c.l.b16 %v894
      %v949 = vunpack.c.h.b16 %v894
      %v950 = vunpack.c.l.b16 %v895
      %v951 = vunpack.c.h.b16 %v895
      %v952 = vunpack.c.l.b16 %v896
      %v953 = vunpack.c.h.b16 %v896
      %v954 = vunpack.c.l.b16 %v897
      %v955 = vunpack.c.h.b16 %v897
      %v956 = vunpack.c.l.b16 %v898
      %v957 = vunpack.c.h.b16 %v898
      %v958 = vunpack.c.l.b16 %v899
      %v959 = vunpack.c.h.b16 %v899
      %v960 = vunpack.c.l.b16 %v900
      %v961 = vunpack.c.h.b16 %v900
      %v962 = vunpack.c.l.b16 %v901
      %v963 = vunpack.c.h.b16 %v901
      %v964 = vunpack.c.l.b16 %v902
      %v965 = vunpack.c.h.b16 %v902
      %v966 = vunpack.c.l.b16 %v903
      %v967 = vunpack.c.h.b16 %v903
      %v968 = vunpack.c.l.b16 %v904
      %v969 = vunpack.c.h.b16 %v904
      %v970 = vunpack.c.l.b16 %v905
      %v971 = vunpack.c.h.b16 %v905
      %v972 = vunpack.c.l.b16 %v906
      %v973 = vunpack.c.h.b16 %v906
      %v974 = vunpack.c.l.b16 %v907
      %v975 = vunpack.c.h.b16 %v907
      %v976 = vunpack.c.l.b16 %v908
      %v977 = vunpack.c.h.b16 %v908
      %v978 = vunpack.c.l.b16 %v909
      %v979 = vunpack.c.h.b16 %v909
      %v980 = vunpack.c.l.b16 %v910
      %v981 = vunpack.c.h.b16 %v910
      %v982 = vunpack.c.l.b16 %v911
      %v983 = vunpack.c.h.b16 %v911
      %v984 = vunpack.c.l.b16 %v912
      %v985 = vunpack.c.h.b16 %v912
      %v986 = vunpack.c.l.b16 %v913
      %v987 = vunpack.c.h.b16 %v913
      %v988 = vunpack.c.l.b16 %v914
      %v989 = vunpack.c.h.b16 %v914
      %v990 = vpack.c.b16 %v940, %v940
      %v991 = vpack.c.b16 %v941, %v941
      %v992 = vpack.c.b16 %v942, %v942
      %v993 = vpack.c.b16 %v943, %v943
      %v994 = vpack.c.b16 %v944, %v944
      %v995 = vpack.c.b16 %v945, %v945
      %v996 = vpack.c.b16 %v946, %v946
      %v997 = vpack.c.b16 %v947, %v947
      %v998 = vpack.c.b16 %v948, %v948
      %v999 = vpack.c.b16 %v949, %v949
      %v1000 = vpack.c.b16 %v950, %v950
      %v1001 = vpack.c.b16 %v951, %v951
      %v1002 = vpack.c.b16 %v952, %v952
      %v1003 = vpack.c.b16 %v953, %v953
      %v1004 = vpack.c.b16 %v954, %v954
      %v1005 = vpack.c.b16 %v955, %v955
      %v1006 = vpack.c.b16 %v956, %v956
      %v1007 = vpack.c.b16 %v957, %v957
      %v1008 = vpack.c.b16 %v958, %v958
      %v1009 = vpack.c.b16 %v959, %v959
      %v1010 = vpack.c.b16 %v960, %v960
      %v1011 = vpack.c.b16 %v961, %v961
      %v1012 = vpack.c.b16 %v962, %v962
      %v1013 = vpack.c.b16 %v963, %v963
      %v1014 = vpack.c.b16 %v964, %v964
      %v1015 = vpack.c.b16 %v965, %v965
      %v1016 = vpack.c.b16 %v966, %v966
      %v1017 = vpack.c.b16 %v967, %v967
      %v1018 = vpack.c.b16 %v968, %v968
      %v1019 = vpack.c.b16 %v969, %v969
      %v1020 = vpack.c.b16 %v970, %v970
      %v1021 = vpack.c.b16 %v971, %v971
      %v1022 = vpack.c.b16 %v972, %v972
      %v1023 = vpack.c.b16 %v973, %v973
      %v1024 = vpack.c.b16 %v974, %v974
      %v1025 = vpack.c.b16 %v975, %v975
      %v1026 = vpack.c.b16 %v976, %v976
      %v1027 = vpack.c.b16 %v977, %v977
      %v1028 = vpack.c.b16 %v978, %v978
      %v1029 = vpack.c.b16 %v979, %v979
      %v1030 = vpack.c.b16 %v980, %v980
      %v1031 = vpack.c.b16 %v981, %v981
      %v1032 = vpack.c.b16 %v982, %v982
      %v1033 = vpack.c.b16 %v983, %v983
      %v1034 = vpack.c.b16 %v984, %v984
      %v1035 = vpack.c.b16 %v985, %v985
      %v1036 = vpack.c.b16 %v986, %v986
      %v1037 = vpack.c.b16 %v987, %v987
      %v1038 = vpack.c.b16 %v988, %v988
      %v1039 = vpack.c.b16 %v989, %v989
      %vm1090 = vcmask 519168
      %1091 = vst.msk [vmem:[%s170] sm:$0xf] %vm1090, %v990
      %1092 = vst.msk [vmem:[%s170 + $0x4] sm:$0xf] %vm1090, %v991
      %1093 = vst.msk [vmem:[%s170 + $0x8] sm:$0xf] %vm1090, %v992
      %1094 = vst.msk [vmem:[%s170 + $0xc] sm:$0xf] %vm1090, %v993
      %1095 = vst.msk [vmem:[%s170 + $0x10] sm:$0xf] %vm1090, %v994
      %1096 = vst.msk [vmem:[%s170 + $0x14] sm:$0xf] %vm1090, %v995
      %1097 = vst.msk [vmem:[%s170 + $0x18] sm:$0xf] %vm1090, %v996
      %1098 = vst.msk [vmem:[%s170 + $0x1c] sm:$0xf] %vm1090, %v997
      %1099 = vst.msk [vmem:[%s170 + $0x20] sm:$0xf] %vm1090, %v998
      %1100 = vst.msk [vmem:[%s170 + $0x24] sm:$0xf] %vm1090, %v999
      %1101 = vst.msk [vmem:[%s170 + $0x28] sm:$0xf] %vm1090, %v1000
      %1102 = vst.msk [vmem:[%s170 + $0x2c] sm:$0xf] %vm1090, %v1001
      %1103 = vst.msk [vmem:[%s170 + $0x30] sm:$0xf] %vm1090, %v1002
      %1104 = vst.msk [vmem:[%s170 + $0x34] sm:$0xf] %vm1090, %v1003
      %1105 = vst.msk [vmem:[%s170 + $0x38] sm:$0xf] %vm1090, %v1004
      %1106 = vst.msk [vmem:[%s170 + $0x3c] sm:$0xf] %vm1090, %v1005
      %1107 = vst.msk [vmem:[%s170 + $0x40] sm:$0xf] %vm1090, %v1006
      %1108 = vst.msk [vmem:[%s170 + $0x44] sm:$0xf] %vm1090, %v1007
      %1109 = vst.msk [vmem:[%s170 + $0x48] sm:$0xf] %vm1090, %v1008
      %1110 = vst.msk [vmem:[%s170 + $0x4c] sm:$0xf] %vm1090, %v1009
      %1111 = vst.msk [vmem:[%s170 + $0x50] sm:$0xf] %vm1090, %v1010
      %1112 = vst.msk [vmem:[%s170 + $0x54] sm:$0xf] %vm1090, %v1011
      %1113 = vst.msk [vmem:[%s170 + $0x58] sm:$0xf] %vm1090, %v1012
      %1114 = vst.msk [vmem:[%s170 + $0x5c] sm:$0xf] %vm1090, %v1013
      %1115 = vst.msk [vmem:[%s170 + $0x60] sm:$0xf] %vm1090, %v1014
      %1116 = vst.msk [vmem:[%s170 + $0x64] sm:$0xf] %vm1090, %v1015
      %1117 = vst.msk [vmem:[%s170 + $0x68] sm:$0xf] %vm1090, %v1016
      %1118 = vst.msk [vmem:[%s170 + $0x6c] sm:$0xf] %vm1090, %v1017
      %1119 = vst.msk [vmem:[%s170 + $0x70] sm:$0xf] %vm1090, %v1018
      %1120 = vst.msk [vmem:[%s170 + $0x74] sm:$0xf] %vm1090, %v1019
      %1121 = vst.msk [vmem:[%s170 + $0x78] sm:$0xf] %vm1090, %v1020
      %1122 = vst.msk [vmem:[%s170 + $0x7c] sm:$0xf] %vm1090, %v1021
      %1123 = vst.msk [vmem:[%s170 + $0x80] sm:$0xf] %vm1090, %v1022
      %1124 = vst.msk [vmem:[%s170 + $0x84] sm:$0xf] %vm1090, %v1023
      %1125 = vst.msk [vmem:[%s170 + $0x88] sm:$0xf] %vm1090, %v1024
      %1126 = vst.msk [vmem:[%s170 + $0x8c] sm:$0xf] %vm1090, %v1025
      %1127 = vst.msk [vmem:[%s170 + $0x90] sm:$0xf] %vm1090, %v1026
      %1128 = vst.msk [vmem:[%s170 + $0x94] sm:$0xf] %vm1090, %v1027
      %1129 = vst.msk [vmem:[%s170 + $0x98] sm:$0xf] %vm1090, %v1028
      %1130 = vst.msk [vmem:[%s170 + $0x9c] sm:$0xf] %vm1090, %v1029
      %1131 = vst.msk [vmem:[%s170 + $0xa0] sm:$0xf] %vm1090, %v1030
      %1132 = vst.msk [vmem:[%s170 + $0xa4] sm:$0xf] %vm1090, %v1031
      %1133 = vst.msk [vmem:[%s170 + $0xa8] sm:$0xf] %vm1090, %v1032
      %1134 = vst.msk [vmem:[%s170 + $0xac] sm:$0xf] %vm1090, %v1033
      %1135 = vst.msk [vmem:[%s170 + $0xb0] sm:$0xf] %vm1090, %v1034
      %1136 = vst.msk [vmem:[%s170 + $0xb4] sm:$0xf] %vm1090, %v1035
      %1137 = vst.msk [vmem:[%s170 + $0xb8] sm:$0xf] %vm1090, %v1036
      %1138 = vst.msk [vmem:[%s170 + $0xbc] sm:$0xf] %vm1090, %v1037
      %1139 = vst.msk [vmem:[%s170 + $0xc0] sm:$0xf] %vm1090, %v1038
      %1140 = vst.msk [vmem:[%s170 + $0xc4] sm:$0xf] %vm1090, %v1039
      %p1141 = scmp.lt.s32.totalorder %s14, 1
      %s1142 = scalar_select %p1141, %s14, 1
      %s1143 = smul.addr %s1142, 50
      %s1144 = smul.addr %s1143, 4
      %s1145 = scalar_lea.vmem %s3, %s1144
      // Predicated region
      $region33: #{net_forward.4} parent=31 // pred_check
        %p1146 = pneg %p100
      $region34: #{net_forward.4} parent=31 // pred_check_branch
        %1148 = sbr.rel (%p1146) target = $region36
      $region35: #{net_forward.4} parent=31 // pred_region
        _
      $region36: #{net_forward.4} parent=31 // pred_fallthru
        _
    $region32: #{net_forward.4} parent=5 // pred_fallthru
      _
    %p1149 = scmp.le.s32.totalorder 2, %s9
    // Predicated region
    $region37: #{net_forward.4} parent=5 // pred_check
      %p1150 = pneg %p1149
    $region38: #{net_forward.4} parent=5 // pred_check_branch
      %1152 = sbr.rel (%p1150) target = $region40
    $region39: #{net_forward.4} parent=5 // pred_region
      %s1153 = ssub.s32 %s9, 2
      // Predicated region
      $region41: #{net_forward.4} parent=39 // pred_check
        %p1154 = pneg %p106
      $region42: #{net_forward.4} parent=39 // pred_check_branch
        %1156 = sbr.rel (%p1154) target = $region44
      $region43: #{net_forward.4} parent=39 // pred_region
        %p1157 = scmp.lt.s32.totalorder %s15, 1
        %s1158 = scalar_select %p1157, %s15, 1
        %s1159 = smul.addr %s1158, 50
        %s1160 = smul.addr %s1159, 4
        %s1161 = scalar_lea.vmem %s3, %s1160
      $region44: #{net_forward.4} parent=39 // pred_fallthru
        _
    $region40: #{net_forward.4} parent=5 // pred_fallthru
      _
  $region6: #{net_forward.4} parent=0 // loop_footer
    %s13 = sadd.s32 1, %s9
  $region7: #{net_forward.4} parent=0 // loop_footer_branch
    %8 = sbr.rel target = $region3
  $region8: #{net_forward.4} parent=0 // loop_exit
    _

// kernel: net_forward.5
$region0: #{net_forward.5}
  #allocation0 [shape = 'u32[]', space=smem, size = 0x4, offset = 0x4, fixed_abs, tag = 'smem constant byte address 0x4 - core index']
  #allocation1 [shape = 'u32[144,128]{1,0:T(1,128)}', space=vmem, size = 0x12000, scoped, tag = 'internal scratch']
  %s0 = inlined_call_operand.vmem [shape: bf16[2,81,1024], index: 0, kind: input, shape index: {}]
  %s1 = inlined_call_operand.vmem [shape: bf16[1024,64], index: 1, kind: input, shape index: {}]
  %s2 = inlined_call_operand.vmem [shape: f32[1,64], index: 2, kind: input, shape index: {}]
  %s3 = inlined_call_operand.vmem [shape: bf16[2,81,64], index: 3, kind: output, shape index: {}]
  %s4 = sld [smem:[#allocation0]]
  $region45: #{net_forward.5} parent=0
    _
  %s6 = ssub.s32 1, %s4
  %s7 = scalar_select 0, %s6, %s4
  loop: start=0, step=1, limit=4
  $region2: #{net_forward.5} parent=0 // loop_pre_header
    _
  $region3: #{net_forward.5} parent=0 // loop_header
    %s9 = sphi 0, %s13
    %p10 = scmp.ge.s32.totalorder %s9, 4
    %s19 = sphi 0, %s21
    %s22 = sphi 0, %s19
    %s23 = sphi 0, %s22
    %s39 = sphi 0, %s23
    %s43 = sphi 0, %s43
    %s45 = sphi 0, %s43
    %s46 = sphi 0, %s45
    %s60 = sphi 0, %s46
    %s64 = sphi 0, %s64
    %s66 = sphi 0, %s64
    %s67 = sphi 0, %s66
    %s81 = sphi 0, %s67
    %s87 = sphi 0, %s89
    %s90 = sphi 0, %s87
    %s91 = sphi 0, %s90
    %s107 = sphi 0, %s91
  $region4: #{net_forward.5} parent=0 // loop_header_branch
    %12 = sbr.rel (%p10) target = $region8
  $region5: #{net_forward.5} parent=0 // loop_body
    %s14 = ssub.s32 %s9, 1
    %s15 = ssub.s32 %s9, 2
    %s16 = sadd.s32 %s9, 1
    %s17 = ssub.s32 %s9, %s16
    %p18 = scmp.eq.s32.totalorder %s17, 0
    %s20 = sadd.s32 %s19, 1
    %s21 = scalar_select %p18, %s19, %s20
    %p24 = pneg %p18
    %p25 = scmp.eq.s32.totalorder %s9, 1
    %p26 = por %p24, %p25
    %p27 = scmp.ne.s32.totalorder %s19, %s22
    %p28 = scmp.eq.s32.totalorder %s9, 0
    %p29 = por %p27, %p28
    %p30 = scmp.ne.s32.totalorder %s19, %s22
    %p31 = scmp.eq.s32.totalorder %s14, 1
    %p32 = por %p30, %p31
    %p33 = scmp.ne.s32.totalorder %s22, %s23
    %p34 = scmp.eq.s32.totalorder %s14, 0
    %p35 = por %p33, %p34
    %p36 = scmp.ne.s32.totalorder %s22, %s23
    %p37 = scmp.eq.s32.totalorder %s15, 1
    %p38 = por %p36, %p37
    %p40 = scmp.ne.s32.totalorder %s23, %s39
    %p41 = scmp.eq.s32.totalorder %s15, 0
    %p42 = por %p40, %p41
    %s44 = sadd.s32 %s43, 1
    %p47 = scmp.eq.s32.totalorder %s9, 1
    %p48 = scmp.ne.s32.totalorder %s43, %s45
    %p49 = scmp.eq.s32.totalorder %s9, 0
    %p50 = por %p48, %p49
    %p51 = scmp.ne.s32.totalorder %s43, %s45
    %p52 = scmp.eq.s32.totalorder %s14, 1
    %p53 = por %p51, %p52
    %p54 = scmp.ne.s32.totalorder %s45, %s46
    %p55 = scmp.eq.s32.totalorder %s14, 0
    %p56 = por %p54, %p55
    %p57 = scmp.ne.s32.totalorder %s45, %s46
    %p58 = scmp.eq.s32.totalorder %s15, 1
    %p59 = por %p57, %p58
    %p61 = scmp.ne.s32.totalorder %s46, %s60
    %p62 = scmp.eq.s32.totalorder %s15, 0
    %p63 = por %p61, %p62
    %s65 = sadd.s32 %s64, 1
    %p68 = scmp.eq.s32.totalorder %s9, 1
    %p69 = scmp.ne.s32.totalorder %s64, %s66
    %p70 = scmp.eq.s32.totalorder %s9, 0
    %p71 = por %p69, %p70
    %p72 = scmp.ne.s32.totalorder %s64, %s66
    %p73 = scmp.eq.s32.totalorder %s14, 1
    %p74 = por %p72, %p73
    %p75 = scmp.ne.s32.totalorder %s66, %s67
    %p76 = scmp.eq.s32.totalorder %s14, 0
    %p77 = por %p75, %p76
    %p78 = scmp.ne.s32.totalorder %s66, %s67
    %p79 = scmp.eq.s32.totalorder %s15, 1
    %p80 = por %p78, %p79
    %p82 = scmp.ne.s32.totalorder %s67, %s81
    %p83 = scmp.eq.s32.totalorder %s15, 0
    %p84 = por %p82, %p83
    %s85 = ssub.s32 %s9, %s16
    %p86 = scmp.eq.s32.totalorder %s85, 0
    %s88 = sadd.s32 %s87, 1
    %s89 = scalar_select %p86, %s87, %s88
    %p92 = pneg %p86
    %p93 = scmp.eq.s32.totalorder %s9, 1
    %p94 = por %p92, %p93
    %p95 = scmp.ne.s32.totalorder %s87, %s90
    %p96 = scmp.eq.s32.totalorder %s9, 0
    %p97 = por %p95, %p96
    %p98 = scmp.ne.s32.totalorder %s87, %s90
    %p99 = scmp.eq.s32.totalorder %s14, 1
    %p100 = por %p98, %p99
    %p101 = scmp.ne.s32.totalorder %s90, %s91
    %p102 = scmp.eq.s32.totalorder %s14, 0
    %p103 = por %p101, %p102
    %p104 = scmp.ne.s32.totalorder %s90, %s91
    %p105 = scmp.eq.s32.totalorder %s15, 1
    %p106 = por %p104, %p105
    %p108 = scmp.ne.s32.totalorder %s91, %s107
    %p109 = scmp.eq.s32.totalorder %s15, 0
    %p110 = por %p108, %p109
    %p111 = scmp.le.s32.totalorder 1, %s9
    %p112 = scmp.lt.s32.totalorder %s9, 3
    %p113 = pnand %p111, %p112
    %p114 = pneg %p113
    // Predicated region
    $region9: #{net_forward.5} parent=5 // pred_check
      _
    $region10: #{net_forward.5} parent=5 // pred_check_branch
      %116 = sbr.rel (%p113) target = $region12
    $region11: #{net_forward.5} parent=5 // pred_region
      %s117 = ssub.s32 %s9, 1
      // Predicated region
      $region13: #{net_forward.5} parent=11 // pred_check
        %p118 = pneg %p56
      $region14: #{net_forward.5} parent=11 // pred_check_branch
        %120 = sbr.rel (%p118) target = $region16
      $region15: #{net_forward.5} parent=11 // pred_region
        _
      $region16: #{net_forward.5} parent=11 // pred_fallthru
        _
      // Predicated region
      $region17: #{net_forward.5} parent=11 // pred_check
        %p121 = pneg %p77
      $region18: #{net_forward.5} parent=11 // pred_check_branch
        %123 = sbr.rel (%p121) target = $region20
      $region19: #{net_forward.5} parent=11 // pred_region
        _
      $region20: #{net_forward.5} parent=11 // pred_fallthru
        _
    $region12: #{net_forward.5} parent=5 // pred_fallthru
      _
    %p124 = scmp.lt.s32.totalorder %s9, 2
    // Predicated region
    $region21: #{net_forward.5} parent=5 // pred_check
      %p125 = pneg %p124
    $region22: #{net_forward.5} parent=5 // pred_check_branch
      %127 = sbr.rel (%p125) target = $region24
    $region23: #{net_forward.5} parent=5 // pred_region
      // Predicated region
      $region25: #{net_forward.5} parent=23 // pred_check
        %p128 = pneg %p29
      $region26: #{net_forward.5} parent=23 // pred_check_branch
        %130 = sbr.rel (%p128) target = $region28
      $region27: #{net_forward.5} parent=23 // pred_region
        %p131 = scmp.lt.s32.totalorder %s9, 1
        %s132 = scalar_select %p131, %s9, 1
        %s133 = smul.addr %s132, 88
        %s134 = smul.addr %s133, 4
        %s135 = scalar_lea.vmem %s0, %s134
      $region28: #{net_forward.5} parent=23 // pred_fallthru
        _
    $region24: #{net_forward.5} parent=5 // pred_fallthru
      _
    %p136 = scmp.le.s32.totalorder 1, %s9
    %p137 = scmp.lt.s32.totalorder %s9, 3
    %p138 = pnand %p136, %p137
    %p139 = pneg %p138
    // Predicated region
    $region29: #{net_forward.5} parent=5 // pred_check
      _
    $region30: #{net_forward.5} parent=5 // pred_check_branch
      %141 = sbr.rel (%p138) target = $region32
    $region31: #{net_forward.5} parent=5 // pred_region
      %s142 = ssub.s32 %s9, 1
      %p143 = scmp.lt.s32.totalorder %s14, 1
      %s144 = scalar_select %p143, %s14, 1
      %s145 = smul.addr %s144, 88
      %s146 = smul.addr %s145, 4
      %s147 = scalar_lea.vmem %s0, %s146
      %p148 = pneg %p35
      %p149 = pneg %p32
      %p150 = pneg %p56
      %p151 = pneg %p53
      %p152 = pneg %p77
      %p153 = pneg %p74
      %p154 = pneg %p103
      %p155 = pneg %p100
      %p156 = scmp.lt.s32.totalorder %s14, 1
      %s157 = scalar_select %p156, %s14, 1
      %s158 = smul.addr %s157, 11
      %s159 = smul.addr %s158, 4
      %s160 = scalar_lea.vmem %s3, %s159
      %p161 = scmp.lt.s32.totalorder %s14, 1
      %s162 = scalar_select %p161, %s14, 1
      %s163 = smul.addr %s162, 88
      %s164 = smul.addr %s163, 4
      %s165 = scalar_lea.vmem %s0, %s164
      %p166 = scmp.lt.s32.totalorder %s14, 1
      %s167 = scalar_select %p166, %s14, 1
      %s168 = smul.addr %s167, 11
      %s169 = smul.addr %s168, 4
      %s170 = scalar_lea.vmem %s3, %s169
      %v172 = vld [vmem:[%s165] sm:$0xff]
      %v173 = vld [vmem:[%s165 + $0x8] sm:$0xff]
      %v174 = vld [vmem:[%s165 + $0x10] sm:$0xff]
      %v175 = vld [vmem:[%s165 + $0x18] sm:$0xff]
      %v176 = vld [vmem:[%s165 + $0x20] sm:$0xff]
      %v177 = vld [vmem:[%s165 + $0x28] sm:$0xff]
      %v178 = vld [vmem:[%s165 + $0x30] sm:$0xff]
      %v179 = vld [vmem:[%s165 + $0x38] sm:$0xff]
      %v180 = vld [vmem:[%s165 + $0x40] sm:$0xff]
      %v181 = vld [vmem:[%s165 + $0x48] sm:$0xff]
      %v182 = vld [vmem:[%s165 + $0x50] sm:$0xff]
      %v183 = vld [vmem:[%s165 + $0x58] sm:$0xff]
      %v184 = vld [vmem:[%s165 + $0x60] sm:$0xff]
      %v185 = vld [vmem:[%s165 + $0x68] sm:$0xff]
      %v186 = vld [vmem:[%s165 + $0x70] sm:$0xff]
      %v187 = vld [vmem:[%s165 + $0x78] sm:$0xff]
      %v188 = vld [vmem:[%s165 + $0x80] sm:$0xff]
      %v189 = vld [vmem:[%s165 + $0x88] sm:$0xff]
      %v190 = vld [vmem:[%s165 + $0x90] sm:$0xff]
      %v191 = vld [vmem:[%s165 + $0x98] sm:$0xff]
      %v192 = vld [vmem:[%s165 + $0xa0] sm:$0xff]
      %v193 = vld [vmem:[%s165 + $0xa8] sm:$0xff]
      %v194 = vld [vmem:[%s165 + $0xb0] sm:$0xff]
      %v195 = vld [vmem:[%s165 + $0xb8] sm:$0xff]
      %v196 = vld [vmem:[%s165 + $0xc0] sm:$0xff]
      %v197 = vld [vmem:[%s165 + $0xc8] sm:$0xff]
      %v198 = vld [vmem:[%s165 + $0xd0] sm:$0xff]
      %v199 = vld [vmem:[%s165 + $0xd8] sm:$0xff]
      %v200 = vld [vmem:[%s165 + $0xe0] sm:$0xff]
      %v201 = vld [vmem:[%s165 + $0xe8] sm:$0xff]
      %v202 = vld [vmem:[%s165 + $0xf0] sm:$0xff]
      %v203 = vld [vmem:[%s165 + $0xf8] sm:$0xff]
      %v204 = vld [vmem:[%s165 + $0x100] sm:$0xff]
      %v205 = vld [vmem:[%s165 + $0x108] sm:$0xff]
      %v206 = vld [vmem:[%s165 + $0x110] sm:$0xff]
      %v207 = vld [vmem:[%s165 + $0x118] sm:$0xff]
      %v208 = vld [vmem:[%s165 + $0x120] sm:$0xff]
      %v209 = vld [vmem:[%s165 + $0x128] sm:$0xff]
      %v210 = vld [vmem:[%s165 + $0x130] sm:$0xff]
      %v211 = vld [vmem:[%s165 + $0x138] sm:$0xff]
      %v212 = vld [vmem:[%s165 + $0x140] sm:$0x11]
      %v213 = vld [vmem:[%s165 + $0x148] sm:$0x11]
      %v214 = vld [vmem:[%s165 + $0x150] sm:$0x11]
      %v215 = vld [vmem:[%s165 + $0x158] sm:$0x11]
      %v216 = vld [vmem:[%s1] sm:$0xf]
      %v217 = vld [vmem:[%s1 + $0x4] sm:$0xf]
      %v218 = vld [vmem:[%s1 + $0x8] sm:$0xf]
      %v219 = vld [vmem:[%s1 + $0xc] sm:$0xf]
      %v220 = vld [vmem:[%s1 + $0x10] sm:$0xf]
      %v221 = vld [vmem:[%s1 + $0x14] sm:$0xf]
      %v222 = vld [vmem:[%s1 + $0x18] sm:$0xf]
      %v223 = vld [vmem:[%s1 + $0x1c] sm:$0xf]
      %v224 = vld [vmem:[%s1 + $0x20] sm:$0xf]
      %v225 = vld [vmem:[%s1 + $0x24] sm:$0xf]
      %v226 = vld [vmem:[%s1 + $0x28] sm:$0xf]
      %v227 = vld [vmem:[%s1 + $0x2c] sm:$0xf]
      %v228 = vld [vmem:[%s1 + $0x30] sm:$0xf]
      %v229 = vld [vmem:[%s1 + $0x34] sm:$0xf]
      %v230 = vld [vmem:[%s1 + $0x38] sm:$0xf]
      %v231 = vld [vmem:[%s1 + $0x3c] sm:$0xf]
      %v232 = vld [vmem:[%s1 + $0x40] sm:$0xf]
      %v233 = vld [vmem:[%s1 + $0x44] sm:$0xf]
      %v234 = vld [vmem:[%s1 + $0x48] sm:$0xf]
      %v235 = vld [vmem:[%s1 + $0x4c] sm:$0xf]
      %v236 = vld [vmem:[%s1 + $0x50] sm:$0xf]
      %v237 = vld [vmem:[%s1 + $0x54] sm:$0xf]
      %v238 = vld [vmem:[%s1 + $0x58] sm:$0xf]
      %v239 = vld [vmem:[%s1 + $0x5c] sm:$0xf]
      %v240 = vld [vmem:[%s1 + $0x60] sm:$0xf]
      %v241 = vld [vmem:[%s1 + $0x64] sm:$0xf]
      %v242 = vld [vmem:[%s1 + $0x68] sm:$0xf]
      %v243 = vld [vmem:[%s1 + $0x6c] sm:$0xf]
      %v244 = vld [vmem:[%s1 + $0x70] sm:$0xf]
      %v245 = vld [vmem:[%s1 + $0x74] sm:$0xf]
      %v246 = vld [vmem:[%s1 + $0x78] sm:$0xf]
      %v247 = vld [vmem:[%s1 + $0x7c] sm:$0xf]
      %v248 = vld [vmem:[%s1 + $0x80] sm:$0xf]
      %v249 = vld [vmem:[%s1 + $0x84] sm:$0xf]
      %v250 = vld [vmem:[%s1 + $0x88] sm:$0xf]
      %v251 = vld [vmem:[%s1 + $0x8c] sm:$0xf]
      %v252 = vld [vmem:[%s1 + $0x90] sm:$0xf]
      %v253 = vld [vmem:[%s1 + $0x94] sm:$0xf]
      %v254 = vld [vmem:[%s1 + $0x98] sm:$0xf]
      %v255 = vld [vmem:[%s1 + $0x9c] sm:$0xf]
      %v256 = vld [vmem:[%s1 + $0xa0] sm:$0xf]
      %v257 = vld [vmem:[%s1 + $0xa4] sm:$0xf]
      %v258 = vld [vmem:[%s1 + $0xa8] sm:$0xf]
      %v259 = vld [vmem:[%s1 + $0xac] sm:$0xf]
      %v260 = vld [vmem:[%s1 + $0xb0] sm:$0xf]
      %v261 = vld [vmem:[%s1 + $0xb4] sm:$0xf]
      %v262 = vld [vmem:[%s1 + $0xb8] sm:$0xf]
      %v263 = vld [vmem:[%s1 + $0xbc] sm:$0xf]
      %v264 = vld [vmem:[%s1 + $0xc0] sm:$0xf]
      %v265 = vld [vmem:[%s1 + $0xc4] sm:$0xf]
      %v266 = vld [vmem:[%s1 + $0xc8] sm:$0xf]
      %v267 = vld [vmem:[%s1 + $0xcc] sm:$0xf]
      %v268 = vld [vmem:[%s1 + $0xd0] sm:$0xf]
      %v269 = vld [vmem:[%s1 + $0xd4] sm:$0xf]
      %v270 = vld [vmem:[%s1 + $0xd8] sm:$0xf]
      %v271 = vld [vmem:[%s1 + $0xdc] sm:$0xf]
      %v272 = vld [vmem:[%s1 + $0xe0] sm:$0xf]
      %v273 = vld [vmem:[%s1 + $0xe4] sm:$0xf]
      %v274 = vld [vmem:[%s1 + $0xe8] sm:$0xf]
      %v275 = vld [vmem:[%s1 + $0xec] sm:$0xf]
      %v276 = vld [vmem:[%s1 + $0xf0] sm:$0xf]
      %v277 = vld [vmem:[%s1 + $0xf4] sm:$0xf]
      %v278 = vld [vmem:[%s1 + $0xf8] sm:$0xf]
      %v279 = vld [vmem:[%s1 + $0xfc] sm:$0xf]
      %v280 = vld [vmem:[%s1 + $0x100] sm:$0xf]
      %v281 = vld [vmem:[%s1 + $0x104] sm:$0xf]
      %v282 = vld [vmem:[%s1 + $0x108] sm:$0xf]
      %v283 = vld [vmem:[%s1 + $0x10c] sm:$0xf]
      %v284 = vld [vmem:[%s1 + $0x110] sm:$0xf]
      %v285 = vld [vmem:[%s1 + $0x114] sm:$0xf]
      %v286 = vld [vmem:[%s1 + $0x118] sm:$0xf]
      %v287 = vld [vmem:[%s1 + $0x11c] sm:$0xf]
      %v288 = vld [vmem:[%s1 + $0x120] sm:$0xf]
      %v289 = vld [vmem:[%s1 + $0x124] sm:$0xf]
      %v290 = vld [vmem:[%s1 + $0x128] sm:$0xf]
      %v291 = vld [vmem:[%s1 + $0x12c] sm:$0xf]
      %v292 = vld [vmem:[%s1 + $0x130] sm:$0xf]
      %v293 = vld [vmem:[%s1 + $0x134] sm:$0xf]
      %v294 = vld [vmem:[%s1 + $0x138] sm:$0xf]
      %v295 = vld [vmem:[%s1 + $0x13c] sm:$0xf]
      %v296 = vld [vmem:[%s1 + $0x140] sm:$0xf]
      %v297 = vld [vmem:[%s1 + $0x144] sm:$0xf]
      %v298 = vld [vmem:[%s1 + $0x148] sm:$0xf]
      %v299 = vld [vmem:[%s1 + $0x14c] sm:$0xf]
      %v300 = vld [vmem:[%s1 + $0x150] sm:$0xf]
      %v301 = vld [vmem:[%s1 + $0x154] sm:$0xf]
      %v302 = vld [vmem:[%s1 + $0x158] sm:$0xf]
      %v303 = vld [vmem:[%s1 + $0x15c] sm:$0xf]
      %v304 = vld [vmem:[%s1 + $0x160] sm:$0xf]
      %v305 = vld [vmem:[%s1 + $0x164] sm:$0xf]
      %v306 = vld [vmem:[%s1 + $0x168] sm:$0xf]
      %v307 = vld [vmem:[%s1 + $0x16c] sm:$0xf]
      %v308 = vld [vmem:[%s1 + $0x170] sm:$0xf]
      %v309 = vld [vmem:[%s1 + $0x174] sm:$0xf]
      %v310 = vld [vmem:[%s1 + $0x178] sm:$0xf]
      %v311 = vld [vmem:[%s1 + $0x17c] sm:$0xf]
      %v312 = vld [vmem:[%s1 + $0x180] sm:$0xf]
      %v313 = vld [vmem:[%s1 + $0x184] sm:$0xf]
      %v314 = vld [vmem:[%s1 + $0x188] sm:$0xf]
      %v315 = vld [vmem:[%s1 + $0x18c] sm:$0xf]
      %v316 = vld [vmem:[%s1 + $0x190] sm:$0xf]
      %v317 = vld [vmem:[%s1 + $0x194] sm:$0xf]
      %v318 = vld [vmem:[%s1 + $0x198] sm:$0xf]
      %v319 = vld [vmem:[%s1 + $0x19c] sm:$0xf]
      %v320 = vld [vmem:[%s1 + $0x1a0] sm:$0xf]
      %v321 = vld [vmem:[%s1 + $0x1a4] sm:$0xf]
      %v322 = vld [vmem:[%s1 + $0x1a8] sm:$0xf]
      %v323 = vld [vmem:[%s1 + $0x1ac] sm:$0xf]
      %v324 = vld [vmem:[%s1 + $0x1b0] sm:$0xf]
      %v325 = vld [vmem:[%s1 + $0x1b4] sm:$0xf]
      %v326 = vld [vmem:[%s1 + $0x1b8] sm:$0xf]
      %v327 = vld [vmem:[%s1 + $0x1bc] sm:$0xf]
      %v328 = vld [vmem:[%s1 + $0x1c0] sm:$0xf]
      %v329 = vld [vmem:[%s1 + $0x1c4] sm:$0xf]
      %v330 = vld [vmem:[%s1 + $0x1c8] sm:$0xf]
      %v331 = vld [vmem:[%s1 + $0x1cc] sm:$0xf]
      %v332 = vld [vmem:[%s1 + $0x1d0] sm:$0xf]
      %v333 = vld [vmem:[%s1 + $0x1d4] sm:$0xf]
      %v334 = vld [vmem:[%s1 + $0x1d8] sm:$0xf]
      %v335 = vld [vmem:[%s1 + $0x1dc] sm:$0xf]
      %v336 = vld [vmem:[%s1 + $0x1e0] sm:$0xf]
      %v337 = vld [vmem:[%s1 + $0x1e4] sm:$0xf]
      %v338 = vld [vmem:[%s1 + $0x1e8] sm:$0xf]
      %v339 = vld [vmem:[%s1 + $0x1ec] sm:$0xf]
      %v340 = vld [vmem:[%s1 + $0x1f0] sm:$0xf]
      %v341 = vld [vmem:[%s1 + $0x1f4] sm:$0xf]
      %v342 = vld [vmem:[%s1 + $0x1f8] sm:$0xf]
      %v343 = vld [vmem:[%s1 + $0x1fc] sm:$0xf]
      %v344 = vld [vmem:[%s2] sm:$0x1]
      %v346 = vlaneseq
      %v347 = vshrl.u32 %v346, 7
      %v348 = vsub.s32 0, %v347
      %v349 = vrot.slane %v344, %v348
      %v395 = vunpack.c.l.b16 %v172
      %v396 = vunpack.c.h.b16 %v172
      %v397 = vunpack.c.l.b16 %v173
      %v398 = vunpack.c.h.b16 %v173
      %v399 = vunpack.c.l.b16 %v174
      %v400 = vunpack.c.h.b16 %v174
      %v401 = vunpack.c.l.b16 %v175
      %v402 = vunpack.c.h.b16 %v175
      %v403 = vunpack.c.l.b16 %v176
      %v404 = vunpack.c.h.b16 %v176
      %v405 = vunpack.c.l.b16 %v177
      %v406 = vunpack.c.h.b16 %v177
      %v407 = vunpack.c.l.b16 %v178
      %v408 = vunpack.c.h.b16 %v178
      %v409 = vunpack.c.l.b16 %v179
      %v410 = vunpack.c.h.b16 %v179
      %v411 = vunpack.c.l.b16 %v180
      %v412 = vunpack.c.h.b16 %v180
      %v413 = vunpack.c.l.b16 %v181
      %v414 = vunpack.c.h.b16 %v181
      %v415 = vunpack.c.l.b16 %v182
      %v416 = vunpack.c.h.b16 %v182
      %v417 = vunpack.c.l.b16 %v183
      %v418 = vunpack.c.h.b16 %v183
      %v419 = vunpack.c.l.b16 %v184
      %v420 = vunpack.c.h.b16 %v184
      %v421 = vunpack.c.l.b16 %v185
      %v422 = vunpack.c.h.b16 %v185
      %v423 = vunpack.c.l.b16 %v186
      %v424 = vunpack.c.h.b16 %v186
      %v425 = vunpack.c.l.b16 %v187
      %v426 = vunpack.c.h.b16 %v187
      %v427 = vunpack.c.l.b16 %v188
      %v428 = vunpack.c.h.b16 %v188
      %v429 = vunpack.c.l.b16 %v189
      %v430 = vunpack.c.h.b16 %v189
      %v431 = vunpack.c.l.b16 %v190
      %v432 = vunpack.c.h.b16 %v190
      %v433 = vunpack.c.l.b16 %v191
      %v434 = vunpack.c.h.b16 %v191
      %v435 = vunpack.c.l.b16 %v192
      %v436 = vunpack.c.h.b16 %v192
      %v437 = vunpack.c.l.b16 %v193
      %v438 = vunpack.c.h.b16 %v193
      %v439 = vunpack.c.l.b16 %v194
      %v440 = vunpack.c.h.b16 %v194
      %v441 = vunpack.c.l.b16 %v195
      %v442 = vunpack.c.h.b16 %v195
      %v443 = vunpack.c.l.b16 %v196
      %v444 = vunpack.c.h.b16 %v196
      %v445 = vunpack.c.l.b16 %v197
      %v446 = vunpack.c.h.b16 %v197
      %v447 = vunpack.c.l.b16 %v198
      %v448 = vunpack.c.h.b16 %v198
      %v449 = vunpack.c.l.b16 %v199
      %v450 = vunpack.c.h.b16 %v199
      %v451 = vunpack.c.l.b16 %v200
      %v452 = vunpack.c.h.b16 %v200
      %v453 = vunpack.c.l.b16 %v201
      %v454 = vunpack.c.h.b16 %v201
      %v455 = vunpack.c.l.b16 %v202
      %v456 = vunpack.c.h.b16 %v202
      %v457 = vunpack.c.l.b16 %v203
      %v458 = vunpack.c.h.b16 %v203
      %v459 = vunpack.c.l.b16 %v204
      %v460 = vunpack.c.h.b16 %v204
      %v461 = vunpack.c.l.b16 %v205
      %v462 = vunpack.c.h.b16 %v205
      %v463 = vunpack.c.l.b16 %v206
      %v464 = vunpack.c.h.b16 %v206
      %v465 = vunpack.c.l.b16 %v207
      %v466 = vunpack.c.h.b16 %v207
      %v467 = vunpack.c.l.b16 %v208
      %v468 = vunpack.c.h.b16 %v208
      %v469 = vunpack.c.l.b16 %v209
      %v470 = vunpack.c.h.b16 %v209
      %v471 = vunpack.c.l.b16 %v210
      %v472 = vunpack.c.h.b16 %v210
      %v473 = vunpack.c.l.b16 %v211
      %v474 = vunpack.c.h.b16 %v211
      %v475 = vunpack.c.l.b16 %v212
      %v476 = vunpack.c.h.b16 %v212
      %v477 = vunpack.c.l.b16 %v213
      %v478 = vunpack.c.h.b16 %v213
      %v479 = vunpack.c.l.b16 %v214
      %v480 = vunpack.c.h.b16 %v214
      %v481 = vunpack.c.l.b16 %v215
      %v482 = vunpack.c.h.b16 %v215
      %v483 = vpack.c.b16 %v403, %v395
      %v484 = vpack.c.b16 %v404, %v396
      %v485 = vpack.c.b16 %v405, %v397
      %v486 = vpack.c.b16 %v406, %v398
      %v487 = vpack.c.b16 %v407, %v399
      %v488 = vpack.c.b16 %v408, %v400
      %v489 = vpack.c.b16 %v409, %v401
      %v490 = vpack.c.b16 %v410, %v402
      %v491 = vpack.c.b16 %v419, %v411
      %v492 = vpack.c.b16 %v420, %v412
      %v493 = vpack.c.b16 %v421, %v413
      %v494 = vpack.c.b16 %v422, %v414
      %v495 = vpack.c.b16 %v423, %v415
      %v496 = vpack.c.b16 %v424, %v416
      %v497 = vpack.c.b16 %v425, %v417
      %v498 = vpack.c.b16 %v426, %v418
      %v499 = vpack.c.b16 %v435, %v427
      %v500 = vpack.c.b16 %v436, %v428
      %v501 = vpack.c.b16 %v437, %v429
      %v502 = vpack.c.b16 %v438, %v430
      %v503 = vpack.c.b16 %v439, %v431
      %v504 = vpack.c.b16 %v440, %v432
      %v505 = vpack.c.b16 %v441, %v433
      %v506 = vpack.c.b16 %v442, %v434
      %v507 = vpack.c.b16 %v451, %v443
      %v508 = vpack.c.b16 %v452, %v444
      %v509 = vpack.c.b16 %v453, %v445
      %v510 = vpack.c.b16 %v454, %v446
      %v511 = vpack.c.b16 %v455, %v447
      %v512 = vpack.c.b16 %v456, %v448
      %v513 = vpack.c.b16 %v457, %v449
      %v514 = vpack.c.b16 %v458, %v450
      %v515 = vpack.c.b16 %v467, %v459
      %v516 = vpack.c.b16 %v468, %v460
      %v517 = vpack.c.b16 %v469, %v461
      %v518 = vpack.c.b16 %v470, %v462
      %v519 = vpack.c.b16 %v471, %v463
      %v520 = vpack.c.b16 %v472, %v464
      %v521 = vpack.c.b16 %v473, %v465
      %v522 = vpack.c.b16 %v474, %v466
      %v523 = vpack.c.b16 %v475, %v475
      %v524 = vpack.c.b16 %v476, %v476
      %v525 = vpack.c.b16 %v477, %v477
      %v526 = vpack.c.b16 %v478, %v478
      %v527 = vpack.c.b16 %v479, %v479
      %v528 = vpack.c.b16 %v480, %v480
      %v529 = vpack.c.b16 %v481, %v481
      %v530 = vpack.c.b16 %v482, %v482
      %v707 = vunpack.c.l.b16 %v216
      %v708 = vunpack.c.l.b16 %v217
      %v709 = vunpack.c.l.b16 %v218
      %v710 = vunpack.c.l.b16 %v219
      %v711 = vunpack.c.l.b16 %v220
      %v712 = vunpack.c.l.b16 %v221
      %v713 = vunpack.c.l.b16 %v222
      %v714 = vunpack.c.l.b16 %v223
      %v715 = vunpack.c.l.b16 %v224
      %v716 = vunpack.c.l.b16 %v225
      %v717 = vunpack.c.l.b16 %v226
      %v718 = vunpack.c.l.b16 %v227
      %v719 = vunpack.c.l.b16 %v228
      %v720 = vunpack.c.l.b16 %v229
      %v721 = vunpack.c.l.b16 %v230
      %v722 = vunpack.c.l.b16 %v231
      %v723 = vunpack.c.l.b16 %v232
      %v724 = vunpack.c.l.b16 %v233
      %v725 = vunpack.c.l.b16 %v234
      %v726 = vunpack.c.l.b16 %v235
      %v727 = vunpack.c.l.b16 %v236
      %v728 = vunpack.c.l.b16 %v237
      %v729 = vunpack.c.l.b16 %v238
      %v730 = vunpack.c.l.b16 %v239
      %v731 = vunpack.c.l.b16 %v240
      %v732 = vunpack.c.l.b16 %v241
      %v733 = vunpack.c.l.b16 %v242
      %v734 = vunpack.c.l.b16 %v243
      %v735 = vunpack.c.l.b16 %v244
      %v736 = vunpack.c.l.b16 %v245
      %v737 = vunpack.c.l.b16 %v246
      %v738 = vunpack.c.l.b16 %v247
      %v739 = vunpack.c.l.b16 %v248
      %v740 = vunpack.c.l.b16 %v249
      %v741 = vunpack.c.l.b16 %v250
      %v742 = vunpack.c.l.b16 %v251
      %v743 = vunpack.c.l.b16 %v252
      %v744 = vunpack.c.l.b16 %v253
      %v745 = vunpack.c.l.b16 %v254
      %v746 = vunpack.c.l.b16 %v255
      %v747 = vunpack.c.l.b16 %v256
      %v748 = vunpack.c.l.b16 %v257
      %v749 = vunpack.c.l.b16 %v258
      %v750 = vunpack.c.l.b16 %v259
      %v751 = vunpack.c.l.b16 %v260
      %v752 = vunpack.c.l.b16 %v261
      %v753 = vunpack.c.l.b16 %v262
      %v754 = vunpack.c.l.b16 %v263
      %v755 = vunpack.c.l.b16 %v264
      %v756 = vunpack.c.l.b16 %v265
      %v757 = vunpack.c.l.b16 %v266
      %v758 = vunpack.c.l.b16 %v267
      %v759 = vunpack.c.l.b16 %v268
      %v760 = vunpack.c.l.b16 %v269
      %v761 = vunpack.c.l.b16 %v270
      %v762 = vunpack.c.l.b16 %v271
      %v763 = vunpack.c.l.b16 %v272
      %v764 = vunpack.c.l.b16 %v273
      %v765 = vunpack.c.l.b16 %v274
      %v766 = vunpack.c.l.b16 %v275
      %v767 = vunpack.c.l.b16 %v276
      %v768 = vunpack.c.l.b16 %v277
      %v769 = vunpack.c.l.b16 %v278
      %v770 = vunpack.c.l.b16 %v279
      %v771 = vunpack.c.l.b16 %v280
      %v772 = vunpack.c.l.b16 %v281
      %v773 = vunpack.c.l.b16 %v282
      %v774 = vunpack.c.l.b16 %v283
      %v775 = vunpack.c.l.b16 %v284
      %v776 = vunpack.c.l.b16 %v285
      %v777 = vunpack.c.l.b16 %v286
      %v778 = vunpack.c.l.b16 %v287
      %v779 = vunpack.c.l.b16 %v288
      %v780 = vunpack.c.l.b16 %v289
      %v781 = vunpack.c.l.b16 %v290
      %v782 = vunpack.c.l.b16 %v291
      %v783 = vunpack.c.l.b16 %v292
      %v784 = vunpack.c.l.b16 %v293
      %v785 = vunpack.c.l.b16 %v294
      %v786 = vunpack.c.l.b16 %v295
      %v787 = vunpack.c.l.b16 %v296
      %v788 = vunpack.c.l.b16 %v297
      %v789 = vunpack.c.l.b16 %v298
      %v790 = vunpack.c.l.b16 %v299
      %v791 = vunpack.c.l.b16 %v300
      %v792 = vunpack.c.l.b16 %v301
      %v793 = vunpack.c.l.b16 %v302
      %v794 = vunpack.c.l.b16 %v303
      %v795 = vunpack.c.l.b16 %v304
      %v796 = vunpack.c.l.b16 %v305
      %v797 = vunpack.c.l.b16 %v306
      %v798 = vunpack.c.l.b16 %v307
      %v799 = vunpack.c.l.b16 %v308
      %v800 = vunpack.c.l.b16 %v309
      %v801 = vunpack.c.l.b16 %v310
      %v802 = vunpack.c.l.b16 %v311
      %v803 = vunpack.c.l.b16 %v312
      %v804 = vunpack.c.l.b16 %v313
      %v805 = vunpack.c.l.b16 %v314
      %v806 = vunpack.c.l.b16 %v315
      %v807 = vunpack.c.l.b16 %v316
      %v808 = vunpack.c.l.b16 %v317
      %v809 = vunpack.c.l.b16 %v318
      %v810 = vunpack.c.l.b16 %v319
      %v811 = vunpack.c.l.b16 %v320
      %v812 = vunpack.c.l.b16 %v321
      %v813 = vunpack.c.l.b16 %v322
      %v814 = vunpack.c.l.b16 %v323
      %v815 = vunpack.c.l.b16 %v324
      %v816 = vunpack.c.l.b16 %v325
      %v817 = vunpack.c.l.b16 %v326
      %v818 = vunpack.c.l.b16 %v327
      %v819 = vunpack.c.l.b16 %v328
      %v820 = vunpack.c.l.b16 %v329
      %v821 = vunpack.c.l.b16 %v330
      %v822 = vunpack.c.l.b16 %v331
      %v823 = vunpack.c.l.b16 %v332
      %v824 = vunpack.c.l.b16 %v333
      %v825 = vunpack.c.l.b16 %v334
      %v826 = vunpack.c.l.b16 %v335
      %v827 = vunpack.c.l.b16 %v336
      %v828 = vunpack.c.l.b16 %v337
      %v829 = vunpack.c.l.b16 %v338
      %v830 = vunpack.c.l.b16 %v339
      %v831 = vunpack.c.l.b16 %v340
      %v832 = vunpack.c.l.b16 %v341
      %v833 = vunpack.c.l.b16 %v342
      %v834 = vunpack.c.l.b16 %v343
      %v835 = vpack.c.b16 %v708, %v707
      %v836 = vpack.c.b16 %v710, %v709
      %v837 = vpack.c.b16 %v712, %v711
      %v838 = vpack.c.b16 %v714, %v713
      %v839 = vpack.c.b16 %v716, %v715
      %v840 = vpack.c.b16 %v718, %v717
      %v841 = vpack.c.b16 %v720, %v719
      %v842 = vpack.c.b16 %v722, %v721
      %v843 = vpack.c.b16 %v724, %v723
      %v844 = vpack.c.b16 %v726, %v725
      %v845 = vpack.c.b16 %v728, %v727
      %v846 = vpack.c.b16 %v730, %v729
      %v847 = vpack.c.b16 %v732, %v731
      %v848 = vpack.c.b16 %v734, %v733
      %v849 = vpack.c.b16 %v736, %v735
      %v850 = vpack.c.b16 %v738, %v737
      %v851 = vpack.c.b16 %v740, %v739
      %v852 = vpack.c.b16 %v742, %v741
      %v853 = vpack.c.b16 %v744, %v743
      %v854 = vpack.c.b16 %v746, %v745
      %v855 = vpack.c.b16 %v748, %v747
      %v856 = vpack.c.b16 %v750, %v749
      %v857 = vpack.c.b16 %v752, %v751
      %v858 = vpack.c.b16 %v754, %v753
      %v859 = vpack.c.b16 %v756, %v755
      %v860 = vpack.c.b16 %v758, %v757
      %v861 = vpack.c.b16 %v760, %v759
      %v862 = vpack.c.b16 %v762, %v761
      %v863 = vpack.c.b16 %v764, %v763
      %v864 = vpack.c.b16 %v766, %v765
      %v865 = vpack.c.b16 %v768, %v767
      %v866 = vpack.c.b16 %v770, %v769
      %v867 = vpack.c.b16 %v772, %v771
      %v868 = vpack.c.b16 %v774, %v773
      %v869 = vpack.c.b16 %v776, %v775
      %v870 = vpack.c.b16 %v778, %v777
      %v871 = vpack.c.b16 %v780, %v779
      %v872 = vpack.c.b16 %v782, %v781
      %v873 = vpack.c.b16 %v784, %v783
      %v874 = vpack.c.b16 %v786, %v785
      %v875 = vpack.c.b16 %v788, %v787
      %v876 = vpack.c.b16 %v790, %v789
      %v877 = vpack.c.b16 %v792, %v791
      %v878 = vpack.c.b16 %v794, %v793
      %v879 = vpack.c.b16 %v796, %v795
      %v880 = vpack.c.b16 %v798, %v797
      %v881 = vpack.c.b16 %v800, %v799
      %v882 = vpack.c.b16 %v802, %v801
      %v883 = vpack.c.b16 %v804, %v803
      %v884 = vpack.c.b16 %v806, %v805
      %v885 = vpack.c.b16 %v808, %v807
      %v886 = vpack.c.b16 %v810, %v809
      %v887 = vpack.c.b16 %v812, %v811
      %v888 = vpack.c.b16 %v814, %v813
      %v889 = vpack.c.b16 %v816, %v815
      %v890 = vpack.c.b16 %v818, %v817
      %v891 = vpack.c.b16 %v820, %v819
      %v892 = vpack.c.b16 %v822, %v821
      %v893 = vpack.c.b16 %v824, %v823
      %v894 = vpack.c.b16 %v826, %v825
      %v895 = vpack.c.b16 %v828, %v827
      %v896 = vpack.c.b16 %v830, %v829
      %v897 = vpack.c.b16 %v832, %v831
      %v898 = vpack.c.b16 %v834, %v833
      %963 = vmatprep.subr.bf16.mxu0 0
      %964 = vmatpush1.bf16.msra.mxu0 %v835
      %965 = vmatprep.subr.bf16.mxu0 0
      %966 = vmatpush1.bf16.msra.mxu0 %v836
      %967 = vmatprep.subr.bf16.mxu0 0
      %968 = vmatpush1.bf16.msra.mxu0 %v837
      %969 = vmatprep.subr.bf16.mxu0 0
      %970 = vmatpush1.bf16.msra.mxu0 %v838
      %971 = vmatprep.subr.bf16.mxu0 0
      %972 = vmatpush1.bf16.msra.mxu0 %v839
      %973 = vmatprep.subr.bf16.mxu0 0
      %974 = vmatpush1.bf16.msra.mxu0 %v840
      %975 = vmatprep.subr.bf16.mxu0 0
      %976 = vmatpush1.bf16.msra.mxu0 %v841
      %977 = vmatprep.subr.bf16.mxu0 0
      %978 = vmatpush1.bf16.msra.mxu0 %v842
      %979 = vmatprep.subr.bf16.mxu0 0
      %980 = vmatpush1.bf16.msra.mxu0 %v843
      %981 = vmatprep.subr.bf16.mxu0 0
      %982 = vmatpush1.bf16.msra.mxu0 %v844
      %983 = vmatprep.subr.bf16.mxu0 0
      %984 = vmatpush1.bf16.msra.mxu0 %v845
      %985 = vmatprep.subr.bf16.mxu0 0
      %986 = vmatpush1.bf16.msra.mxu0 %v846
      %987 = vmatprep.subr.bf16.mxu0 0
      %988 = vmatpush1.bf16.msra.mxu0 %v847
      %989 = vmatprep.subr.bf16.mxu0 0
      %990 = vmatpush1.bf16.msra.mxu0 %v848
      %991 = vmatprep.subr.bf16.mxu0 0
      %992 = vmatpush1.bf16.msra.mxu0 %v849
      %993 = vmatprep.subr.bf16.mxu0 0
      %994 = vmatpush1.bf16.msra.mxu0 %v850
      %995 = vmatprep.mubr.bf16.mxu0 %v484
      %996 = vmatmul.mubr.bf16.gmra.mrb[0].mxu0 %v483
      %v997 = vpop.f32.mrb[0].mxu0
      %v998 = vadd.f32 %v349, %v997
      %v999 = vpop.f32.mrb[0].mxu0
      %v1000 = vpop.f32.mrb[0].mxu0
      %v1001 = vadd.f32 %v349, %v1000
      %v1002 = vpop.f32.mrb[0].mxu0
      %1003 = vmatprep.mubr.bf16.mxu0 %v492
      %1004 = vmatmul.mubr.bf16.gmra.mrb[0].mxu0 %v491
      %v1005 = vpop.f32.mrb[0].mxu0
      %v1006 = vadd.f32 %v349, %v1005
      %v1007 = vpop.f32.mrb[0].mxu0
      %v1008 = vpop.f32.mrb[0].mxu0
      %v1009 = vadd.f32 %v349, %v1008
      %v1010 = vpop.f32.mrb[0].mxu0
      %1011 = vmatprep.mubr.bf16.mxu0 %v500
      %1012 = vmatmul.mubr.bf16.gmra.mrb[0].mxu0 %v499
      %v1013 = vpop.f32.mrb[0].mxu0
      %v1014 = vadd.f32 %v349, %v1013
      %v1015 = vpop.f32.mrb[0].mxu0
      %v1016 = vpop.f32.mrb[0].mxu0
      %v1017 = vadd.f32 %v349, %v1016
      %v1018 = vpop.f32.mrb[0].mxu0
      %1019 = vmatprep.mubr.bf16.mxu0 %v508
      %1020 = vmatmul.mubr.bf16.gmra.mrb[0].mxu0 %v507
      %v1021 = vpop.f32.mrb[0].mxu0
      %v1022 = vadd.f32 %v349, %v1021
      %v1023 = vpop.f32.mrb[0].mxu0
      %v1024 = vpop.f32.mrb[0].mxu0
      %v1025 = vadd.f32 %v349, %v1024
      %v1026 = vpop.f32.mrb[0].mxu0
      %1027 = vmatprep.mubr.bf16.mxu0 %v516
      %1028 = vmatmul.mubr.bf16.gmra.mrb[0].mxu0 %v515
      %v1029 = vpop.f32.mrb[0].mxu0
      %v1030 = vadd.f32 %v349, %v1029
      %v1031 = vpop.f32.mrb[0].mxu0
      %v1032 = vpop.f32.mrb[0].mxu0
      %v1033 = vadd.f32 %v349, %v1032
      %v1034 = vpop.f32.mrb[0].mxu0
      %1035 = vmatprep.mubr.bf16.mxu0 %v524
      %1036 = vmatmul.mubr.bf16.gmra.mrb[0].mxu0 %v523
      %v1037 = vpop.f32.mrb[0].mxu0
      %v1038 = vadd.f32 %v349, %v1037
      %v1039 = vpop.f32.mrb[0].mxu0
      %v1040 = vpop.f32.mrb[0].mxu0
      %v1041 = vpop.f32.mrb[0].mxu0
      %1042 = vdwg.mxu0
      %1043 = vmatprep.subr.bf16.mxu0 0
      %1044 = vmatpush1.bf16.msra.mxu0 %v851
      %1045 = vmatprep.subr.bf16.mxu0 0
      %1046 = vmatpush1.bf16.msra.mxu0 %v852
      %1047 = vmatprep.subr.bf16.mxu0 0
      %1048 = vmatpush1.bf16.msra.mxu0 %v853
      %1049 = vmatprep.subr.bf16.mxu0 0
      %1050 = vmatpush1.bf16.msra.mxu0 %v854
      %1051 = vmatprep.subr.bf16.mxu0 0
      %1052 = vmatpush1.bf16.msra.mxu0 %v855
      %1053 = vmatprep.subr.bf16.mxu0 0
      %1054 = vmatpush1.bf16.msra.mxu0 %v856
      %1055 = vmatprep.subr.bf16.mxu0 0
      %1056 = vmatpush1.bf16.msra.mxu0 %v857
      %1057 = vmatprep.subr.bf16.mxu0 0
      %1058 = vmatpush1.bf16.msra.mxu0 %v858
      %1059 = vmatprep.subr.bf16.mxu0 0
      %1060 = vmatpush1.bf16.msra.mxu0 %v859
      %1061 = vmatprep.subr.bf16.mxu0 0
      %1062 = vmatpush1.bf16.msra.mxu0 %v860
      %1063 = vmatprep.subr.bf16.mxu0 0
      %1064 = vmatpush1.bf16.msra.mxu0 %v861
      %1065 = vmatprep.subr.bf16.mxu0 0
      %1066 = vmatpush1.bf16.msra.mxu0 %v862
      %1067 = vmatprep.subr.bf16.mxu0 0
      %1068 = vmatpush1.bf16.msra.mxu0 %v863
      %1069 = vmatprep.subr.bf16.mxu0 0
      %1070 = vmatpush1.bf16.msra.mxu0 %v864
      %1071 = vmatprep.subr.bf16.mxu0 0
      %1072 = vmatpush1.bf16.msra.mxu0 %v865
      %1073 = vmatprep.subr.bf16.mxu0 0
      %1074 = vmatpush1.bf16.msra.mxu0 %v866
      %1075 = vmatprep.mubr.bf16.mxu0 %v486
      %1076 = vmatmul.mubr.bf16.gmra.mrb[0].mxu0 %v485
      %v1077 = vpop.f32.mrb[0].mxu0
      %v1078 = vadd.f32 %v998, %v1077
      %v1079 = vpop.f32.mrb[0].mxu0
      %v1080 = vpop.f32.mrb[0].mxu0
      %v1081 = vadd.f32 %v1001, %v1080
      %v1082 = vpop.f32.mrb[0].mxu0
      %1083 = vmatprep.mubr.bf16.mxu0 %v494
      %1084 = vmatmul.mubr.bf16.gmra.mrb[0].mxu0 %v493
      %v1085 = vpop.f32.mrb[0].mxu0
      %v1086 = vadd.f32 %v1006, %v1085
      %v1087 = vpop.f32.mrb[0].mxu0
      %v1088 = vpop.f32.mrb[0].mxu0
      %v1089 = vadd.f32 %v1009, %v1088
      %v1090 = vpop.f32.mrb[0].mxu0
      %1091 = vmatprep.mubr.bf16.mxu0 %v502
      %1092 = vmatmul.mubr.bf16.gmra.mrb[0].mxu0 %v501
      %v1093 = vpop.f32.mrb[0].mxu0
      %v1094 = vadd.f32 %v1014, %v1093
      %v1095 = vpop.f32.mrb[0].mxu0
      %v1096 = vpop.f32.mrb[0].mxu0
      %v1097 = vadd.f32 %v1017, %v1096
      %v1098 = vpop.f32.mrb[0].mxu0
      %1099 = vmatprep.mubr.bf16.mxu0 %v510
      %1100 = vmatmul.mubr.bf16.gmra.mrb[0].mxu0 %v509
      %v1101 = vpop.f32.mrb[0].mxu0
      %v1102 = vadd.f32 %v1022, %v1101
      %v1103 = vpop.f32.mrb[0].mxu0
      %v1104 = vpop.f32.mrb[0].mxu0
      %v1105 = vadd.f32 %v1025, %v1104
      %v1106 = vpop.f32.mrb[0].mxu0
      %1107 = vmatprep.mubr.bf16.mxu0 %v518
      %1108 = vmatmul.mubr.bf16.gmra.mrb[0].mxu0 %v517
      %v1109 = vpop.f32.mrb[0].mxu0
      %v1110 = vadd.f32 %v1030, %v1109
      %v1111 = vpop.f32.mrb[0].mxu0
      %v1112 = vpop.f32.mrb[0].mxu0
      %v1113 = vadd.f32 %v1033, %v1112
      %v1114 = vpop.f32.mrb[0].mxu0
      %1115 = vmatprep.mubr.bf16.mxu0 %v526
      %1116 = vmatmul.mubr.bf16.gmra.mrb[0].mxu0 %v525
      %v1117 = vpop.f32.mrb[0].mxu0
      %v1118 = vadd.f32 %v1038, %v1117
      %v1119 = vpop.f32.mrb[0].mxu0
      %v1120 = vpop.f32.mrb[0].mxu0
      %v1121 = vpop.f32.mrb[0].mxu0
      %1122 = vdwg.mxu0
      %1123 = vmatprep.subr.bf16.mxu0 0
      %1124 = vmatpush1.bf16.msra.mxu0 %v867
      %1125 = vmatprep.subr.bf16.mxu0 0
      %1126 = vmatpush1.bf16.msra.mxu0 %v868
      %1127 = vmatprep.subr.bf16.mxu0 0
      %1128 = vmatpush1.bf16.msra.mxu0 %v869
      %1129 = vmatprep.subr.bf16.mxu0 0
      %1130 = vmatpush1.bf16.msra.mxu0 %v870
      %1131 = vmatprep.subr.bf16.mxu0 0
      %1132 = vmatpush1.bf16.msra.mxu0 %v871
      %1133 = vmatprep.subr.bf16.mxu0 0
      %1134 = vmatpush1.bf16.msra.mxu0 %v872
      %1135 = vmatprep.subr.bf16.mxu0 0
      %1136 = vmatpush1.bf16.msra.mxu0 %v873
      %1137 = vmatprep.subr.bf16.mxu0 0
      %1138 = vmatpush1.bf16.msra.mxu0 %v874
      %1139 = vmatprep.subr.bf16.mxu0 0
      %1140 = vmatpush1.bf16.msra.mxu0 %v875
      %1141 = vmatprep.subr.bf16.mxu0 0
      %1142 = vmatpush1.bf16.msra.mxu0 %v876
      %1143 = vmatprep.subr.bf16.mxu0 0
      %1144 = vmatpush1.bf16.msra.mxu0 %v877
      %1145 = vmatprep.subr.bf16.mxu0 0
      %1146 = vmatpush1.bf16.msra.mxu0 %v878
      %1147 = vmatprep.subr.bf16.mxu0 0
      %1148 = vmatpush1.bf16.msra.mxu0 %v879
      %1149 = vmatprep.subr.bf16.mxu0 0
      %1150 = vmatpush1.bf16.msra.mxu0 %v880
      %1151 = vmatprep.subr.bf16.mxu0 0
      %1152 = vmatpush1.bf16.msra.mxu0 %v881
      %1153 = vmatprep.subr.bf16.mxu0 0
      %1154 = vmatpush1.bf16.msra.mxu0 %v882
      %1155 = vmatprep.mubr.bf16.mxu0 %v488
      %1156 = vmatmul.mubr.bf16.gmra.mrb[0].mxu0 %v487
      %v1157 = vpop.f32.mrb[0].mxu0
      %v1158 = vadd.f32 %v1078, %v1157
      %v1159 = vpop.f32.mrb[0].mxu0
      %v1160 = vpop.f32.mrb[0].mxu0
      %v1161 = vadd.f32 %v1081, %v1160
      %v1162 = vpop.f32.mrb[0].mxu0
      %1163 = vmatprep.mubr.bf16.mxu0 %v496
      %1164 = vmatmul.mubr.bf16.gmra.mrb[0].mxu0 %v495
      %v1165 = vpop.f32.mrb[0].mxu0
      %v1166 = vadd.f32 %v1086, %v1165
      %v1167 = vpop.f32.mrb[0].mxu0
      %v1168 = vpop.f32.mrb[0].mxu0
      %v1169 = vadd.f32 %v1089, %v1168
      %v1170 = vpop.f32.mrb[0].mxu0
      %1171 = vmatprep.mubr.bf16.mxu0 %v504
      %1172 = vmatmul.mubr.bf16.gmra.mrb[0].mxu0 %v503
      %v1173 = vpop.f32.mrb[0].mxu0
      %v1174 = vadd.f32 %v1094, %v1173
      %v1175 = vpop.f32.mrb[0].mxu0
      %v1176 = vpop.f32.mrb[0].mxu0
      %v1177 = vadd.f32 %v1097, %v1176
      %v1178 = vpop.f32.mrb[0].mxu0
      %1179 = vmatprep.mubr.bf16.mxu0 %v512
      %1180 = vmatmul.mubr.bf16.gmra.mrb[0].mxu0 %v511
      %v1181 = vpop.f32.mrb[0].mxu0
      %v1182 = vadd.f32 %v1102, %v1181
      %v1183 = vpop.f32.mrb[0].mxu0
      %v1184 = vpop.f32.mrb[0].mxu0
      %v1185 = vadd.f32 %v1105, %v1184
      %v1186 = vpop.f32.mrb[0].mxu0
      %1187 = vmatprep.mubr.bf16.mxu0 %v520
      %1188 = vmatmul.mubr.bf16.gmra.mrb[0].mxu0 %v519
      %v1189 = vpop.f32.mrb[0].mxu0
      %v1190 = vadd.f32 %v1110, %v1189
      %v1191 = vpop.f32.mrb[0].mxu0
      %v1192 = vpop.f32.mrb[0].mxu0
      %v1193 = vadd.f32 %v1113, %v1192
      %v1194 = vpop.f32.mrb[0].mxu0
      %1195 = vmatprep.mubr.bf16.mxu0 %v528
      %1196 = vmatmul.mubr.bf16.gmra.mrb[0].mxu0 %v527
      %v1197 = vpop.f32.mrb[0].mxu0
      %v1198 = vadd.f32 %v1118, %v1197
      %v1199 = vpop.f32.mrb[0].mxu0
      %v1200 = vpop.f32.mrb[0].mxu0
      %v1201 = vpop.f32.mrb[0].mxu0
      %1202 = vdwg.mxu0
      %1203 = vmatprep.subr.bf16.mxu0 0
      %1204 = vmatpush1.bf16.msra.mxu0 %v883
      %1205 = vmatprep.subr.bf16.mxu0 0
      %1206 = vmatpush1.bf16.msra.mxu0 %v884
      %1207 = vmatprep.subr.bf16.mxu0 0
      %1208 = vmatpush1.bf16.msra.mxu0 %v885
      %1209 = vmatprep.subr.bf16.mxu0 0
      %1210 = vmatpush1.bf16.msra.mxu0 %v886
      %1211 = vmatprep.subr.bf16.mxu0 0
      %1212 = vmatpush1.bf16.msra.mxu0 %v887
      %1213 = vmatprep.subr.bf16.mxu0 0
      %1214 = vmatpush1.bf16.msra.mxu0 %v888
      %1215 = vmatprep.subr.bf16.mxu0 0
      %1216 = vmatpush1.bf16.msra.mxu0 %v889
      %1217 = vmatprep.subr.bf16.mxu0 0
      %1218 = vmatpush1.bf16.msra.mxu0 %v890
      %1219 = vmatprep.subr.bf16.mxu0 0
      %1220 = vmatpush1.bf16.msra.mxu0 %v891
      %1221 = vmatprep.subr.bf16.mxu0 0
      %1222 = vmatpush1.bf16.msra.mxu0 %v892
      %1223 = vmatprep.subr.bf16.mxu0 0
      %1224 = vmatpush1.bf16.msra.mxu0 %v893
      %1225 = vmatprep.subr.bf16.mxu0 0
      %1226 = vmatpush1.bf16.msra.mxu0 %v894
      %1227 = vmatprep.subr.bf16.mxu0 0
      %1228 = vmatpush1.bf16.msra.mxu0 %v895
      %1229 = vmatprep.subr.bf16.mxu0 0
      %1230 = vmatpush1.bf16.msra.mxu0 %v896
      %1231 = vmatprep.subr.bf16.mxu0 0
      %1232 = vmatpush1.bf16.msra.mxu0 %v897
      %1233 = vmatprep.subr.bf16.mxu0 0
      %1234 = vmatpush1.bf16.msra.mxu0 %v898
      %1235 = vmatprep.mubr.bf16.mxu0 %v490
      %1236 = vmatmul.mubr.bf16.gmra.mrb[0].mxu0 %v489
      %v1237 = vpop.f32.mrb[0].mxu0
      %v1238 = vadd.f32 %v1158, %v1237
      %v1239 = vpop.f32.mrb[0].mxu0
      %v1240 = vpop.f32.mrb[0].mxu0
      %v1241 = vadd.f32 %v1161, %v1240
      %v1242 = vpop.f32.mrb[0].mxu0
      %1243 = vmatprep.mubr.bf16.mxu0 %v498
      %1244 = vmatmul.mubr.bf16.gmra.mrb[0].mxu0 %v497
      %v1245 = vpop.f32.mrb[0].mxu0
      %v1246 = vadd.f32 %v1166, %v1245
      %v1247 = vpop.f32.mrb[0].mxu0
      %v1248 = vpop.f32.mrb[0].mxu0
      %v1249 = vadd.f32 %v1169, %v1248
      %v1250 = vpop.f32.mrb[0].mxu0
      %1251 = vmatprep.mubr.bf16.mxu0 %v506
      %1252 = vmatmul.mubr.bf16.gmra.mrb[0].mxu0 %v505
      %v1253 = vpop.f32.mrb[0].mxu0
      %v1254 = vadd.f32 %v1174, %v1253
      %v1255 = vpop.f32.mrb[0].mxu0
      %v1256 = vpop.f32.mrb[0].mxu0
      %v1257 = vadd.f32 %v1177, %v1256
      %v1258 = vpop.f32.mrb[0].mxu0
      %1259 = vmatprep.mubr.bf16.mxu0 %v514
      %1260 = vmatmul.mubr.bf16.gmra.mrb[0].mxu0 %v513
      %v1261 = vpop.f32.mrb[0].mxu0
      %v1262 = vadd.f32 %v1182, %v1261
      %v1263 = vpop.f32.mrb[0].mxu0
      %v1264 = vpop.f32.mrb[0].mxu0
      %v1265 = vadd.f32 %v1185, %v1264
      %v1266 = vpop.f32.mrb[0].mxu0
      %1267 = vmatprep.mubr.bf16.mxu0 %v522
      %1268 = vmatmul.mubr.bf16.gmra.mrb[0].mxu0 %v521
      %v1269 = vpop.f32.mrb[0].mxu0
      %v1270 = vadd.f32 %v1190, %v1269
      %v1271 = vpop.f32.mrb[0].mxu0
      %v1272 = vpop.f32.mrb[0].mxu0
      %v1273 = vadd.f32 %v1193, %v1272
      %v1274 = vpop.f32.mrb[0].mxu0
      %1275 = vmatprep.mubr.bf16.mxu0 %v530
      %1276 = vmatmul.mubr.bf16.gmra.mrb[0].mxu0 %v529
      %v1277 = vpop.f32.mrb[0].mxu0
      %v1278 = vadd.f32 %v1198, %v1277
      %v1279 = vpop.f32.mrb[0].mxu0
      %v1280 = vpop.f32.mrb[0].mxu0
      %v1281 = vpop.f32.mrb[0].mxu0
      %1282 = vdwg.mxu0
      %v1283 = vmax.f32 %v1238, 0.0
      %v1284 = vmax.f32 %v1241, 0.0
      %v1285 = vmax.f32 %v1246, 0.0
      %v1286 = vmax.f32 %v1249, 0.0
      %v1287 = vmax.f32 %v1254, 0.0
      %v1288 = vmax.f32 %v1257, 0.0
      %v1289 = vmax.f32 %v1262, 0.0
      %v1290 = vmax.f32 %v1265, 0.0
      %v1291 = vmax.f32 %v1270, 0.0
      %v1292 = vmax.f32 %v1273, 0.0
      %v1293 = vmax.f32 %v1278, 0.0
      %v1294 = vpack.c.bf16 %v1284, %v1283
      %v1295 = vpack.c.bf16 %v1286, %v1285
      %v1296 = vpack.c.bf16 %v1288, %v1287
      %v1297 = vpack.c.bf16 %v1290, %v1289
      %v1298 = vpack.c.bf16 %v1292, %v1291
      %v1299 = vpack.c.bf16 %v1293, %v1293
      %v1306 = vunpack.c.l.b16 %v1294
      %v1307 = vunpack.c.h.b16 %v1294
      %v1308 = vunpack.c.l.b16 %v1295
      %v1309 = vunpack.c.h.b16 %v1295
      %v1310 = vunpack.c.l.b16 %v1296
      %v1311 = vunpack.c.h.b16 %v1296
      %v1312 = vunpack.c.l.b16 %v1297
      %v1313 = vunpack.c.h.b16 %v1297
      %v1314 = vunpack.c.l.b16 %v1298
      %v1315 = vunpack.c.h.b16 %v1298
      %v1316 = vunpack.c.l.b16 %v1299
      %v1317 = vpack.c.b16 %v1306, %v1306
      %v1318 = vpack.c.b16 %v1307, %v1307
      %v1319 = vpack.c.b16 %v1308, %v1308
      %v1320 = vpack.c.b16 %v1309, %v1309
      %v1321 = vpack.c.b16 %v1310, %v1310
      %v1322 = vpack.c.b16 %v1311, %v1311
      %v1323 = vpack.c.b16 %v1312, %v1312
      %v1324 = vpack.c.b16 %v1313, %v1313
      %v1325 = vpack.c.b16 %v1314, %v1314
      %v1326 = vpack.c.b16 %v1315, %v1315
      %v1327 = vpack.c.b16 %v1316, %v1316
      %vm1339 = vcmask 519168
      %1340 = vst.msk [vmem:[%s170] sm:$0xf] %vm1339, %v1317
      %1341 = vst.msk [vmem:[%s170 + $0x4] sm:$0xf] %vm1339, %v1318
      %1342 = vst.msk [vmem:[%s170 + $0x8] sm:$0xf] %vm1339, %v1319
      %1343 = vst.msk [vmem:[%s170 + $0xc] sm:$0xf] %vm1339, %v1320
      %1344 = vst.msk [vmem:[%s170 + $0x10] sm:$0xf] %vm1339, %v1321
      %1345 = vst.msk [vmem:[%s170 + $0x14] sm:$0xf] %vm1339, %v1322
      %1346 = vst.msk [vmem:[%s170 + $0x18] sm:$0xf] %vm1339, %v1323
      %1347 = vst.msk [vmem:[%s170 + $0x1c] sm:$0xf] %vm1339, %v1324
      %1348 = vst.msk [vmem:[%s170 + $0x20] sm:$0xf] %vm1339, %v1325
      %1349 = vst.msk [vmem:[%s170 + $0x24] sm:$0xf] %vm1339, %v1326
      %vm1350 = vcmask 516096
      %vm1351 = vsmask.f32 256
      %vm1352 = vmand %vm1350, %vm1351
      %v1353 = vld [vmem:[%s170 + $0x28] sm:$0x1]
      %v1354 = vsel %vm1352, %v1327, %v1353
      %1355 = vst [vmem:[%s170 + $0x28] sm:$0x1] %v1354
      %p1356 = scmp.lt.s32.totalorder %s14, 1
      %s1357 = scalar_select %p1356, %s14, 1
      %s1358 = smul.addr %s1357, 11
      %s1359 = smul.addr %s1358, 4
      %s1360 = scalar_lea.vmem %s3, %s1359
      // Predicated region
      $region33: #{net_forward.5} parent=31 // pred_check
        %p1361 = pneg %p100
      $region34: #{net_forward.5} parent=31 // pred_check_branch
        %1363 = sbr.rel (%p1361) target = $region36
      $region35: #{net_forward.5} parent=31 // pred_region
        _
      $region36: #{net_forward.5} parent=31 // pred_fallthru
        _
    $region32: #{net_forward.5} parent=5 // pred_fallthru
      _
    %p1364 = scmp.le.s32.totalorder 2, %s9
    // Predicated region
    $region37: #{net_forward.5} parent=5 // pred_check
      %p1365 = pneg %p1364
    $region38: #{net_forward.5} parent=5 // pred_check_branch
      %1367 = sbr.rel (%p1365) target = $region40
    $region39: #{net_forward.5} parent=5 // pred_region
      %s1368 = ssub.s32 %s9, 2
      // Predicated region
      $region41: #{net_forward.5} parent=39 // pred_check
        %p1369 = pneg %p106
      $region42: #{net_forward.5} parent=39 // pred_check_branch
        %1371 = sbr.rel (%p1369) target = $region44
      $region43: #{net_forward.5} parent=39 // pred_region
        %p1372 = scmp.lt.s32.totalorder %s15, 1
        %s1373 = scalar_select %p1372, %s15, 1
        %s1374 = smul.addr %s1373, 11
        %s1375 = smul.addr %s1374, 4
        %s1376 = scalar_lea.vmem %s3, %s1375
      $region44: #{net_forward.5} parent=39 // pred_fallthru
        _
    $region40: #{net_forward.5} parent=5 // pred_fallthru
      _
  $region6: #{net_forward.5} parent=0 // loop_footer
    %s13 = sadd.s32 1, %s9
  $region7: #{net_forward.5} parent=0 // loop_footer_branch
    %8 = sbr.rel target = $region3
  $region8: #{net_forward.5} parent=0 // loop_exit
    _

// kernel: net_forward.6
$region0: #{net_forward.6}
  #allocation0 [shape = 'u32[]', space=smem, size = 0x4, offset = 0x4, fixed_abs, tag = 'smem constant byte address 0x4 - core index']
  #allocation1 [shape = 'u32[144,128]{1,0:T(1,128)}', space=vmem, size = 0x12000, scoped, tag = 'internal scratch']
  %s0 = inlined_call_operand.vmem [shape: bf16[2,49,576], index: 0, kind: input, shape index: {}]
  %s1 = inlined_call_operand.vmem [shape: bf16[576,64], index: 1, kind: input, shape index: {}]
  %s2 = inlined_call_operand.vmem [shape: f32[1,64], index: 2, kind: input, shape index: {}]
  %s3 = inlined_call_operand.vmem [shape: bf16[2,49,64], index: 3, kind: output, shape index: {}]
  %s4 = sld [smem:[#allocation0]]
  $region45: #{net_forward.6} parent=0
    _
  %s6 = ssub.s32 1, %s4
  %s7 = scalar_select 0, %s6, %s4
  loop: start=0, step=1, limit=4
  $region2: #{net_forward.6} parent=0 // loop_pre_header
    _
  $region3: #{net_forward.6} parent=0 // loop_header
    %s9 = sphi 0, %s13
    %p10 = scmp.ge.s32.totalorder %s9, 4
    %s19 = sphi 0, %s21
    %s22 = sphi 0, %s19
    %s23 = sphi 0, %s22
    %s39 = sphi 0, %s23
    %s43 = sphi 0, %s43
    %s45 = sphi 0, %s43
    %s46 = sphi 0, %s45
    %s60 = sphi 0, %s46
    %s64 = sphi 0, %s64
    %s66 = sphi 0, %s64
    %s67 = sphi 0, %s66
    %s81 = sphi 0, %s67
    %s87 = sphi 0, %s89
    %s90 = sphi 0, %s87
    %s91 = sphi 0, %s90
    %s107 = sphi 0, %s91
  $region4: #{net_forward.6} parent=0 // loop_header_branch
    %12 = sbr.rel (%p10) target = $region8
  $region5: #{net_forward.6} parent=0 // loop_body
    %s14 = ssub.s32 %s9, 1
    %s15 = ssub.s32 %s9, 2
    %s16 = sadd.s32 %s9, 1
    %s17 = ssub.s32 %s9, %s16
    %p18 = scmp.eq.s32.totalorder %s17, 0
    %s20 = sadd.s32 %s19, 1
    %s21 = scalar_select %p18, %s19, %s20
    %p24 = pneg %p18
    %p25 = scmp.eq.s32.totalorder %s9, 1
    %p26 = por %p24, %p25
    %p27 = scmp.ne.s32.totalorder %s19, %s22
    %p28 = scmp.eq.s32.totalorder %s9, 0
    %p29 = por %p27, %p28
    %p30 = scmp.ne.s32.totalorder %s19, %s22
    %p31 = scmp.eq.s32.totalorder %s14, 1
    %p32 = por %p30, %p31
    %p33 = scmp.ne.s32.totalorder %s22, %s23
    %p34 = scmp.eq.s32.totalorder %s14, 0
    %p35 = por %p33, %p34
    %p36 = scmp.ne.s32.totalorder %s22, %s23
    %p37 = scmp.eq.s32.totalorder %s15, 1
    %p38 = por %p36, %p37
    %p40 = scmp.ne.s32.totalorder %s23, %s39
    %p41 = scmp.eq.s32.totalorder %s15, 0
    %p42 = por %p40, %p41
    %s44 = sadd.s32 %s43, 1
    %p47 = scmp.eq.s32.totalorder %s9, 1
    %p48 = scmp.ne.s32.totalorder %s43, %s45
    %p49 = scmp.eq.s32.totalorder %s9, 0
    %p50 = por %p48, %p49
    %p51 = scmp.ne.s32.totalorder %s43, %s45
    %p52 = scmp.eq.s32.totalorder %s14, 1
    %p53 = por %p51, %p52
    %p54 = scmp.ne.s32.totalorder %s45, %s46
    %p55 = scmp.eq.s32.totalorder %s14, 0
    %p56 = por %p54, %p55
    %p57 = scmp.ne.s32.totalorder %s45, %s46
    %p58 = scmp.eq.s32.totalorder %s15, 1
    %p59 = por %p57, %p58
    %p61 = scmp.ne.s32.totalorder %s46, %s60
    %p62 = scmp.eq.s32.totalorder %s15, 0
    %p63 = por %p61, %p62
    %s65 = sadd.s32 %s64, 1
    %p68 = scmp.eq.s32.totalorder %s9, 1
    %p69 = scmp.ne.s32.totalorder %s64, %s66
    %p70 = scmp.eq.s32.totalorder %s9, 0
    %p71 = por %p69, %p70
    %p72 = scmp.ne.s32.totalorder %s64, %s66
    %p73 = scmp.eq.s32.totalorder %s14, 1
    %p74 = por %p72, %p73
    %p75 = scmp.ne.s32.totalorder %s66, %s67
    %p76 = scmp.eq.s32.totalorder %s14, 0
    %p77 = por %p75, %p76
    %p78 = scmp.ne.s32.totalorder %s66, %s67
    %p79 = scmp.eq.s32.totalorder %s15, 1
    %p80 = por %p78, %p79
    %p82 = scmp.ne.s32.totalorder %s67, %s81
    %p83 = scmp.eq.s32.totalorder %s15, 0
    %p84 = por %p82, %p83
    %s85 = ssub.s32 %s9, %s16
    %p86 = scmp.eq.s32.totalorder %s85, 0
    %s88 = sadd.s32 %s87, 1
    %s89 = scalar_select %p86, %s87, %s88
    %p92 = pneg %p86
    %p93 = scmp.eq.s32.totalorder %s9, 1
    %p94 = por %p92, %p93
    %p95 = scmp.ne.s32.totalorder %s87, %s90
    %p96 = scmp.eq.s32.totalorder %s9, 0
    %p97 = por %p95, %p96
    %p98 = scmp.ne.s32.totalorder %s87, %s90
    %p99 = scmp.eq.s32.totalorder %s14, 1
    %p100 = por %p98, %p99
    %p101 = scmp.ne.s32.totalorder %s90, %s91
    %p102 = scmp.eq.s32.totalorder %s14, 0
    %p103 = por %p101, %p102
    %p104 = scmp.ne.s32.totalorder %s90, %s91
    %p105 = scmp.eq.s32.totalorder %s15, 1
    %p106 = por %p104, %p105
    %p108 = scmp.ne.s32.totalorder %s91, %s107
    %p109 = scmp.eq.s32.totalorder %s15, 0
    %p110 = por %p108, %p109
    %p111 = scmp.le.s32.totalorder 1, %s9
    %p112 = scmp.lt.s32.totalorder %s9, 3
    %p113 = pnand %p111, %p112
    %p114 = pneg %p113
    // Predicated region
    $region9: #{net_forward.6} parent=5 // pred_check
      _
    $region10: #{net_forward.6} parent=5 // pred_check_branch
      %116 = sbr.rel (%p113) target = $region12
    $region11: #{net_forward.6} parent=5 // pred_region
      %s117 = ssub.s32 %s9, 1
      // Predicated region
      $region13: #{net_forward.6} parent=11 // pred_check
        %p118 = pneg %p56
      $region14: #{net_forward.6} parent=11 // pred_check_branch
        %120 = sbr.rel (%p118) target = $region16
      $region15: #{net_forward.6} parent=11 // pred_region
        _
      $region16: #{net_forward.6} parent=11 // pred_fallthru
        _
      // Predicated region
      $region17: #{net_forward.6} parent=11 // pred_check
        %p121 = pneg %p77
      $region18: #{net_forward.6} parent=11 // pred_check_branch
        %123 = sbr.rel (%p121) target = $region20
      $region19: #{net_forward.6} parent=11 // pred_region
        _
      $region20: #{net_forward.6} parent=11 // pred_fallthru
        _
    $region12: #{net_forward.6} parent=5 // pred_fallthru
      _
    %p124 = scmp.lt.s32.totalorder %s9, 2
    // Predicated region
    $region21: #{net_forward.6} parent=5 // pred_check
      %p125 = pneg %p124
    $region22: #{net_forward.6} parent=5 // pred_check_branch
      %127 = sbr.rel (%p125) target = $region24
    $region23: #{net_forward.6} parent=5 // pred_region
      // Predicated region
      $region25: #{net_forward.6} parent=23 // pred_check
        %p128 = pneg %p29
      $region26: #{net_forward.6} parent=23 // pred_check_branch
        %130 = sbr.rel (%p128) target = $region28
      $region27: #{net_forward.6} parent=23 // pred_region
        %p131 = scmp.lt.s32.totalorder %s9, 1
        %s132 = scalar_select %p131, %s9, 1
        %s133 = smul.addr %s132, 35
        %s134 = smul.addr %s133, 4
        %s135 = scalar_lea.vmem %s0, %s134
      $region28: #{net_forward.6} parent=23 // pred_fallthru
        _
    $region24: #{net_forward.6} parent=5 // pred_fallthru
      _
    %p136 = scmp.le.s32.totalorder 1, %s9
    %p137 = scmp.lt.s32.totalorder %s9, 3
    %p138 = pnand %p136, %p137
    %p139 = pneg %p138
    // Predicated region
    $region29: #{net_forward.6} parent=5 // pred_check
      _
    $region30: #{net_forward.6} parent=5 // pred_check_branch
      %141 = sbr.rel (%p138) target = $region32
    $region31: #{net_forward.6} parent=5 // pred_region
      %s142 = ssub.s32 %s9, 1
      %p143 = scmp.lt.s32.totalorder %s14, 1
      %s144 = scalar_select %p143, %s14, 1
      %s145 = smul.addr %s144, 35
      %s146 = smul.addr %s145, 4
      %s147 = scalar_lea.vmem %s0, %s146
      %p148 = pneg %p35
      %p149 = pneg %p32
      %p150 = pneg %p56
      %p151 = pneg %p53
      %p152 = pneg %p77
      %p153 = pneg %p74
      %p154 = pneg %p103
      %p155 = pneg %p100
      %p156 = scmp.lt.s32.totalorder %s14, 1
      %s157 = scalar_select %p156, %s14, 1
      %s158 = smul.addr %s157, 7
      %s159 = smul.addr %s158, 4
      %s160 = scalar_lea.vmem %s3, %s159
      %p161 = scmp.lt.s32.totalorder %s14, 1
      %s162 = scalar_select %p161, %s14, 1
      %s163 = smul.addr %s162, 35
      %s164 = smul.addr %s163, 4
      %s165 = scalar_lea.vmem %s0, %s164
      %p166 = scmp.lt.s32.totalorder %s14, 1
      %s167 = scalar_select %p166, %s14, 1
      %s168 = smul.addr %s167, 7
      %s169 = smul.addr %s168, 4
      %s170 = scalar_lea.vmem %s3, %s169
      %v172 = vld [vmem:[%s165] sm:$0xff]
      %v173 = vld [vmem:[%s165 + $0x8] sm:$0xff]
      %v174 = vld [vmem:[%s165 + $0x10] sm:$0xf]
      %v175 = vld [vmem:[%s165 + $0x14] sm:$0xff]
      %v176 = vld [vmem:[%s165 + $0x1c] sm:$0xff]
      %v177 = vld [vmem:[%s165 + $0x24] sm:$0xf]
      %v178 = vld [vmem:[%s165 + $0x28] sm:$0xff]
      %v179 = vld [vmem:[%s165 + $0x30] sm:$0xff]
      %v180 = vld [vmem:[%s165 + $0x38] sm:$0xf]
      %v181 = vld [vmem:[%s165 + $0x3c] sm:$0xff]
      %v182 = vld [vmem:[%s165 + $0x44] sm:$0xff]
      %v183 = vld [vmem:[%s165 + $0x4c] sm:$0xf]
      %v184 = vld [vmem:[%s165 + $0x50] sm:$0xff]
      %v185 = vld [vmem:[%s165 + $0x58] sm:$0xff]
      %v186 = vld [vmem:[%s165 + $0x60] sm:$0xf]
      %v187 = vld [vmem:[%s165 + $0x64] sm:$0xff]
      %v188 = vld [vmem:[%s165 + $0x6c] sm:$0xff]
      %v189 = vld [vmem:[%s165 + $0x74] sm:$0xf]
      %v190 = vld [vmem:[%s165 + $0x78] sm:$0x11]
      %v191 = vld [vmem:[%s165 + $0x80] sm:$0x11]
      %v192 = vld [vmem:[%s165 + $0x88] sm:$0x1]
      %v193 = vld [vmem:[%s1] sm:$0xf]
      %v194 = vld [vmem:[%s1 + $0x4] sm:$0xf]
      %v195 = vld [vmem:[%s1 + $0x8] sm:$0xf]
      %v196 = vld [vmem:[%s1 + $0xc] sm:$0xf]
      %v197 = vld [vmem:[%s1 + $0x10] sm:$0xf]
      %v198 = vld [vmem:[%s1 + $0x14] sm:$0xf]
      %v199 = vld [vmem:[%s1 + $0x18] sm:$0xf]
      %v200 = vld [vmem:[%s1 + $0x1c] sm:$0xf]
      %v201 = vld [vmem:[%s1 + $0x20] sm:$0xf]
      %v202 = vld [vmem:[%s1 + $0x24] sm:$0xf]
      %v203 = vld [vmem:[%s1 + $0x28] sm:$0xf]
      %v204 = vld [vmem:[%s1 + $0x2c] sm:$0xf]
      %v205 = vld [vmem:[%s1 + $0x30] sm:$0xf]
      %v206 = vld [vmem:[%s1 + $0x34] sm:$0xf]
      %v207 = vld [vmem:[%s1 + $0x38] sm:$0xf]
      %v208 = vld [vmem:[%s1 + $0x3c] sm:$0xf]
      %v209 = vld [vmem:[%s1 + $0x40] sm:$0xf]
      %v210 = vld [vmem:[%s1 + $0x44] sm:$0xf]
      %v211 = vld [vmem:[%s1 + $0x48] sm:$0xf]
      %v212 = vld [vmem:[%s1 + $0x4c] sm:$0xf]
      %v213 = vld [vmem:[%s1 + $0x50] sm:$0xf]
      %v214 = vld [vmem:[%s1 + $0x54] sm:$0xf]
      %v215 = vld [vmem:[%s1 + $0x58] sm:$0xf]
      %v216 = vld [vmem:[%s1 + $0x5c] sm:$0xf]
      %v217 = vld [vmem:[%s1 + $0x60] sm:$0xf]
      %v218 = vld [vmem:[%s1 + $0x64] sm:$0xf]
      %v219 = vld [vmem:[%s1 + $0x68] sm:$0xf]
      %v220 = vld [vmem:[%s1 + $0x6c] sm:$0xf]
      %v221 = vld [vmem:[%s1 + $0x70] sm:$0xf]
      %v222 = vld [vmem:[%s1 + $0x74] sm:$0xf]
      %v223 = vld [vmem:[%s1 + $0x78] sm:$0xf]
      %v224 = vld [vmem:[%s1 + $0x7c] sm:$0xf]
      %v225 = vld [vmem:[%s1 + $0x80] sm:$0xf]
      %v226 = vld [vmem:[%s1 + $0x84] sm:$0xf]
      %v227 = vld [vmem:[%s1 + $0x88] sm:$0xf]
      %v228 = vld [vmem:[%s1 + $0x8c] sm:$0xf]
      %v229 = vld [vmem:[%s1 + $0x90] sm:$0xf]
      %v230 = vld [vmem:[%s1 + $0x94] sm:$0xf]
      %v231 = vld [vmem:[%s1 + $0x98] sm:$0xf]
      %v232 = vld [vmem:[%s1 + $0x9c] sm:$0xf]
      %v233 = vld [vmem:[%s1 + $0xa0] sm:$0xf]
      %v234 = vld [vmem:[%s1 + $0xa4] sm:$0xf]
      %v235 = vld [vmem:[%s1 + $0xa8] sm:$0xf]
      %v236 = vld [vmem:[%s1 + $0xac] sm:$0xf]
      %v237 = vld [vmem:[%s1 + $0xb0] sm:$0xf]
      %v238 = vld [vmem:[%s1 + $0xb4] sm:$0xf]
      %v239 = vld [vmem:[%s1 + $0xb8] sm:$0xf]
      %v240 = vld [vmem:[%s1 + $0xbc] sm:$0xf]
      %v241 = vld [vmem:[%s1 + $0xc0] sm:$0xf]
      %v242 = vld [vmem:[%s1 + $0xc4] sm:$0xf]
      %v243 = vld [vmem:[%s1 + $0xc8] sm:$0xf]
      %v244 = vld [vmem:[%s1 + $0xcc] sm:$0xf]
      %v245 = vld [vmem:[%s1 + $0xd0] sm:$0xf]
      %v246 = vld [vmem:[%s1 + $0xd4] sm:$0xf]
      %v247 = vld [vmem:[%s1 + $0xd8] sm:$0xf]
      %v248 = vld [vmem:[%s1 + $0xdc] sm:$0xf]
      %v249 = vld [vmem:[%s1 + $0xe0] sm:$0xf]
      %v250 = vld [vmem:[%s1 + $0xe4] sm:$0xf]
      %v251 = vld [vmem:[%s1 + $0xe8] sm:$0xf]
      %v252 = vld [vmem:[%s1 + $0xec] sm:$0xf]
      %v253 = vld [vmem:[%s1 + $0xf0] sm:$0xf]
      %v254 = vld [vmem:[%s1 + $0xf4] sm:$0xf]
      %v255 = vld [vmem:[%s1 + $0xf8] sm:$0xf]
      %v256 = vld [vmem:[%s1 + $0xfc] sm:$0xf]
      %v257 = vld [vmem:[%s1 + $0x100] sm:$0xf]
      %v258 = vld [vmem:[%s1 + $0x104] sm:$0xf]
      %v259 = vld [vmem:[%s1 + $0x108] sm:$0xf]
      %v260 = vld [vmem:[%s1 + $0x10c] sm:$0xf]
      %v261 = vld [vmem:[%s1 + $0x110] sm:$0xf]
      %v262 = vld [vmem:[%s1 + $0x114] sm:$0xf]
      %v263 = vld [vmem:[%s1 + $0x118] sm:$0xf]
      %v264 = vld [vmem:[%s1 + $0x11c] sm:$0xf]
      %v265 = vld [vmem:[%s2] sm:$0x1]
      %v267 = vlaneseq
      %v268 = vshrl.u32 %v267, 7
      %v269 = vsub.s32 0, %v268
      %v270 = vrot.slane %v265, %v269
      %v293 = vunpack.c.l.b16 %v172
      %v294 = vunpack.c.h.b16 %v172
      %v295 = vunpack.c.l.b16 %v173
      %v296 = vunpack.c.h.b16 %v173
      %v297 = vunpack.c.l.b16 %v174
      %v298 = vunpack.c.l.b16 %v175
      %v299 = vunpack.c.h.b16 %v175
      %v300 = vunpack.c.l.b16 %v176
      %v301 = vunpack.c.h.b16 %v176
      %v302 = vunpack.c.l.b16 %v177
      %v303 = vunpack.c.l.b16 %v178
      %v304 = vunpack.c.h.b16 %v178
      %v305 = vunpack.c.l.b16 %v179
      %v306 = vunpack.c.h.b16 %v179
      %v307 = vunpack.c.l.b16 %v180
      %v308 = vunpack.c.l.b16 %v181
      %v309 = vunpack.c.h.b16 %v181
      %v310 = vunpack.c.l.b16 %v182
      %v311 = vunpack.c.h.b16 %v182
      %v312 = vunpack.c.l.b16 %v183
      %v313 = vunpack.c.l.b16 %v184
      %v314 = vunpack.c.h.b16 %v184
      %v315 = vunpack.c.l.b16 %v185
      %v316 = vunpack.c.h.b16 %v185
      %v317 = vunpack.c.l.b16 %v186
      %v318 = vunpack.c.l.b16 %v187
      %v319 = vunpack.c.h.b16 %v187
      %v320 = vunpack.c.l.b16 %v188
      %v321 = vunpack.c.h.b16 %v188
      %v322 = vunpack.c.l.b16 %v189
      %v323 = vunpack.c.l.b16 %v190
      %v324 = vunpack.c.h.b16 %v190
      %v325 = vunpack.c.l.b16 %v191
      %v326 = vunpack.c.h.b16 %v191
      %v327 = vunpack.c.l.b16 %v192
      %v328 = vpack.c.b16 %v298, %v293
      %v329 = vpack.c.b16 %v299, %v294
      %v330 = vpack.c.b16 %v300, %v295
      %v331 = vpack.c.b16 %v301, %v296
      %v332 = vpack.c.b16 %v302, %v297
      %v333 = vpack.c.b16 %v308, %v303
      %v334 = vpack.c.b16 %v309, %v304
      %v335 = vpack.c.b16 %v310, %v305
      %v336 = vpack.c.b16 %v311, %v306
      %v337 = vpack.c.b16 %v312, %v307
      %v338 = vpack.c.b16 %v318, %v313
      %v339 = vpack.c.b16 %v319, %v314
      %v340 = vpack.c.b16 %v320, %v315
      %v341 = vpack.c.b16 %v321, %v316
      %v342 = vpack.c.b16 %v322, %v317
      %v343 = vpack.c.b16 %v323, %v323
      %v344 = vpack.c.b16 %v324, %v324
      %v345 = vpack.c.b16 %v325, %v325
      %v346 = vpack.c.b16 %v326, %v326
      %v347 = vpack.c.b16 %v327, %v327
      %v436 = vunpack.c.l.b16 %v193
      %v437 = vunpack.c.l.b16 %v194
      %v438 = vunpack.c.l.b16 %v195
      %v439 = vunpack.c.l.b16 %v196
      %v440 = vunpack.c.l.b16 %v197
      %v441 = vunpack.c.l.b16 %v198
      %v442 = vunpack.c.l.b16 %v199
      %v443 = vunpack.c.l.b16 %v200
      %v444 = vunpack.c.l.b16 %v201
      %v445 = vunpack.c.l.b16 %v202
      %v446 = vunpack.c.l.b16 %v203
      %v447 = vunpack.c.l.b16 %v204
      %v448 = vunpack.c.l.b16 %v205
      %v449 = vunpack.c.l.b16 %v206
      %v450 = vunpack.c.l.b16 %v207
      %v451 = vunpack.c.l.b16 %v208
      %v452 = vunpack.c.l.b16 %v209
      %v453 = vunpack.c.l.b16 %v210
      %v454 = vunpack.c.l.b16 %v211
      %v455 = vunpack.c.l.b16 %v212
      %v456 = vunpack.c.l.b16 %v213
      %v457 = vunpack.c.l.b16 %v214
      %v458 = vunpack.c.l.b16 %v215
      %v459 = vunpack.c.l.b16 %v216
      %v460 = vunpack.c.l.b16 %v217
      %v461 = vunpack.c.l.b16 %v218
      %v462 = vunpack.c.l.b16 %v219
      %v463 = vunpack.c.l.b16 %v220
      %v464 = vunpack.c.l.b16 %v221
      %v465 = vunpack.c.l.b16 %v222
      %v466 = vunpack.c.l.b16 %v223
      %v467 = vunpack.c.l.b16 %v224
      %v468 = vunpack.c.l.b16 %v225
      %v469 = vunpack.c.l.b16 %v226
      %v470 = vunpack.c.l.b16 %v227
      %v471 = vunpack.c.l.b16 %v228
      %v472 = vunpack.c.l.b16 %v229
      %v473 = vunpack.c.l.b16 %v230
      %v474 = vunpack.c.l.b16 %v231
      %v475 = vunpack.c.l.b16 %v232
      %v476 = vunpack.c.l.b16 %v233
      %v477 = vunpack.c.l.b16 %v234
      %v478 = vunpack.c.l.b16 %v235
      %v479 = vunpack.c.l.b16 %v236
      %v480 = vunpack.c.l.b16 %v237
      %v481 = vunpack.c.l.b16 %v238
      %v482 = vunpack.c.l.b16 %v239
      %v483 = vunpack.c.l.b16 %v240
      %v484 = vunpack.c.l.b16 %v241
      %v485 = vunpack.c.l.b16 %v242
      %v486 = vunpack.c.l.b16 %v243
      %v487 = vunpack.c.l.b16 %v244
      %v488 = vunpack.c.l.b16 %v245
      %v489 = vunpack.c.l.b16 %v246
      %v490 = vunpack.c.l.b16 %v247
      %v491 = vunpack.c.l.b16 %v248
      %v492 = vunpack.c.l.b16 %v249
      %v493 = vunpack.c.l.b16 %v250
      %v494 = vunpack.c.l.b16 %v251
      %v495 = vunpack.c.l.b16 %v252
      %v496 = vunpack.c.l.b16 %v253
      %v497 = vunpack.c.l.b16 %v254
      %v498 = vunpack.c.l.b16 %v255
      %v499 = vunpack.c.l.b16 %v256
      %v500 = vunpack.c.l.b16 %v257
      %v501 = vunpack.c.l.b16 %v258
      %v502 = vunpack.c.l.b16 %v259
      %v503 = vunpack.c.l.b16 %v260
      %v504 = vunpack.c.l.b16 %v261
      %v505 = vunpack.c.l.b16 %v262
      %v506 = vunpack.c.l.b16 %v263
      %v507 = vunpack.c.l.b16 %v264
      %v508 = vpack.c.b16 %v437, %v436
      %v509 = vpack.c.b16 %v439, %v438
      %v510 = vpack.c.b16 %v441, %v440
      %v511 = vpack.c.b16 %v443, %v442
      %v512 = vpack.c.b16 %v445, %v444
      %v513 = vpack.c.b16 %v447, %v446
      %v514 = vpack.c.b16 %v449, %v448
      %v515 = vpack.c.b16 %v451, %v450
      %v516 = vpack.c.b16 %v453, %v452
      %v517 = vpack.c.b16 %v455, %v454
      %v518 = vpack.c.b16 %v457, %v456
      %v519 = vpack.c.b16 %v459, %v458
      %v520 = vpack.c.b16 %v461, %v460
      %v521 = vpack.c.b16 %v463, %v462
      %v522 = vpack.c.b16 %v465, %v464
      %v523 = vpack.c.b16 %v467, %v466
      %v524 = vpack.c.b16 %v469, %v468
      %v525 = vpack.c.b16 %v471, %v470
      %v526 = vpack.c.b16 %v473, %v472
      %v527 = vpack.c.b16 %v475, %v474
      %v528 = vpack.c.b16 %v477, %v476
      %v529 = vpack.c.b16 %v479, %v478
      %v530 = vpack.c.b16 %v481, %v480
      %v531 = vpack.c.b16 %v483, %v482
      %v532 = vpack.c.b16 %v485, %v484
      %v533 = vpack.c.b16 %v487, %v486
      %v534 = vpack.c.b16 %v489, %v488
      %v535 = vpack.c.b16 %v491, %v490
      %v536 = vpack.c.b16 %v493, %v492
      %v537 = vpack.c.b16 %v495, %v494
      %v538 = vpack.c.b16 %v497, %v496
      %v539 = vpack.c.b16 %v499, %v498
      %v540 = vpack.c.b16 %v501, %v500
      %v541 = vpack.c.b16 %v503, %v502
      %v542 = vpack.c.b16 %v505, %v504
      %v543 = vpack.c.b16 %v507, %v506
      %vm580 = vcmask 523264
      %v582 = vsel %vm580, %v332, 0
      %v585 = vsel %vm580, %v337, 0
      %v588 = vsel %vm580, %v342, 0
      %v591 = vsel %vm580, %v347, 0
      %593 = vmatprep.subr.bf16.mxu0 0
      %594 = vmatpush1.bf16.msra.mxu0 %v508
      %595 = vmatprep.subr.bf16.mxu0 0
      %596 = vmatpush1.bf16.msra.mxu0 %v509
      %597 = vmatprep.subr.bf16.mxu0 0
      %598 = vmatpush1.bf16.msra.mxu0 %v510
      %599 = vmatprep.subr.bf16.mxu0 0
      %600 = vmatpush1.bf16.msra.mxu0 %v511
      %601 = vmatprep.subr.bf16.mxu0 0
      %602 = vmatpush1.bf16.msra.mxu0 %v512
      %603 = vmatprep.subr.bf16.mxu0 0
      %604 = vmatpush1.bf16.msra.mxu0 %v513
      %605 = vmatprep.subr.bf16.mxu0 0
      %606 = vmatpush1.bf16.msra.mxu0 %v514
      %607 = vmatprep.subr.bf16.mxu0 0
      %608 = vmatpush1.bf16.msra.mxu0 %v515
      %609 = vmatprep.subr.bf16.mxu0 0
      %610 = vmatpush1.bf16.msra.mxu0 %v516
      %611 = vmatprep.subr.bf16.mxu0 0
      %612 = vmatpush1.bf16.msra.mxu0 %v517
      %613 = vmatprep.subr.bf16.mxu0 0
      %614 = vmatpush1.bf16.msra.mxu0 %v518
      %615 = vmatprep.subr.bf16.mxu0 0
      %616 = vmatpush1.bf16.msra.mxu0 %v519
      %617 = vmatprep.subr.bf16.mxu0 0
      %618 = vmatpush1.bf16.msra.mxu0 %v520
      %619 = vmatprep.subr.bf16.mxu0 0
      %620 = vmatpush1.bf16.msra.mxu0 %v521
      %621 = vmatprep.subr.bf16.mxu0 0
      %622 = vmatpush1.bf16.msra.mxu0 %v522
      %623 = vmatprep.subr.bf16.mxu0 0
      %624 = vmatpush1.bf16.msra.mxu0 %v523
      %625 = vmatprep.mubr.bf16.mxu0 %v329
      %626 = vmatmul.mubr.bf16.gmra.mrb[0].mxu0 %v328
      %v627 = vpop.f32.mrb[0].mxu0
      %v628 = vadd.f32 %v270, %v627
      %v629 = vpop.f32.mrb[0].mxu0
      %v630 = vpop.f32.mrb[0].mxu0
      %v631 = vadd.f32 %v270, %v630
      %v632 = vpop.f32.mrb[0].mxu0
      %633 = vmatprep.mubr.bf16.mxu0 %v334
      %634 = vmatmul.mubr.bf16.gmra.mrb[0].mxu0 %v333
      %v635 = vpop.f32.mrb[0].mxu0
      %v636 = vadd.f32 %v270, %v635
      %v637 = vpop.f32.mrb[0].mxu0
      %v638 = vpop.f32.mrb[0].mxu0
      %v639 = vadd.f32 %v270, %v638
      %v640 = vpop.f32.mrb[0].mxu0
      %641 = vmatprep.mubr.bf16.mxu0 %v339
      %642 = vmatmul.mubr.bf16.gmra.mrb[0].mxu0 %v338
      %v643 = vpop.f32.mrb[0].mxu0
      %v644 = vadd.f32 %v270, %v643
      %v645 = vpop.f32.mrb[0].mxu0
      %v646 = vpop.f32.mrb[0].mxu0
      %v647 = vadd.f32 %v270, %v646
      %v648 = vpop.f32.mrb[0].mxu0
      %649 = vmatprep.mubr.bf16.mxu0 %v344
      %650 = vmatmul.mubr.bf16.gmra.mrb[0].mxu0 %v343
      %v651 = vpop.f32.mrb[0].mxu0
      %v652 = vadd.f32 %v270, %v651
      %v653 = vpop.f32.mrb[0].mxu0
      %v654 = vpop.f32.mrb[0].mxu0
      %v655 = vpop.f32.mrb[0].mxu0
      %656 = vdwg.mxu0
      %657 = vmatprep.subr.bf16.mxu0 0
      %658 = vmatpush1.bf16.msra.mxu0 %v524
      %659 = vmatprep.subr.bf16.mxu0 0
      %660 = vmatpush1.bf16.msra.mxu0 %v525
      %661 = vmatprep.subr.bf16.mxu0 0
      %662 = vmatpush1.bf16.msra.mxu0 %v526
      %663 = vmatprep.subr.bf16.mxu0 0
      %664 = vmatpush1.bf16.msra.mxu0 %v527
      %665 = vmatprep.subr.bf16.mxu0 0
      %666 = vmatpush1.bf16.msra.mxu0 %v528
      %667 = vmatprep.subr.bf16.mxu0 0
      %668 = vmatpush1.bf16.msra.mxu0 %v529
      %669 = vmatprep.subr.bf16.mxu0 0
      %670 = vmatpush1.bf16.msra.mxu0 %v530
      %671 = vmatprep.subr.bf16.mxu0 0
      %672 = vmatpush1.bf16.msra.mxu0 %v531
      %673 = vmatprep.subr.bf16.mxu0 0
      %674 = vmatpush1.bf16.msra.mxu0 %v532
      %675 = vmatprep.subr.bf16.mxu0 0
      %676 = vmatpush1.bf16.msra.mxu0 %v533
      %677 = vmatprep.subr.bf16.mxu0 0
      %678 = vmatpush1.bf16.msra.mxu0 %v534
      %679 = vmatprep.subr.bf16.mxu0 0
      %680 = vmatpush1.bf16.msra.mxu0 %v535
      %681 = vmatprep.subr.bf16.mxu0 0
      %682 = vmatpush1.bf16.msra.mxu0 %v536
      %683 = vmatprep.subr.bf16.mxu0 0
      %684 = vmatpush1.bf16.msra.mxu0 %v537
      %685 = vmatprep.subr.bf16.mxu0 0
      %686 = vmatpush1.bf16.msra.mxu0 %v538
      %687 = vmatprep.subr.bf16.mxu0 0
      %688 = vmatpush1.bf16.msra.mxu0 %v539
      %689 = vmatprep.mubr.bf16.mxu0 %v331
      %690 = vmatmul.mubr.bf16.gmra.mrb[0].mxu0 %v330
      %v691 = vpop.f32.mrb[0].mxu0
      %v692 = vadd.f32 %v628, %v691
      %v693 = vpop.f32.mrb[0].mxu0
      %v694 = vpop.f32.mrb[0].mxu0
      %v695 = vadd.f32 %v631, %v694
      %v696 = vpop.f32.mrb[0].mxu0
      %697 = vmatprep.mubr.bf16.mxu0 %v336
      %698 = vmatmul.mubr.bf16.gmra.mrb[0].mxu0 %v335
      %v699 = vpop.f32.mrb[0].mxu0
      %v700 = vadd.f32 %v636, %v699
      %v701 = vpop.f32.mrb[0].mxu0
      %v702 = vpop.f32.mrb[0].mxu0
      %v703 = vadd.f32 %v639, %v702
      %v704 = vpop.f32.mrb[0].mxu0
      %705 = vmatprep.mubr.bf16.mxu0 %v341
      %706 = vmatmul.mubr.bf16.gmra.mrb[0].mxu0 %v340
      %v707 = vpop.f32.mrb[0].mxu0
      %v708 = vadd.f32 %v644, %v707
      %v709 = vpop.f32.mrb[0].mxu0
      %v710 = vpop.f32.mrb[0].mxu0
      %v711 = vadd.f32 %v647, %v710
      %v712 = vpop.f32.mrb[0].mxu0
      %713 = vmatprep.mubr.bf16.mxu0 %v346
      %714 = vmatmul.mubr.bf16.gmra.mrb[0].mxu0 %v345
      %v715 = vpop.f32.mrb[0].mxu0
      %v716 = vadd.f32 %v652, %v715
      %v717 = vpop.f32.mrb[0].mxu0
      %v718 = vpop.f32.mrb[0].mxu0
      %v719 = vpop.f32.mrb[0].mxu0
      %720 = vdwg.mxu0
      %721 = vmatprep.subr.bf16.mxu0 0
      %722 = vmatpush1.bf16.msra.mxu0 %v540
      %723 = vmatprep.subr.bf16.mxu0 0
      %724 = vmatpush1.bf16.msra.mxu0 %v541
      %725 = vmatprep.subr.bf16.mxu0 0
      %726 = vmatpush1.bf16.msra.mxu0 %v542
      %727 = vmatprep.subr.bf16.mxu0 0
      %728 = vmatpush1.bf16.msra.mxu0 %v543
      %729 = vmatprep.subr.bf16.mxu0 0
      %730 = vmatpush1.bf16.msra.mxu0 0
      %731 = vmatprep.subr.bf16.mxu0 0
      %732 = vmatpush1.bf16.msra.mxu0 0
      %733 = vmatprep.subr.bf16.mxu0 0
      %734 = vmatpush1.bf16.msra.mxu0 0
      %735 = vmatprep.subr.bf16.mxu0 0
      %736 = vmatpush1.bf16.msra.mxu0 0
      %737 = vmatprep.subr.bf16.mxu0 0
      %738 = vmatpush1.bf16.msra.mxu0 0
      %739 = vmatprep.subr.bf16.mxu0 0
      %740 = vmatpush1.bf16.msra.mxu0 0
      %741 = vmatprep.subr.bf16.mxu0 0
      %742 = vmatpush1.bf16.msra.mxu0 0
      %743 = vmatprep.subr.bf16.mxu0 0
      %744 = vmatpush1.bf16.msra.mxu0 0
      %745 = vmatprep.subr.bf16.mxu0 0
      %746 = vmatpush1.bf16.msra.mxu0 0
      %747 = vmatprep.subr.bf16.mxu0 0
      %748 = vmatpush1.bf16.msra.mxu0 0
      %749 = vmatprep.subr.bf16.mxu0 0
      %750 = vmatpush1.bf16.msra.mxu0 0
      %751 = vmatprep.subr.bf16.mxu0 0
      %752 = vmatpush1.bf16.msra.mxu0 0
      %753 = vmatprep.mubr.bf16.mxu0 0
      %754 = vmatmul.mubr.bf16.gmra.mrb[0].mxu0 %v582
      %v755 = vpop.f32.mrb[0].mxu0
      %v756 = vadd.f32 %v692, %v755
      %v757 = vpop.f32.mrb[0].mxu0
      %v758 = vpop.f32.mrb[0].mxu0
      %v759 = vadd.f32 %v695, %v758
      %v760 = vpop.f32.mrb[0].mxu0
      %761 = vmatprep.mubr.bf16.mxu0 0
      %762 = vmatmul.mubr.bf16.gmra.mrb[0].mxu0 %v585
      %v763 = vpop.f32.mrb[0].mxu0
      %v764 = vadd.f32 %v700, %v763
      %v765 = vpop.f32.mrb[0].mxu0
      %v766 = vpop.f32.mrb[0].mxu0
      %v767 = vadd.f32 %v703, %v766
      %v768 = vpop.f32.mrb[0].mxu0
      %769 = vmatprep.mubr.bf16.mxu0 0
      %770 = vmatmul.mubr.bf16.gmra.mrb[0].mxu0 %v588
      %v771 = vpop.f32.mrb[0].mxu0
      %v772 = vadd.f32 %v708, %v771
      %v773 = vpop.f32.mrb[0].mxu0
      %v774 = vpop.f32.mrb[0].mxu0
      %v775 = vadd.f32 %v711, %v774
      %v776 = vpop.f32.mrb[0].mxu0
      %777 = vmatprep.mubr.bf16.mxu0 0
      %778 = vmatmul.mubr.bf16.gmra.mrb[0].mxu0 %v591
      %v779 = vpop.f32.mrb[0].mxu0
      %v780 = vadd.f32 %v716, %v779
      %v781 = vpop.f32.mrb[0].mxu0
      %v782 = vpop.f32.mrb[0].mxu0
      %v783 = vpop.f32.mrb[0].mxu0
      %784 = vdwg.mxu0
      %v785 = vmax.f32 %v756, 0.0
      %v786 = vmax.f32 %v759, 0.0
      %v787 = vmax.f32 %v764, 0.0
      %v788 = vmax.f32 %v767, 0.0
      %v789 = vmax.f32 %v772, 0.0
      %v790 = vmax.f32 %v775, 0.0
      %v791 = vmax.f32 %v780, 0.0
      %v792 = vpack.c.bf16 %v786, %v785
      %v793 = vpack.c.bf16 %v788, %v787
      %v794 = vpack.c.bf16 %v790, %v789
      %v795 = vpack.c.bf16 %v791, %v791
      %v800 = vunpack.c.l.b16 %v792
      %v801 = vunpack.c.h.b16 %v792
      %v802 = vunpack.c.l.b16 %v793
      %v803 = vunpack.c.h.b16 %v793
      %v804 = vunpack.c.l.b16 %v794
      %v805 = vunpack.c.h.b16 %v794
      %v806 = vunpack.c.l.b16 %v795
      %v807 = vpack.c.b16 %v800, %v800
      %v808 = vpack.c.b16 %v801, %v801
      %v809 = vpack.c.b16 %v802, %v802
      %v810 = vpack.c.b16 %v803, %v803
      %v811 = vpack.c.b16 %v804, %v804
      %v812 = vpack.c.b16 %v805, %v805
      %v813 = vpack.c.b16 %v806, %v806
      %vm821 = vcmask 519168
      %822 = vst.msk [vmem:[%s170] sm:$0xf] %vm821, %v807
      %823 = vst.msk [vmem:[%s170 + $0x4] sm:$0xf] %vm821, %v808
      %824 = vst.msk [vmem:[%s170 + $0x8] sm:$0xf] %vm821, %v809
      %825 = vst.msk [vmem:[%s170 + $0xc] sm:$0xf] %vm821, %v810
      %826 = vst.msk [vmem:[%s170 + $0x10] sm:$0xf] %vm821, %v811
      %827 = vst.msk [vmem:[%s170 + $0x14] sm:$0xf] %vm821, %v812
      %vm828 = vcmask 516096
      %vm829 = vsmask.f32 256
      %vm830 = vmand %vm828, %vm829
      %v831 = vld [vmem:[%s170 + $0x18] sm:$0x1]
      %v832 = vsel %vm830, %v813, %v831
      %833 = vst [vmem:[%s170 + $0x18] sm:$0x1] %v832
      %p834 = scmp.lt.s32.totalorder %s14, 1
      %s835 = scalar_select %p834, %s14, 1
      %s836 = smul.addr %s835, 7
      %s837 = smul.addr %s836, 4
      %s838 = scalar_lea.vmem %s3, %s837
      // Predicated region
      $region33: #{net_forward.6} parent=31 // pred_check
        %p839 = pneg %p100
      $region34: #{net_forward.6} parent=31 // pred_check_branch
        %841 = sbr.rel (%p839) target = $region36
      $region35: #{net_forward.6} parent=31 // pred_region
        _
      $region36: #{net_forward.6} parent=31 // pred_fallthru
        _
    $region32: #{net_forward.6} parent=5 // pred_fallthru
      _
    %p842 = scmp.le.s32.totalorder 2, %s9
    // Predicated region
    $region37: #{net_forward.6} parent=5 // pred_check
      %p843 = pneg %p842
    $region38: #{net_forward.6} parent=5 // pred_check_branch
      %845 = sbr.rel (%p843) target = $region40
    $region39: #{net_forward.6} parent=5 // pred_region
      %s846 = ssub.s32 %s9, 2
      // Predicated region
      $region41: #{net_forward.6} parent=39 // pred_check
        %p847 = pneg %p106
      $region42: #{net_forward.6} parent=39 // pred_check_branch
        %849 = sbr.rel (%p847) target = $region44
      $region43: #{net_forward.6} parent=39 // pred_region
        %p850 = scmp.lt.s32.totalorder %s15, 1
        %s851 = scalar_select %p850, %s15, 1
        %s852 = smul.addr %s851, 7
        %s853 = smul.addr %s852, 4
        %s854 = scalar_lea.vmem %s3, %s853
      $region44: #{net_forward.6} parent=39 // pred_fallthru
        _
    $region40: #{net_forward.6} parent=5 // pred_fallthru
      _
  $region6: #{net_forward.6} parent=0 // loop_footer
    %s13 = sadd.s32 1, %s9
  $region7: #{net_forward.6} parent=0 // loop_footer_branch
    %8 = sbr.rel target = $region3
  $region8: #{net_forward.6} parent=0 // loop_exit
    _

// kernel: net_forward.7
$region0: #{net_forward.7}
  #allocation0 [shape = 'u32[]', space=smem, size = 0x4, offset = 0x4, fixed_abs, tag = 'smem constant byte address 0x4 - core index']
  #allocation1 [shape = 'u32[144,128]{1,0:T(1,128)}', space=vmem, size = 0x12000, scoped, tag = 'internal scratch']
  #allocation2 [shape = 'f32[2,128]{1,0:T(2,128)}', space=vmem, size = 0x400, scoped, tag = 'scratch operand']
  #allocation3 [shape = 'f32[2,128]{1,0:T(2,128)}', space=vmem, size = 0x400, scoped, tag = 'scratch operand']
  %s0 = inlined_call_operand.vmem [shape: bf16[2,3328], index: 0, kind: input, shape index: {}]
  %s1 = inlined_call_operand.vmem [shape: bf16[3328,512], index: 1, kind: input, shape index: {}]
  %s2 = inlined_call_operand.vmem [shape: f32[1,512], index: 2, kind: input, shape index: {}]
  %s3 = inlined_call_operand.vmem [shape: bf16[512,128], index: 3, kind: input, shape index: {}]
  %s4 = inlined_call_operand.vmem [shape: f32[1,128], index: 4, kind: input, shape index: {}]
  %s5 = inlined_call_operand.hbm [shape: f32[2,128], index: 5, kind: output, shape index: {}]
  %s6 = sld [smem:[#allocation0]]
  $region110: #{net_forward.7} parent=0
    _
  %s8 = ssub.s32 1, %s6
  %s9 = scalar_select 0, %s8, %s6
  $region1: #{net_forward.7} parent=0
    #allocation4 [shape = 'u8[851968]{0}', space=vmem, size = 0xd0000, scoped, tag = 'input window, operand 1']
    #allocation5 [shape = 'u8[1024]{0}', space=vmem, size = 0x400, scoped, tag = 'output window, operand 0, single buffered']
    #allocation6 [shape = 's32[2]{0}', space=sflag, size = 0x8, scoped, tag = 'scoped memory for net_forward.7']
    %10 = vsyncpa [#allocation6], 0
    loop: start=0, step=1, limit=10
    $region2: #{net_forward.7} parent=1 // loop_pre_header
      _
    $region3: #{net_forward.7} parent=1 // loop_header
      %s12 = sphi 0, %s16
      %p13 = scmp.ge.s32.totalorder %s12, 10
      %s19 = sphi 0, %s31
      %s20 = sphi 0, %s27
      %s21 = sphi 0, %s19
      %s22 = sphi 0, %s20
      %s23 = sphi 0, %s21
      %s24 = sphi 0, %s22
      %s34 = sphi 0, %s36
      %s37 = sphi 0, %s34
      %s38 = sphi 0, %s37
      %s54 = sphi 0, %s38
      %s62 = sphi 0, %s64
      %s65 = sphi 0, %s62
      %s66 = sphi 0, %s65
      %s82 = sphi 0, %s66
      %s88 = sphi 0, %s90
      %s91 = sphi 0, %s88
      %s92 = sphi 0, %s91
      %s108 = sphi 0, %s92
      %s114 = sphi 0, %s116
      %s117 = sphi 0, %s114
      %s118 = sphi 0, %s117
      %s134 = sphi 0, %s118
      %s138 = sphi 0, %s138
      %s140 = sphi 0, %s138
      %s141 = sphi 0, %s140
      %s155 = sphi 0, %s141
      %s159 = sphi 0, %s159
      %s161 = sphi 0, %s159
      %s162 = sphi 0, %s161
      %s176 = sphi 0, %s162
    $region4: #{net_forward.7} parent=1 // loop_header_branch
      %15 = sbr.rel (%p13) target = $region8
    $region5: #{net_forward.7} parent=1 // loop_body
      %s17 = ssub.s32 %s12, 1
      %s18 = ssub.s32 %s12, 2
      %s25 = sadd.s32 1, %s20
      %p26 = scmp.ge.s32.totalorder %s25, 2
      %s27 = scalar_select %p26, 0, %s25
      %s28 = sadd.s32 1, %s19
      %s29 = scalar_select %p26, %s28, %s19
      %p30 = scmp.ge.s32.totalorder %s29, 4
      %s31 = scalar_select %p30, 0, %s29
      %s32 = ssub.s32 %s20, %s27
      %p33 = scmp.eq.s32.totalorder %s32, 0
      %s35 = sadd.s32 %s34, 1
      %s36 = scalar_select %p33, %s34, %s35
      %p39 = pneg %p33
      %p40 = scmp.eq.s32.totalorder %s12, 7
      %p41 = por %p39, %p40
      %p42 = scmp.ne.s32.totalorder %s34, %s37
      %p43 = scmp.eq.s32.totalorder %s12, 0
      %p44 = por %p42, %p43
      %p45 = scmp.ne.s32.totalorder %s34, %s37
      %p46 = scmp.eq.s32.totalorder %s17, 7
      %p47 = por %p45, %p46
      %p48 = scmp.ne.s32.totalorder %s37, %s38
      %p49 = scmp.eq.s32.totalorder %s17, 0
      %p50 = por %p48, %p49
      %p51 = scmp.ne.s32.totalorder %s37, %s38
      %p52 = scmp.eq.s32.totalorder %s18, 7
      %p53 = por %p51, %p52
      %p55 = scmp.ne.s32.totalorder %s38, %s54
      %p56 = scmp.eq.s32.totalorder %s18, 0
      %p57 = por %p55, %p56
      %s58 = ssub.s32 %s20, %s27
      %s59 = ssub.s32 %s19, %s31
      %s60 = sor.u32 %s58, %s59
      %p61 = scmp.eq.s32.totalorder %s60, 0
      %s63 = sadd.s32 %s62, 1
      %s64 = scalar_select %p61, %s62, %s63
      %p67 = pneg %p61
      %p68 = scmp.eq.s32.totalorder %s12, 7
      %p69 = por %p67, %p68
      %p70 = scmp.ne.s32.totalorder %s62, %s65
      %p71 = scmp.eq.s32.totalorder %s12, 0
      %p72 = por %p70, %p71
      %p73 = scmp.ne.s32.totalorder %s62, %s65
      %p74 = scmp.eq.s32.totalorder %s17, 7
      %p75 = por %p73, %p74
      %p76 = scmp.ne.s32.totalorder %s65, %s66
      %p77 = scmp.eq.s32.totalorder %s17, 0
      %p78 = por %p76, %p77
      %p79 = scmp.ne.s32.totalorder %s65, %s66
      %p80 = scmp.eq.s32.totalorder %s18, 7
      %p81 = por %p79, %p80
      %p83 = scmp.ne.s32.totalorder %s66, %s82
      %p84 = scmp.eq.s32.totalorder %s18, 0
      %p85 = por %p83, %p84
      %s86 = ssub.s32 %s19, %s31
      %p87 = scmp.eq.s32.totalorder %s86, 0
      %s89 = sadd.s32 %s88, 1
      %s90 = scalar_select %p87, %s88, %s89
      %p93 = pneg %p87
      %p94 = scmp.eq.s32.totalorder %s12, 7
      %p95 = por %p93, %p94
      %p96 = scmp.ne.s32.totalorder %s88, %s91
      %p97 = scmp.eq.s32.totalorder %s12, 0
      %p98 = por %p96, %p97
      %p99 = scmp.ne.s32.totalorder %s88, %s91
      %p100 = scmp.eq.s32.totalorder %s17, 7
      %p101 = por %p99, %p100
      %p102 = scmp.ne.s32.totalorder %s91, %s92
      %p103 = scmp.eq.s32.totalorder %s17, 0
      %p104 = por %p102, %p103
      %p105 = scmp.ne.s32.totalorder %s91, %s92
      %p106 = scmp.eq.s32.totalorder %s18, 7
      %p107 = por %p105, %p106
      %p109 = scmp.ne.s32.totalorder %s92, %s108
      %p110 = scmp.eq.s32.totalorder %s18, 0
      %p111 = por %p109, %p110
      %s112 = ssub.s32 %s19, %s31
      %p113 = scmp.eq.s32.totalorder %s112, 0
      %s115 = sadd.s32 %s114, 1
      %s116 = scalar_select %p113, %s114, %s115
      %p119 = pneg %p113
      %p120 = scmp.eq.s32.totalorder %s12, 7
      %p121 = por %p119, %p120
      %p122 = scmp.ne.s32.totalorder %s114, %s117
      %p123 = scmp.eq.s32.totalorder %s12, 0
      %p124 = por %p122, %p123
      %p125 = scmp.ne.s32.totalorder %s114, %s117
      %p126 = scmp.eq.s32.totalorder %s17, 7
      %p127 = por %p125, %p126
      %p128 = scmp.ne.s32.totalorder %s117, %s118
      %p129 = scmp.eq.s32.totalorder %s17, 0
      %p130 = por %p128, %p129
      %p131 = scmp.ne.s32.totalorder %s117, %s118
      %p132 = scmp.eq.s32.totalorder %s18, 7
      %p133 = por %p131, %p132
      %p135 = scmp.ne.s32.totalorder %s118, %s134
      %p136 = scmp.eq.s32.totalorder %s18, 0
      %p137 = por %p135, %p136
      %s139 = sadd.s32 %s138, 1
      %p142 = scmp.eq.s32.totalorder %s12, 7
      %p143 = scmp.ne.s32.totalorder %s138, %s140
      %p144 = scmp.eq.s32.totalorder %s12, 0
      %p145 = por %p143, %p144
      %p146 = scmp.ne.s32.totalorder %s138, %s140
      %p147 = scmp.eq.s32.totalorder %s17, 7
      %p148 = por %p146, %p147
      %p149 = scmp.ne.s32.totalorder %s140, %s141
      %p150 = scmp.eq.s32.totalorder %s17, 0
      %p151 = por %p149, %p150
      %p152 = scmp.ne.s32.totalorder %s140, %s141
      %p153 = scmp.eq.s32.totalorder %s18, 7
      %p154 = por %p152, %p153
      %p156 = scmp.ne.s32.totalorder %s141, %s155
      %p157 = scmp.eq.s32.totalorder %s18, 0
      %p158 = por %p156, %p157
      %s160 = sadd.s32 %s159, 1
      %p163 = scmp.eq.s32.totalorder %s12, 7
      %p164 = scmp.ne.s32.totalorder %s159, %s161
      %p165 = scmp.eq.s32.totalorder %s12, 0
      %p166 = por %p164, %p165
      %p167 = scmp.ne.s32.totalorder %s159, %s161
      %p168 = scmp.eq.s32.totalorder %s17, 7
      %p169 = por %p167, %p168
      %p170 = scmp.ne.s32.totalorder %s161, %s162
      %p171 = scmp.eq.s32.totalorder %s17, 0
      %p172 = por %p170, %p171
      %p173 = scmp.ne.s32.totalorder %s161, %s162
      %p174 = scmp.eq.s32.totalorder %s18, 7
      %p175 = por %p173, %p174
      %p177 = scmp.ne.s32.totalorder %s162, %s176
      %p178 = scmp.eq.s32.totalorder %s18, 0
      %p179 = por %p177, %p178
      %p180 = scmp.le.s32.totalorder 1, %s12
      %p181 = scmp.lt.s32.totalorder %s12, 9
      %p182 = pnand %p180, %p181
      %p183 = pneg %p182
      // Predicated region
      $region9: #{net_forward.7} parent=5 // pred_check
        _
      $region10: #{net_forward.7} parent=5 // pred_check_branch
        %185 = sbr.rel (%p182) target = $region12
      $region11: #{net_forward.7} parent=5 // pred_region
        %s186 = ssub.s32 %s12, 1
        // Predicated region
        $region13: #{net_forward.7} parent=11 // pred_check
          %p187 = pneg %p151
        $region14: #{net_forward.7} parent=11 // pred_check_branch
          %189 = sbr.rel (%p187) target = $region16
        $region15: #{net_forward.7} parent=11 // pred_region
          _
        $region16: #{net_forward.7} parent=11 // pred_fallthru
          _
      $region12: #{net_forward.7} parent=5 // pred_fallthru
        _
      %p190 = scmp.lt.s32.totalorder %s12, 8
      // Predicated region
      $region17: #{net_forward.7} parent=5 // pred_check
        %p191 = pneg %p190
      $region18: #{net_forward.7} parent=5 // pred_check_branch
        %193 = sbr.rel (%p191) target = $region20
      $region19: #{net_forward.7} parent=5 // pred_region
        // Predicated region
        $region21: #{net_forward.7} parent=19 // pred_check
          %p194 = pneg %p44
        $region22: #{net_forward.7} parent=19 // pred_check_branch
          %196 = sbr.rel (%p194) target = $region24
        $region23: #{net_forward.7} parent=19 // pred_region
          %s197 = smul.u32 13, %s20
          %p198 = scmp.lt.s32.totalorder %s197, 25
          %s199 = scalar_select %p198, %s197, 25
          %s200 = scalar_lea.vmem %s0, %s199
          %s201 = smul.u32 13, %s20
        $region24: #{net_forward.7} parent=19 // pred_fallthru
          _
        // Predicated region
        $region25: #{net_forward.7} parent=19 // pred_check
          %p202 = pneg %p72
        $region26: #{net_forward.7} parent=19 // pred_check_branch
          %204 = sbr.rel (%p202) target = $region28
        $region27: #{net_forward.7} parent=19 // pred_region
          %s205 = sand.u32 %s62, 1
          %s206 = sand.u32 %s62, 1
          %s207 = smul.addr %s206, 832
          %s208 = scalar_lea.vmem [#allocation4], %s207
          %s209 = smul.u32 208, %s20
          %s210 = smul.addr %s209, 4
          %s211 = sadd.s32 %s19, %s210
          %s212 = smul.addr %s211, 4
          %s213 = scalar_lea.vmem %s1, %s212
          // Predicated region
          $region29: #{net_forward.7} parent=27 // pred_check
            _
          $region30: #{net_forward.7} parent=27 // pred_check_branch
            %215 = sbr.rel (0) target = $region32
          $region31: #{net_forward.7} parent=27 // pred_region
            // Predicated region
            $region33: #{net_forward.7} parent=31 // pred_check
              _
            $region34: #{net_forward.7} parent=31 // pred_check_branch
              %217 = sbr.rel target = $region36
            $region35: #{net_forward.7} parent=31 // pred_region
              // Predicated region
              $region48: #{net_forward.7} parent=35 // pred_check
                _
              $region49: #{net_forward.7} parent=35 // pred_check_branch
                %646 = sbr.rel (0) target = $region51
              $region50: #{net_forward.7} parent=35 // pred_region
                loop: start=0, step=1, limit=1
                $region52: #{net_forward.7} parent=50 // loop_pre_header
                  _
                $region53: #{net_forward.7} parent=50 // loop_header
                  %s648 = sphi 0, %s652
                  %p649 = scmp.ge.s32.totalorder %s648, 1
                  %s653 = sphi %s213, %s213
                  %s654 = sphi %s208, %s208
                $region54: #{net_forward.7} parent=50 // loop_header_branch
                  %651 = sbr.rel (%p649) target = $region58
                $region55: #{net_forward.7} parent=50 // loop_body
                  _
                $region56: #{net_forward.7} parent=50 // loop_footer
                  %s652 = sadd.s32 1, %s648
                $region57: #{net_forward.7} parent=50 // loop_footer_branch
                  %647 = sbr.rel target = $region53
                $region58: #{net_forward.7} parent=50 // loop_exit
                  _
                loop: start=0, step=1, limit=1
                $region59: #{net_forward.7} parent=50 // loop_pre_header
                  _
                $region60: #{net_forward.7} parent=50 // loop_header
                  %s657 = sphi 0, %s661
                  %p658 = scmp.ge.s32.totalorder %s657, 1
                  %s662 = sphi %s213, %s213
                  %s663 = sphi %s208, %s208
                $region61: #{net_forward.7} parent=50 // loop_header_branch
                  %660 = sbr.rel (%p658) target = $region65
                $region62: #{net_forward.7} parent=50 // loop_body
                  %v664 = vld [vmem:[%s662] sm:$0xf]
                  %665 = vst [vmem:[%s663] sm:$0xf] %v664
                  %v666 = vld [vmem:[%s662 + $0x10] sm:$0xf]
                  %667 = vst [vmem:[%s663 + $0x4] sm:$0xf] %v666
                  %v668 = vld [vmem:[%s662 + $0x20] sm:$0xf]
                  %669 = vst [vmem:[%s663 + $0x8] sm:$0xf] %v668
                  %v670 = vld [vmem:[%s662 + $0x30] sm:$0xf]
                  %671 = vst [vmem:[%s663 + $0xc] sm:$0xf] %v670
                  %v672 = vld [vmem:[%s662 + $0x40] sm:$0xf]
                  %673 = vst [vmem:[%s663 + $0x10] sm:$0xf] %v672
                  %v674 = vld [vmem:[%s662 + $0x50] sm:$0xf]
                  %675 = vst [vmem:[%s663 + $0x14] sm:$0xf] %v674
                  %v676 = vld [vmem:[%s662 + $0x60] sm:$0xf]
                  %677 = vst [vmem:[%s663 + $0x18] sm:$0xf] %v676
                  %v678 = vld [vmem:[%s662 + $0x70] sm:$0xf]
                  %679 = vst [vmem:[%s663 + $0x1c] sm:$0xf] %v678
                  %v680 = vld [vmem:[%s662 + $0x80] sm:$0xf]
                  %681 = vst [vmem:[%s663 + $0x20] sm:$0xf] %v680
                  %v682 = vld [vmem:[%s662 + $0x90] sm:$0xf]
                  %683 = vst [vmem:[%s663 + $0x24] sm:$0xf] %v682
                  %v684 = vld [vmem:[%s662 + $0xa0] sm:$0xf]
                  %685 = vst [vmem:[%s663 + $0x28] sm:$0xf] %v684
                  %v686 = vld [vmem:[%s662 + $0xb0] sm:$0xf]
                  %687 = vst [vmem:[%s663 + $0x2c] sm:$0xf] %v686
                  %v688 = vld [vmem:[%s662 + $0xc0] sm:$0xf]
                  %689 = vst [vmem:[%s663 + $0x30] sm:$0xf] %v688
                  %v690 = vld [vmem:[%s662 + $0xd0] sm:$0xf]
                  %691 = vst [vmem:[%s663 + $0x34] sm:$0xf] %v690
                  %v692 = vld [vmem:[%s662 + $0xe0] sm:$0xf]
                  %693 = vst [vmem:[%s663 + $0x38] sm:$0xf] %v692
                  %v694 = vld [vmem:[%s662 + $0xf0] sm:$0xf]
                  %695 = vst [vmem:[%s663 + $0x3c] sm:$0xf] %v694
                  %v696 = vld [vmem:[%s662 + $0x100] sm:$0xf]
                  %697 = vst [vmem:[%s663 + $0x40] sm:$0xf] %v696
                  %v698 = vld [vmem:[%s662 + $0x110] sm:$0xf]
                  %699 = vst [vmem:[%s663 + $0x44] sm:$0xf] %v698
                  %v700 = vld [vmem:[%s662 + $0x120] sm:$0xf]
                  %701 = vst [vmem:[%s663 + $0x48] sm:$0xf] %v700
                  %v702 = vld [vmem:[%s662 + $0x130] sm:$0xf]
                  %703 = vst [vmem:[%s663 + $0x4c] sm:$0xf] %v702
                  %v704 = vld [vmem:[%s662 + $0x140] sm:$0xf]
                  %705 = vst [vmem:[%s663 + $0x50] sm:$0xf] %v704
                  %v706 = vld [vmem:[%s662 + $0x150] sm:$0xf]
                  %707 = vst [vmem:[%s663 + $0x54] sm:$0xf] %v706
                  %v708 = vld [vmem:[%s662 + $0x160] sm:$0xf]
                  %709 = vst [vmem:[%s663 + $0x58] sm:$0xf] %v708
                  %v710 = vld [vmem:[%s662 + $0x170] sm:$0xf]
                  %711 = vst [vmem:[%s663 + $0x5c] sm:$0xf] %v710
                  %v712 = vld [vmem:[%s662 + $0x180] sm:$0xf]
                  %713 = vst [vmem:[%s663 + $0x60] sm:$0xf] %v712
                  %v714 = vld [vmem:[%s662 + $0x190] sm:$0xf]
                  %715 = vst [vmem:[%s663 + $0x64] sm:$0xf] %v714
                  %v716 = vld [vmem:[%s662 + $0x1a0] sm:$0xf]
                  %717 = vst [vmem:[%s663 + $0x68] sm:$0xf] %v716
                  %v718 = vld [vmem:[%s662 + $0x1b0] sm:$0xf]
                  %719 = vst [vmem:[%s663 + $0x6c] sm:$0xf] %v718
                  %v720 = vld [vmem:[%s662 + $0x1c0] sm:$0xf]
                  %721 = vst [vmem:[%s663 + $0x70] sm:$0xf] %v720
                  %v722 = vld [vmem:[%s662 + $0x1d0] sm:$0xf]
                  %723 = vst [vmem:[%s663 + $0x74] sm:$0xf] %v722
                  %v724 = vld [vmem:[%s662 + $0x1e0] sm:$0xf]
                  %725 = vst [vmem:[%s663 + $0x78] sm:$0xf] %v724
                  %v726 = vld [vmem:[%s662 + $0x1f0] sm:$0xf]
                  %727 = vst [vmem:[%s663 + $0x7c] sm:$0xf] %v726
                  %v728 = vld [vmem:[%s662 + $0x200] sm:$0xf]
                  %729 = vst [vmem:[%s663 + $0x80] sm:$0xf] %v728
                  %v730 = vld [vmem:[%s662 + $0x210] sm:$0xf]
                  %731 = vst [vmem:[%s663 + $0x84] sm:$0xf] %v730
                  %v732 = vld [vmem:[%s662 + $0x220] sm:$0xf]
                  %733 = vst [vmem:[%s663 + $0x88] sm:$0xf] %v732
                  %v734 = vld [vmem:[%s662 + $0x230] sm:$0xf]
                  %735 = vst [vmem:[%s663 + $0x8c] sm:$0xf] %v734
                  %v736 = vld [vmem:[%s662 + $0x240] sm:$0xf]
                  %737 = vst [vmem:[%s663 + $0x90] sm:$0xf] %v736
                  %v738 = vld [vmem:[%s662 + $0x250] sm:$0xf]
                  %739 = vst [vmem:[%s663 + $0x94] sm:$0xf] %v738
                  %v740 = vld [vmem:[%s662 + $0x260] sm:$0xf]
                  %741 = vst [vmem:[%s663 + $0x98] sm:$0xf] %v740
                  %v742 = vld [vmem:[%s662 + $0x270] sm:$0xf]
                  %743 = vst [vmem:[%s663 + $0x9c] sm:$0xf] %v742
                  %v744 = vld [vmem:[%s662 + $0x280] sm:$0xf]
                  %745 = vst [vmem:[%s663 + $0xa0] sm:$0xf] %v744
                  %v746 = vld [vmem:[%s662 + $0x290] sm:$0xf]
                  %747 = vst [vmem:[%s663 + $0xa4] sm:$0xf] %v746
                  %v748 = vld [vmem:[%s662 + $0x2a0] sm:$0xf]
                  %749 = vst [vmem:[%s663 + $0xa8] sm:$0xf] %v748
                  %v750 = vld [vmem:[%s662 + $0x2b0] sm:$0xf]
                  %751 = vst [vmem:[%s663 + $0xac] sm:$0xf] %v750
                  %v752 = vld [vmem:[%s662 + $0x2c0] sm:$0xf]
                  %753 = vst [vmem:[%s663 + $0xb0] sm:$0xf] %v752
                  %v754 = vld [vmem:[%s662 + $0x2d0] sm:$0xf]
                  %755 = vst [vmem:[%s663 + $0xb4] sm:$0xf] %v754
                  %v756 = vld [vmem:[%s662 + $0x2e0] sm:$0xf]
                  %757 = vst [vmem:[%s663 + $0xb8] sm:$0xf] %v756
                  %v758 = vld [vmem:[%s662 + $0x2f0] sm:$0xf]
                  %759 = vst [vmem:[%s663 + $0xbc] sm:$0xf] %v758
                  %v760 = vld [vmem:[%s662 + $0x300] sm:$0xf]
                  %761 = vst [vmem:[%s663 + $0xc0] sm:$0xf] %v760
                  %v762 = vld [vmem:[%s662 + $0x310] sm:$0xf]
                  %763 = vst [vmem:[%s663 + $0xc4] sm:$0xf] %v762
                  %v764 = vld [vmem:[%s662 + $0x320] sm:$0xf]
                  %765 = vst [vmem:[%s663 + $0xc8] sm:$0xf] %v764
                  %v766 = vld [vmem:[%s662 + $0x330] sm:$0xf]
                  %767 = vst [vmem:[%s663 + $0xcc] sm:$0xf] %v766
                  %v768 = vld [vmem:[%s662 + $0x340] sm:$0xf]
                  %769 = vst [vmem:[%s663 + $0xd0] sm:$0xf] %v768
                  %v770 = vld [vmem:[%s662 + $0x350] sm:$0xf]
                  %771 = vst [vmem:[%s663 + $0xd4] sm:$0xf] %v770
                  %v772 = vld [vmem:[%s662 + $0x360] sm:$0xf]
                  %773 = vst [vmem:[%s663 + $0xd8] sm:$0xf] %v772
                  %v774 = vld [vmem:[%s662 + $0x370] sm:$0xf]
                  %775 = vst [vmem:[%s663 + $0xdc] sm:$0xf] %v774
                  %v776 = vld [vmem:[%s662 + $0x380] sm:$0xf]
                  %777 = vst [vmem:[%s663 + $0xe0] sm:$0xf] %v776
                  %v778 = vld [vmem:[%s662 + $0x390] sm:$0xf]
                  %779 = vst [vmem:[%s663 + $0xe4] sm:$0xf] %v778
                  %v780 = vld [vmem:[%s662 + $0x3a0] sm:$0xf]
                  %781 = vst [vmem:[%s663 + $0xe8] sm:$0xf] %v780
                  %v782 = vld [vmem:[%s662 + $0x3b0] sm:$0xf]
                  %783 = vst [vmem:[%s663 + $0xec] sm:$0xf] %v782
                  %v784 = vld [vmem:[%s662 + $0x3c0] sm:$0xf]
                  %785 = vst [vmem:[%s663 + $0xf0] sm:$0xf] %v784
                  %v786 = vld [vmem:[%s662 + $0x3d0] sm:$0xf]
                  %787 = vst [vmem:[%s663 + $0xf4] sm:$0xf] %v786
                  %v788 = vld [vmem:[%s662 + $0x3e0] sm:$0xf]
                  %789 = vst [vmem:[%s663 + $0xf8] sm:$0xf] %v788
                  %v790 = vld [vmem:[%s662 + $0x3f0] sm:$0xf]
                  %791 = vst [vmem:[%s663 + $0xfc] sm:$0xf] %v790
                  %v792 = vld [vmem:[%s662 + $0x400] sm:$0xf]
                  %793 = vst [vmem:[%s663 + $0x100] sm:$0xf] %v792
                  %v794 = vld [vmem:[%s662 + $0x410] sm:$0xf]
                  %795 = vst [vmem:[%s663 + $0x104] sm:$0xf] %v794
                  %v796 = vld [vmem:[%s662 + $0x420] sm:$0xf]
                  %797 = vst [vmem:[%s663 + $0x108] sm:$0xf] %v796
                  %v798 = vld [vmem:[%s662 + $0x430] sm:$0xf]
                  %799 = vst [vmem:[%s663 + $0x10c] sm:$0xf] %v798
                  %v800 = vld [vmem:[%s662 + $0x440] sm:$0xf]
                  %801 = vst [vmem:[%s663 + $0x110] sm:$0xf] %v800
                  %v802 = vld [vmem:[%s662 + $0x450] sm:$0xf]
                  %803 = vst [vmem:[%s663 + $0x114] sm:$0xf] %v802
                  %v804 = vld [vmem:[%s662 + $0x460] sm:$0xf]
                  %805 = vst [vmem:[%s663 + $0x118] sm:$0xf] %v804
                  %v806 = vld [vmem:[%s662 + $0x470] sm:$0xf]
                  %807 = vst [vmem:[%s663 + $0x11c] sm:$0xf] %v806
                  %v808 = vld [vmem:[%s662 + $0x480] sm:$0xf]
                  %809 = vst [vmem:[%s663 + $0x120] sm:$0xf] %v808
                  %v810 = vld [vmem:[%s662 + $0x490] sm:$0xf]
                  %811 = vst [vmem:[%s663 + $0x124] sm:$0xf] %v810
                  %v812 = vld [vmem:[%s662 + $0x4a0] sm:$0xf]
                  %813 = vst [vmem:[%s663 + $0x128] sm:$0xf] %v812
                  %v814 = vld [vmem:[%s662 + $0x4b0] sm:$0xf]
                  %815 = vst [vmem:[%s663 + $0x12c] sm:$0xf] %v814
                  %v816 = vld [vmem:[%s662 + $0x4c0] sm:$0xf]
                  %817 = vst [vmem:[%s663 + $0x130] sm:$0xf] %v816
                  %v818 = vld [vmem:[%s662 + $0x4d0] sm:$0xf]
                  %819 = vst [vmem:[%s663 + $0x134] sm:$0xf] %v818
                  %v820 = vld [vmem:[%s662 + $0x4e0] sm:$0xf]
                  %821 = vst [vmem:[%s663 + $0x138] sm:$0xf] %v820
                  %v822 = vld [vmem:[%s662 + $0x4f0] sm:$0xf]
                  %823 = vst [vmem:[%s663 + $0x13c] sm:$0xf] %v822
                  %v824 = vld [vmem:[%s662 + $0x500] sm:$0xf]
                  %825 = vst [vmem:[%s663 + $0x140] sm:$0xf] %v824
                  %v826 = vld [vmem:[%s662 + $0x510] sm:$0xf]
                  %827 = vst [vmem:[%s663 + $0x144] sm:$0xf] %v826
                  %v828 = vld [vmem:[%s662 + $0x520] sm:$0xf]
                  %829 = vst [vmem:[%s663 + $0x148] sm:$0xf] %v828
                  %v830 = vld [vmem:[%s662 + $0x530] sm:$0xf]
                  %831 = vst [vmem:[%s663 + $0x14c] sm:$0xf] %v830
                  %v832 = vld [vmem:[%s662 + $0x540] sm:$0xf]
                  %833 = vst [vmem:[%s663 + $0x150] sm:$0xf] %v832
                  %v834 = vld [vmem:[%s662 + $0x550] sm:$0xf]
                  %835 = vst [vmem:[%s663 + $0x154] sm:$0xf] %v834
                  %v836 = vld [vmem:[%s662 + $0x560] sm:$0xf]
                  %837 = vst [vmem:[%s663 + $0x158] sm:$0xf] %v836
                  %v838 = vld [vmem:[%s662 + $0x570] sm:$0xf]
                  %839 = vst [vmem:[%s663 + $0x15c] sm:$0xf] %v838
                  %v840 = vld [vmem:[%s662 + $0x580] sm:$0xf]
                  %841 = vst [vmem:[%s663 + $0x160] sm:$0xf] %v840
                  %v842 = vld [vmem:[%s662 + $0x590] sm:$0xf]
                  %843 = vst [vmem:[%s663 + $0x164] sm:$0xf] %v842
                  %v844 = vld [vmem:[%s662 + $0x5a0] sm:$0xf]
                  %845 = vst [vmem:[%s663 + $0x168] sm:$0xf] %v844
                  %v846 = vld [vmem:[%s662 + $0x5b0] sm:$0xf]
                  %847 = vst [vmem:[%s663 + $0x16c] sm:$0xf] %v846
                  %v848 = vld [vmem:[%s662 + $0x5c0] sm:$0xf]
                  %849 = vst [vmem:[%s663 + $0x170] sm:$0xf] %v848
                  %v850 = vld [vmem:[%s662 + $0x5d0] sm:$0xf]
                  %851 = vst [vmem:[%s663 + $0x174] sm:$0xf] %v850
                  %v852 = vld [vmem:[%s662 + $0x5e0] sm:$0xf]
                  %853 = vst [vmem:[%s663 + $0x178] sm:$0xf] %v852
                  %v854 = vld [vmem:[%s662 + $0x5f0] sm:$0xf]
                  %855 = vst [vmem:[%s663 + $0x17c] sm:$0xf] %v854
                  %v856 = vld [vmem:[%s662 + $0x600] sm:$0xf]
                  %857 = vst [vmem:[%s663 + $0x180] sm:$0xf] %v856
                  %v858 = vld [vmem:[%s662 + $0x610] sm:$0xf]
                  %859 = vst [vmem:[%s663 + $0x184] sm:$0xf] %v858
                  %v860 = vld [vmem:[%s662 + $0x620] sm:$0xf]
                  %861 = vst [vmem:[%s663 + $0x188] sm:$0xf] %v860
                  %v862 = vld [vmem:[%s662 + $0x630] sm:$0xf]
                  %863 = vst [vmem:[%s663 + $0x18c] sm:$0xf] %v862
                  %v864 = vld [vmem:[%s662 + $0x640] sm:$0xf]
                  %865 = vst [vmem:[%s663 + $0x190] sm:$0xf] %v864
                  %v866 = vld [vmem:[%s662 + $0x650] sm:$0xf]
                  %867 = vst [vmem:[%s663 + $0x194] sm:$0xf] %v866
                  %v868 = vld [vmem:[%s662 + $0x660] sm:$0xf]
                  %869 = vst [vmem:[%s663 + $0x198] sm:$0xf] %v868
                  %v870 = vld [vmem:[%s662 + $0x670] sm:$0xf]
                  %871 = vst [vmem:[%s663 + $0x19c] sm:$0xf] %v870
                  %v872 = vld [vmem:[%s662 + $0x680] sm:$0xf]
                  %873 = vst [vmem:[%s663 + $0x1a0] sm:$0xf] %v872
                  %v874 = vld [vmem:[%s662 + $0x690] sm:$0xf]
                  %875 = vst [vmem:[%s663 + $0x1a4] sm:$0xf] %v874
                  %v876 = vld [vmem:[%s662 + $0x6a0] sm:$0xf]
                  %877 = vst [vmem:[%s663 + $0x1a8] sm:$0xf] %v876
                  %v878 = vld [vmem:[%s662 + $0x6b0] sm:$0xf]
                  %879 = vst [vmem:[%s663 + $0x1ac] sm:$0xf] %v878
                  %v880 = vld [vmem:[%s662 + $0x6c0] sm:$0xf]
                  %881 = vst [vmem:[%s663 + $0x1b0] sm:$0xf] %v880
                  %v882 = vld [vmem:[%s662 + $0x6d0] sm:$0xf]
                  %883 = vst [vmem:[%s663 + $0x1b4] sm:$0xf] %v882
                  %v884 = vld [vmem:[%s662 + $0x6e0] sm:$0xf]
                  %885 = vst [vmem:[%s663 + $0x1b8] sm:$0xf] %v884
                  %v886 = vld [vmem:[%s662 + $0x6f0] sm:$0xf]
                  %887 = vst [vmem:[%s663 + $0x1bc] sm:$0xf] %v886
                  %v888 = vld [vmem:[%s662 + $0x700] sm:$0xf]
                  %889 = vst [vmem:[%s663 + $0x1c0] sm:$0xf] %v888
                  %v890 = vld [vmem:[%s662 + $0x710] sm:$0xf]
                  %891 = vst [vmem:[%s663 + $0x1c4] sm:$0xf] %v890
                  %v892 = vld [vmem:[%s662 + $0x720] sm:$0xf]
                  %893 = vst [vmem:[%s663 + $0x1c8] sm:$0xf] %v892
                  %v894 = vld [vmem:[%s662 + $0x730] sm:$0xf]
                  %895 = vst [vmem:[%s663 + $0x1cc] sm:$0xf] %v894
                  %v896 = vld [vmem:[%s662 + $0x740] sm:$0xf]
                  %897 = vst [vmem:[%s663 + $0x1d0] sm:$0xf] %v896
                  %v898 = vld [vmem:[%s662 + $0x750] sm:$0xf]
                  %899 = vst [vmem:[%s663 + $0x1d4] sm:$0xf] %v898
                  %v900 = vld [vmem:[%s662 + $0x760] sm:$0xf]
                  %901 = vst [vmem:[%s663 + $0x1d8] sm:$0xf] %v900
                  %v902 = vld [vmem:[%s662 + $0x770] sm:$0xf]
                  %903 = vst [vmem:[%s663 + $0x1dc] sm:$0xf] %v902
                  %v904 = vld [vmem:[%s662 + $0x780] sm:$0xf]
                  %905 = vst [vmem:[%s663 + $0x1e0] sm:$0xf] %v904
                  %v906 = vld [vmem:[%s662 + $0x790] sm:$0xf]
                  %907 = vst [vmem:[%s663 + $0x1e4] sm:$0xf] %v906
                  %v908 = vld [vmem:[%s662 + $0x7a0] sm:$0xf]
                  %909 = vst [vmem:[%s663 + $0x1e8] sm:$0xf] %v908
                  %v910 = vld [vmem:[%s662 + $0x7b0] sm:$0xf]
                  %911 = vst [vmem:[%s663 + $0x1ec] sm:$0xf] %v910
                  %v912 = vld [vmem:[%s662 + $0x7c0] sm:$0xf]
                  %913 = vst [vmem:[%s663 + $0x1f0] sm:$0xf] %v912
                  %v914 = vld [vmem:[%s662 + $0x7d0] sm:$0xf]
                  %915 = vst [vmem:[%s663 + $0x1f4] sm:$0xf] %v914
                  %v916 = vld [vmem:[%s662 + $0x7e0] sm:$0xf]
                  %917 = vst [vmem:[%s663 + $0x1f8] sm:$0xf] %v916
                  %v918 = vld [vmem:[%s662 + $0x7f0] sm:$0xf]
                  %919 = vst [vmem:[%s663 + $0x1fc] sm:$0xf] %v918
                  %v920 = vld [vmem:[%s662 + $0x800] sm:$0xf]
                  %921 = vst [vmem:[%s663 + $0x200] sm:$0xf] %v920
                  %v922 = vld [vmem:[%s662 + $0x810] sm:$0xf]
                  %923 = vst [vmem:[%s663 + $0x204] sm:$0xf] %v922
                  %v924 = vld [vmem:[%s662 + $0x820] sm:$0xf]
                  %925 = vst [vmem:[%s663 + $0x208] sm:$0xf] %v924
                  %v926 = vld [vmem:[%s662 + $0x830] sm:$0xf]
                  %927 = vst [vmem:[%s663 + $0x20c] sm:$0xf] %v926
                  %v928 = vld [vmem:[%s662 + $0x840] sm:$0xf]
                  %929 = vst [vmem:[%s663 + $0x210] sm:$0xf] %v928
                  %v930 = vld [vmem:[%s662 + $0x850] sm:$0xf]
                  %931 = vst [vmem:[%s663 + $0x214] sm:$0xf] %v930
                  %v932 = vld [vmem:[%s662 + $0x860] sm:$0xf]
                  %933 = vst [vmem:[%s663 + $0x218] sm:$0xf] %v932
                  %v934 = vld [vmem:[%s662 + $0x870] sm:$0xf]
                  %935 = vst [vmem:[%s663 + $0x21c] sm:$0xf] %v934
                  %v936 = vld [vmem:[%s662 + $0x880] sm:$0xf]
                  %937 = vst [vmem:[%s663 + $0x220] sm:$0xf] %v936
                  %v938 = vld [vmem:[%s662 + $0x890] sm:$0xf]
                  %939 = vst [vmem:[%s663 + $0x224] sm:$0xf] %v938
                  %v940 = vld [vmem:[%s662 + $0x8a0] sm:$0xf]
                  %941 = vst [vmem:[%s663 + $0x228] sm:$0xf] %v940
                  %v942 = vld [vmem:[%s662 + $0x8b0] sm:$0xf]
                  %943 = vst [vmem:[%s663 + $0x22c] sm:$0xf] %v942
                  %v944 = vld [vmem:[%s662 + $0x8c0] sm:$0xf]
                  %945 = vst [vmem:[%s663 + $0x230] sm:$0xf] %v944
                  %v946 = vld [vmem:[%s662 + $0x8d0] sm:$0xf]
                  %947 = vst [vmem:[%s663 + $0x234] sm:$0xf] %v946
                  %v948 = vld [vmem:[%s662 + $0x8e0] sm:$0xf]
                  %949 = vst [vmem:[%s663 + $0x238] sm:$0xf] %v948
                  %v950 = vld [vmem:[%s662 + $0x8f0] sm:$0xf]
                  %951 = vst [vmem:[%s663 + $0x23c] sm:$0xf] %v950
                  %v952 = vld [vmem:[%s662 + $0x900] sm:$0xf]
                  %953 = vst [vmem:[%s663 + $0x240] sm:$0xf] %v952
                  %v954 = vld [vmem:[%s662 + $0x910] sm:$0xf]
                  %955 = vst [vmem:[%s663 + $0x244] sm:$0xf] %v954
                  %v956 = vld [vmem:[%s662 + $0x920] sm:$0xf]
                  %957 = vst [vmem:[%s663 + $0x248] sm:$0xf] %v956
                  %v958 = vld [vmem:[%s662 + $0x930] sm:$0xf]
                  %959 = vst [vmem:[%s663 + $0x24c] sm:$0xf] %v958
                  %v960 = vld [vmem:[%s662 + $0x940] sm:$0xf]
                  %961 = vst [vmem:[%s663 + $0x250] sm:$0xf] %v960
                  %v962 = vld [vmem:[%s662 + $0x950] sm:$0xf]
                  %963 = vst [vmem:[%s663 + $0x254] sm:$0xf] %v962
                  %v964 = vld [vmem:[%s662 + $0x960] sm:$0xf]
                  %965 = vst [vmem:[%s663 + $0x258] sm:$0xf] %v964
                  %v966 = vld [vmem:[%s662 + $0x970] sm:$0xf]
                  %967 = vst [vmem:[%s663 + $0x25c] sm:$0xf] %v966
                  %v968 = vld [vmem:[%s662 + $0x980] sm:$0xf]
                  %969 = vst [vmem:[%s663 + $0x260] sm:$0xf] %v968
                  %v970 = vld [vmem:[%s662 + $0x990] sm:$0xf]
                  %971 = vst [vmem:[%s663 + $0x264] sm:$0xf] %v970
                  %v972 = vld [vmem:[%s662 + $0x9a0] sm:$0xf]
                  %973 = vst [vmem:[%s663 + $0x268] sm:$0xf] %v972
                  %v974 = vld [vmem:[%s662 + $0x9b0] sm:$0xf]
                  %975 = vst [vmem:[%s663 + $0x26c] sm:$0xf] %v974
                  %v976 = vld [vmem:[%s662 + $0x9c0] sm:$0xf]
                  %977 = vst [vmem:[%s663 + $0x270] sm:$0xf] %v976
                  %v978 = vld [vmem:[%s662 + $0x9d0] sm:$0xf]
                  %979 = vst [vmem:[%s663 + $0x274] sm:$0xf] %v978
                  %v980 = vld [vmem:[%s662 + $0x9e0] sm:$0xf]
                  %981 = vst [vmem:[%s663 + $0x278] sm:$0xf] %v980
                  %v982 = vld [vmem:[%s662 + $0x9f0] sm:$0xf]
                  %983 = vst [vmem:[%s663 + $0x27c] sm:$0xf] %v982
                  %v984 = vld [vmem:[%s662 + $0xa00] sm:$0xf]
                  %985 = vst [vmem:[%s663 + $0x280] sm:$0xf] %v984
                  %v986 = vld [vmem:[%s662 + $0xa10] sm:$0xf]
                  %987 = vst [vmem:[%s663 + $0x284] sm:$0xf] %v986
                  %v988 = vld [vmem:[%s662 + $0xa20] sm:$0xf]
                  %989 = vst [vmem:[%s663 + $0x288] sm:$0xf] %v988
                  %v990 = vld [vmem:[%s662 + $0xa30] sm:$0xf]
                  %991 = vst [vmem:[%s663 + $0x28c] sm:$0xf] %v990
                  %v992 = vld [vmem:[%s662 + $0xa40] sm:$0xf]
                  %993 = vst [vmem:[%s663 + $0x290] sm:$0xf] %v992
                  %v994 = vld [vmem:[%s662 + $0xa50] sm:$0xf]
                  %995 = vst [vmem:[%s663 + $0x294] sm:$0xf] %v994
                  %v996 = vld [vmem:[%s662 + $0xa60] sm:$0xf]
                  %997 = vst [vmem:[%s663 + $0x298] sm:$0xf] %v996
                  %v998 = vld [vmem:[%s662 + $0xa70] sm:$0xf]
                  %999 = vst [vmem:[%s663 + $0x29c] sm:$0xf] %v998
                  %v1000 = vld [vmem:[%s662 + $0xa80] sm:$0xf]
                  %1001 = vst [vmem:[%s663 + $0x2a0] sm:$0xf] %v1000
                  %v1002 = vld [vmem:[%s662 + $0xa90] sm:$0xf]
                  %1003 = vst [vmem:[%s663 + $0x2a4] sm:$0xf] %v1002
                  %v1004 = vld [vmem:[%s662 + $0xaa0] sm:$0xf]
                  %1005 = vst [vmem:[%s663 + $0x2a8] sm:$0xf] %v1004
                  %v1006 = vld [vmem:[%s662 + $0xab0] sm:$0xf]
                  %1007 = vst [vmem:[%s663 + $0x2ac] sm:$0xf] %v1006
                  %v1008 = vld [vmem:[%s662 + $0xac0] sm:$0xf]
                  %1009 = vst [vmem:[%s663 + $0x2b0] sm:$0xf] %v1008
                  %v1010 = vld [vmem:[%s662 + $0xad0] sm:$0xf]
                  %1011 = vst [vmem:[%s663 + $0x2b4] sm:$0xf] %v1010
                  %v1012 = vld [vmem:[%s662 + $0xae0] sm:$0xf]
                  %1013 = vst [vmem:[%s663 + $0x2b8] sm:$0xf] %v1012
                  %v1014 = vld [vmem:[%s662 + $0xaf0] sm:$0xf]
                  %1015 = vst [vmem:[%s663 + $0x2bc] sm:$0xf] %v1014
                  %v1016 = vld [vmem:[%s662 + $0xb00] sm:$0xf]
                  %1017 = vst [vmem:[%s663 + $0x2c0] sm:$0xf] %v1016
                  %v1018 = vld [vmem:[%s662 + $0xb10] sm:$0xf]
                  %1019 = vst [vmem:[%s663 + $0x2c4] sm:$0xf] %v1018
                  %v1020 = vld [vmem:[%s662 + $0xb20] sm:$0xf]
                  %1021 = vst [vmem:[%s663 + $0x2c8] sm:$0xf] %v1020
                  %v1022 = vld [vmem:[%s662 + $0xb30] sm:$0xf]
                  %1023 = vst [vmem:[%s663 + $0x2cc] sm:$0xf] %v1022
                  %v1024 = vld [vmem:[%s662 + $0xb40] sm:$0xf]
                  %1025 = vst [vmem:[%s663 + $0x2d0] sm:$0xf] %v1024
                  %v1026 = vld [vmem:[%s662 + $0xb50] sm:$0xf]
                  %1027 = vst [vmem:[%s663 + $0x2d4] sm:$0xf] %v1026
                  %v1028 = vld [vmem:[%s662 + $0xb60] sm:$0xf]
                  %1029 = vst [vmem:[%s663 + $0x2d8] sm:$0xf] %v1028
                  %v1030 = vld [vmem:[%s662 + $0xb70] sm:$0xf]
                  %1031 = vst [vmem:[%s663 + $0x2dc] sm:$0xf] %v1030
                  %v1032 = vld [vmem:[%s662 + $0xb80] sm:$0xf]
                  %1033 = vst [vmem:[%s663 + $0x2e0] sm:$0xf] %v1032
                  %v1034 = vld [vmem:[%s662 + $0xb90] sm:$0xf]
                  %1035 = vst [vmem:[%s663 + $0x2e4] sm:$0xf] %v1034
                  %v1036 = vld [vmem:[%s662 + $0xba0] sm:$0xf]
                  %1037 = vst [vmem:[%s663 + $0x2e8] sm:$0xf] %v1036
                  %v1038 = vld [vmem:[%s662 + $0xbb0] sm:$0xf]
                  %1039 = vst [vmem:[%s663 + $0x2ec] sm:$0xf] %v1038
                  %v1040 = vld [vmem:[%s662 + $0xbc0] sm:$0xf]
                  %1041 = vst [vmem:[%s663 + $0x2f0] sm:$0xf] %v1040
                  %v1042 = vld [vmem:[%s662 + $0xbd0] sm:$0xf]
                  %1043 = vst [vmem:[%s663 + $0x2f4] sm:$0xf] %v1042
                  %v1044 = vld [vmem:[%s662 + $0xbe0] sm:$0xf]
                  %1045 = vst [vmem:[%s663 + $0x2f8] sm:$0xf] %v1044
                  %v1046 = vld [vmem:[%s662 + $0xbf0] sm:$0xf]
                  %1047 = vst [vmem:[%s663 + $0x2fc] sm:$0xf] %v1046
                  %v1048 = vld [vmem:[%s662 + $0xc00] sm:$0xf]
                  %1049 = vst [vmem:[%s663 + $0x300] sm:$0xf] %v1048
                  %v1050 = vld [vmem:[%s662 + $0xc10] sm:$0xf]
                  %1051 = vst [vmem:[%s663 + $0x304] sm:$0xf] %v1050
                  %v1052 = vld [vmem:[%s662 + $0xc20] sm:$0xf]
                  %1053 = vst [vmem:[%s663 + $0x308] sm:$0xf] %v1052
                  %v1054 = vld [vmem:[%s662 + $0xc30] sm:$0xf]
                  %1055 = vst [vmem:[%s663 + $0x30c] sm:$0xf] %v1054
                  %v1056 = vld [vmem:[%s662 + $0xc40] sm:$0xf]
                  %1057 = vst [vmem:[%s663 + $0x310] sm:$0xf] %v1056
                  %v1058 = vld [vmem:[%s662 + $0xc50] sm:$0xf]
                  %1059 = vst [vmem:[%s663 + $0x314] sm:$0xf] %v1058
                  %v1060 = vld [vmem:[%s662 + $0xc60] sm:$0xf]
                  %1061 = vst [vmem:[%s663 + $0x318] sm:$0xf] %v1060
                  %v1062 = vld [vmem:[%s662 + $0xc70] sm:$0xf]
                  %1063 = vst [vmem:[%s663 + $0x31c] sm:$0xf] %v1062
                  %v1064 = vld [vmem:[%s662 + $0xc80] sm:$0xf]
                  %1065 = vst [vmem:[%s663 + $0x320] sm:$0xf] %v1064
                  %v1066 = vld [vmem:[%s662 + $0xc90] sm:$0xf]
                  %1067 = vst [vmem:[%s663 + $0x324] sm:$0xf] %v1066
                  %v1068 = vld [vmem:[%s662 + $0xca0] sm:$0xf]
                  %1069 = vst [vmem:[%s663 + $0x328] sm:$0xf] %v1068
                  %v1070 = vld [vmem:[%s662 + $0xcb0] sm:$0xf]
                  %1071 = vst [vmem:[%s663 + $0x32c] sm:$0xf] %v1070
                  %v1072 = vld [vmem:[%s662 + $0xcc0] sm:$0xf]
                  %1073 = vst [vmem:[%s663 + $0x330] sm:$0xf] %v1072
                  %v1074 = vld [vmem:[%s662 + $0xcd0] sm:$0xf]
                  %1075 = vst [vmem:[%s663 + $0x334] sm:$0xf] %v1074
                  %v1076 = vld [vmem:[%s662 + $0xce0] sm:$0xf]
                  %1077 = vst [vmem:[%s663 + $0x338] sm:$0xf] %v1076
                  %v1078 = vld [vmem:[%s662 + $0xcf0] sm:$0xf]
                  %1079 = vst [vmem:[%s663 + $0x33c] sm:$0xf] %v1078
                $region63: #{net_forward.7} parent=50 // loop_footer
                  %s661 = sadd.s32 1, %s657
                $region64: #{net_forward.7} parent=50 // loop_footer_branch
                  %656 = sbr.rel target = $region60
                $region65: #{net_forward.7} parent=50 // loop_exit
                  _
              $region51: #{net_forward.7} parent=35 // pred_fallthru
                _
            $region36: #{net_forward.7} parent=31 // pred_fallthru
              _
            // Predicated region
            $region37: #{net_forward.7} parent=31 // pred_check
              _
            $region38: #{net_forward.7} parent=31 // pred_check_branch
              %219 = sbr.rel (0) target = $region40
            $region39: #{net_forward.7} parent=31 // pred_region
              loop: start=0, step=1, limit=1
              $region41: #{net_forward.7} parent=39 // loop_pre_header
                _
              $region42: #{net_forward.7} parent=39 // loop_header
                %s222 = sphi 0, %s226
                %p223 = scmp.ge.s32.totalorder %s222, 1
                %s227 = sphi %s213, %s213
                %s228 = sphi %s208, %s208
              $region43: #{net_forward.7} parent=39 // loop_header_branch
                %225 = sbr.rel (%p223) target = $region47
              $region44: #{net_forward.7} parent=39 // loop_body
                %v229 = vld [vmem:[%s227] sm:$0xf]
                %230 = vst [vmem:[%s228] sm:$0xf] %v229
                %v231 = vld [vmem:[%s227 + $0x10] sm:$0xf]
                %232 = vst [vmem:[%s228 + $0x4] sm:$0xf] %v231
                %v233 = vld [vmem:[%s227 + $0x20] sm:$0xf]
                %234 = vst [vmem:[%s228 + $0x8] sm:$0xf] %v233
                %v235 = vld [vmem:[%s227 + $0x30] sm:$0xf]
                %236 = vst [vmem:[%s228 + $0xc] sm:$0xf] %v235
                %v237 = vld [vmem:[%s227 + $0x40] sm:$0xf]
                %238 = vst [vmem:[%s228 + $0x10] sm:$0xf] %v237
                %v239 = vld [vmem:[%s227 + $0x50] sm:$0xf]
                %240 = vst [vmem:[%s228 + $0x14] sm:$0xf] %v239
                %v241 = vld [vmem:[%s227 + $0x60] sm:$0xf]
                %242 = vst [vmem:[%s228 + $0x18] sm:$0xf] %v241
                %v243 = vld [vmem:[%s227 + $0x70] sm:$0xf]
                %244 = vst [vmem:[%s228 + $0x1c] sm:$0xf] %v243
                %v245 = vld [vmem:[%s227 + $0x80] sm:$0xf]
                %246 = vst [vmem:[%s228 + $0x20] sm:$0xf] %v245
                %v247 = vld [vmem:[%s227 + $0x90] sm:$0xf]
                %248 = vst [vmem:[%s228 + $0x24] sm:$0xf] %v247
                %v249 = vld [vmem:[%s227 + $0xa0] sm:$0xf]
                %250 = vst [vmem:[%s228 + $0x28] sm:$0xf] %v249
                %v251 = vld [vmem:[%s227 + $0xb0] sm:$0xf]
                %252 = vst [vmem:[%s228 + $0x2c] sm:$0xf] %v251
                %v253 = vld [vmem:[%s227 + $0xc0] sm:$0xf]
                %254 = vst [vmem:[%s228 + $0x30] sm:$0xf] %v253
                %v255 = vld [vmem:[%s227 + $0xd0] sm:$0xf]
                %256 = vst [vmem:[%s228 + $0x34] sm:$0xf] %v255
                %v257 = vld [vmem:[%s227 + $0xe0] sm:$0xf]
                %258 = vst [vmem:[%s228 + $0x38] sm:$0xf] %v257
                %v259 = vld [vmem:[%s227 + $0xf0] sm:$0xf]
                %260 = vst [vmem:[%s228 + $0x3c] sm:$0xf] %v259
                %v261 = vld [vmem:[%s227 + $0x100] sm:$0xf]
                %262 = vst [vmem:[%s228 + $0x40] sm:$0xf] %v261
                %v263 = vld [vmem:[%s227 + $0x110] sm:$0xf]
                %264 = vst [vmem:[%s228 + $0x44] sm:$0xf] %v263
                %v265 = vld [vmem:[%s227 + $0x120] sm:$0xf]
                %266 = vst [vmem:[%s228 + $0x48] sm:$0xf] %v265
                %v267 = vld [vmem:[%s227 + $0x130] sm:$0xf]
                %268 = vst [vmem:[%s228 + $0x4c] sm:$0xf] %v267
                %v269 = vld [vmem:[%s227 + $0x140] sm:$0xf]
                %270 = vst [vmem:[%s228 + $0x50] sm:$0xf] %v269
                %v271 = vld [vmem:[%s227 + $0x150] sm:$0xf]
                %272 = vst [vmem:[%s228 + $0x54] sm:$0xf] %v271
                %v273 = vld [vmem:[%s227 + $0x160] sm:$0xf]
                %274 = vst [vmem:[%s228 + $0x58] sm:$0xf] %v273
                %v275 = vld [vmem:[%s227 + $0x170] sm:$0xf]
                %276 = vst [vmem:[%s228 + $0x5c] sm:$0xf] %v275
                %v277 = vld [vmem:[%s227 + $0x180] sm:$0xf]
                %278 = vst [vmem:[%s228 + $0x60] sm:$0xf] %v277
                %v279 = vld [vmem:[%s227 + $0x190] sm:$0xf]
                %280 = vst [vmem:[%s228 + $0x64] sm:$0xf] %v279
                %v281 = vld [vmem:[%s227 + $0x1a0] sm:$0xf]
                %282 = vst [vmem:[%s228 + $0x68] sm:$0xf] %v281
                %v283 = vld [vmem:[%s227 + $0x1b0] sm:$0xf]
                %284 = vst [vmem:[%s228 + $0x6c] sm:$0xf] %v283
                %v285 = vld [vmem:[%s227 + $0x1c0] sm:$0xf]
                %286 = vst [vmem:[%s228 + $0x70] sm:$0xf] %v285
                %v287 = vld [vmem:[%s227 + $0x1d0] sm:$0xf]
                %288 = vst [vmem:[%s228 + $0x74] sm:$0xf] %v287
                %v289 = vld [vmem:[%s227 + $0x1e0] sm:$0xf]
                %290 = vst [vmem:[%s228 + $0x78] sm:$0xf] %v289
                %v291 = vld [vmem:[%s227 + $0x1f0] sm:$0xf]
                %292 = vst [vmem:[%s228 + $0x7c] sm:$0xf] %v291
                %v293 = vld [vmem:[%s227 + $0x200] sm:$0xf]
                %294 = vst [vmem:[%s228 + $0x80] sm:$0xf] %v293
                %v295 = vld [vmem:[%s227 + $0x210] sm:$0xf]
                %296 = vst [vmem:[%s228 + $0x84] sm:$0xf] %v295
                %v297 = vld [vmem:[%s227 + $0x220] sm:$0xf]
                %298 = vst [vmem:[%s228 + $0x88] sm:$0xf] %v297
                %v299 = vld [vmem:[%s227 + $0x230] sm:$0xf]
                %300 = vst [vmem:[%s228 + $0x8c] sm:$0xf] %v299
                %v301 = vld [vmem:[%s227 + $0x240] sm:$0xf]
                %302 = vst [vmem:[%s228 + $0x90] sm:$0xf] %v301
                %v303 = vld [vmem:[%s227 + $0x250] sm:$0xf]
                %304 = vst [vmem:[%s228 + $0x94] sm:$0xf] %v303
                %v305 = vld [vmem:[%s227 + $0x260] sm:$0xf]
                %306 = vst [vmem:[%s228 + $0x98] sm:$0xf] %v305
                %v307 = vld [vmem:[%s227 + $0x270] sm:$0xf]
                %308 = vst [vmem:[%s228 + $0x9c] sm:$0xf] %v307
                %v309 = vld [vmem:[%s227 + $0x280] sm:$0xf]
                %310 = vst [vmem:[%s228 + $0xa0] sm:$0xf] %v309
                %v311 = vld [vmem:[%s227 + $0x290] sm:$0xf]
                %312 = vst [vmem:[%s228 + $0xa4] sm:$0xf] %v311
                %v313 = vld [vmem:[%s227 + $0x2a0] sm:$0xf]
                %314 = vst [vmem:[%s228 + $0xa8] sm:$0xf] %v313
                %v315 = vld [vmem:[%s227 + $0x2b0] sm:$0xf]
                %316 = vst [vmem:[%s228 + $0xac] sm:$0xf] %v315
                %v317 = vld [vmem:[%s227 + $0x2c0] sm:$0xf]
                %318 = vst [vmem:[%s228 + $0xb0] sm:$0xf] %v317
                %v319 = vld [vmem:[%s227 + $0x2d0] sm:$0xf]
                %320 = vst [vmem:[%s228 + $0xb4] sm:$0xf] %v319
                %v321 = vld [vmem:[%s227 + $0x2e0] sm:$0xf]
                %322 = vst [vmem:[%s228 + $0xb8] sm:$0xf] %v321
                %v323 = vld [vmem:[%s227 + $0x2f0] sm:$0xf]
                %324 = vst [vmem:[%s228 + $0xbc] sm:$0xf] %v323
                %v325 = vld [vmem:[%s227 + $0x300] sm:$0xf]
                %326 = vst [vmem:[%s228 + $0xc0] sm:$0xf] %v325
                %v327 = vld [vmem:[%s227 + $0x310] sm:$0xf]
                %328 = vst [vmem:[%s228 + $0xc4] sm:$0xf] %v327
                %v329 = vld [vmem:[%s227 + $0x320] sm:$0xf]
                %330 = vst [vmem:[%s228 + $0xc8] sm:$0xf] %v329
                %v331 = vld [vmem:[%s227 + $0x330] sm:$0xf]
                %332 = vst [vmem:[%s228 + $0xcc] sm:$0xf] %v331
                %v333 = vld [vmem:[%s227 + $0x340] sm:$0xf]
                %334 = vst [vmem:[%s228 + $0xd0] sm:$0xf] %v333
                %v335 = vld [vmem:[%s227 + $0x350] sm:$0xf]
                %336 = vst [vmem:[%s228 + $0xd4] sm:$0xf] %v335
                %v337 = vld [vmem:[%s227 + $0x360] sm:$0xf]
                %338 = vst [vmem:[%s228 + $0xd8] sm:$0xf] %v337
                %v339 = vld [vmem:[%s227 + $0x370] sm:$0xf]
                %340 = vst [vmem:[%s228 + $0xdc] sm:$0xf] %v339
                %v341 = vld [vmem:[%s227 + $0x380] sm:$0xf]
                %342 = vst [vmem:[%s228 + $0xe0] sm:$0xf] %v341
                %v343 = vld [vmem:[%s227 + $0x390] sm:$0xf]
                %344 = vst [vmem:[%s228 + $0xe4] sm:$0xf] %v343
                %v345 = vld [vmem:[%s227 + $0x3a0] sm:$0xf]
                %346 = vst [vmem:[%s228 + $0xe8] sm:$0xf] %v345
                %v347 = vld [vmem:[%s227 + $0x3b0] sm:$0xf]
                %348 = vst [vmem:[%s228 + $0xec] sm:$0xf] %v347
                %v349 = vld [vmem:[%s227 + $0x3c0] sm:$0xf]
                %350 = vst [vmem:[%s228 + $0xf0] sm:$0xf] %v349
                %v351 = vld [vmem:[%s227 + $0x3d0] sm:$0xf]
                %352 = vst [vmem:[%s228 + $0xf4] sm:$0xf] %v351
                %v353 = vld [vmem:[%s227 + $0x3e0] sm:$0xf]
                %354 = vst [vmem:[%s228 + $0xf8] sm:$0xf] %v353
                %v355 = vld [vmem:[%s227 + $0x3f0] sm:$0xf]
                %356 = vst [vmem:[%s228 + $0xfc] sm:$0xf] %v355
                %v357 = vld [vmem:[%s227 + $0x400] sm:$0xf]
                %358 = vst [vmem:[%s228 + $0x100] sm:$0xf] %v357
                %v359 = vld [vmem:[%s227 + $0x410] sm:$0xf]
                %360 = vst [vmem:[%s228 + $0x104] sm:$0xf] %v359
                %v361 = vld [vmem:[%s227 + $0x420] sm:$0xf]
                %362 = vst [vmem:[%s228 + $0x108] sm:$0xf] %v361
                %v363 = vld [vmem:[%s227 + $0x430] sm:$0xf]
                %364 = vst [vmem:[%s228 + $0x10c] sm:$0xf] %v363
                %v365 = vld [vmem:[%s227 + $0x440] sm:$0xf]
                %366 = vst [vmem:[%s228 + $0x110] sm:$0xf] %v365
                %v367 = vld [vmem:[%s227 + $0x450] sm:$0xf]
                %368 = vst [vmem:[%s228 + $0x114] sm:$0xf] %v367
                %v369 = vld [vmem:[%s227 + $0x460] sm:$0xf]
                %370 = vst [vmem:[%s228 + $0x118] sm:$0xf] %v369
                %v371 = vld [vmem:[%s227 + $0x470] sm:$0xf]
                %372 = vst [vmem:[%s228 + $0x11c] sm:$0xf] %v371
                %v373 = vld [vmem:[%s227 + $0x480] sm:$0xf]
                %374 = vst [vmem:[%s228 + $0x120] sm:$0xf] %v373
                %v375 = vld [vmem:[%s227 + $0x490] sm:$0xf]
                %376 = vst [vmem:[%s228 + $0x124] sm:$0xf] %v375
                %v377 = vld [vmem:[%s227 + $0x4a0] sm:$0xf]
                %378 = vst [vmem:[%s228 + $0x128] sm:$0xf] %v377
                %v379 = vld [vmem:[%s227 + $0x4b0] sm:$0xf]
                %380 = vst [vmem:[%s228 + $0x12c] sm:$0xf] %v379
                %v381 = vld [vmem:[%s227 + $0x4c0] sm:$0xf]
                %382 = vst [vmem:[%s228 + $0x130] sm:$0xf] %v381
                %v383 = vld [vmem:[%s227 + $0x4d0] sm:$0xf]
                %384 = vst [vmem:[%s228 + $0x134] sm:$0xf] %v383
                %v385 = vld [vmem:[%s227 + $0x4e0] sm:$0xf]
                %386 = vst [vmem:[%s228 + $0x138] sm:$0xf] %v385
                %v387 = vld [vmem:[%s227 + $0x4f0] sm:$0xf]
                %388 = vst [vmem:[%s228 + $0x13c] sm:$0xf] %v387
                %v389 = vld [vmem:[%s227 + $0x500] sm:$0xf]
                %390 = vst [vmem:[%s228 + $0x140] sm:$0xf] %v389
                %v391 = vld [vmem:[%s227 + $0x510] sm:$0xf]
                %392 = vst [vmem:[%s228 + $0x144] sm:$0xf] %v391
                %v393 = vld [vmem:[%s227 + $0x520] sm:$0xf]
                %394 = vst [vmem:[%s228 + $0x148] sm:$0xf] %v393
                %v395 = vld [vmem:[%s227 + $0x530] sm:$0xf]
                %396 = vst [vmem:[%s228 + $0x14c] sm:$0xf] %v395
                %v397 = vld [vmem:[%s227 + $0x540] sm:$0xf]
                %398 = vst [vmem:[%s228 + $0x150] sm:$0xf] %v397
                %v399 = vld [vmem:[%s227 + $0x550] sm:$0xf]
                %400 = vst [vmem:[%s228 + $0x154] sm:$0xf] %v399
                %v401 = vld [vmem:[%s227 + $0x560] sm:$0xf]
                %402 = vst [vmem:[%s228 + $0x158] sm:$0xf] %v401
                %v403 = vld [vmem:[%s227 + $0x570] sm:$0xf]
                %404 = vst [vmem:[%s228 + $0x15c] sm:$0xf] %v403
                %v405 = vld [vmem:[%s227 + $0x580] sm:$0xf]
                %406 = vst [vmem:[%s228 + $0x160] sm:$0xf] %v405
                %v407 = vld [vmem:[%s227 + $0x590] sm:$0xf]
                %408 = vst [vmem:[%s228 + $0x164] sm:$0xf] %v407
                %v409 = vld [vmem:[%s227 + $0x5a0] sm:$0xf]
                %410 = vst [vmem:[%s228 + $0x168] sm:$0xf] %v409
                %v411 = vld [vmem:[%s227 + $0x5b0] sm:$0xf]
                %412 = vst [vmem:[%s228 + $0x16c] sm:$0xf] %v411
                %v413 = vld [vmem:[%s227 + $0x5c0] sm:$0xf]
                %414 = vst [vmem:[%s228 + $0x170] sm:$0xf] %v413
                %v415 = vld [vmem:[%s227 + $0x5d0] sm:$0xf]
                %416 = vst [vmem:[%s228 + $0x174] sm:$0xf] %v415
                %v417 = vld [vmem:[%s227 + $0x5e0] sm:$0xf]
                %418 = vst [vmem:[%s228 + $0x178] sm:$0xf] %v417
                %v419 = vld [vmem:[%s227 + $0x5f0] sm:$0xf]
                %420 = vst [vmem:[%s228 + $0x17c] sm:$0xf] %v419
                %v421 = vld [vmem:[%s227 + $0x600] sm:$0xf]
                %422 = vst [vmem:[%s228 + $0x180] sm:$0xf] %v421
                %v423 = vld [vmem:[%s227 + $0x610] sm:$0xf]
                %424 = vst [vmem:[%s228 + $0x184] sm:$0xf] %v423
                %v425 = vld [vmem:[%s227 + $0x620] sm:$0xf]
                %426 = vst [vmem:[%s228 + $0x188] sm:$0xf] %v425
                %v427 = vld [vmem:[%s227 + $0x630] sm:$0xf]
                %428 = vst [vmem:[%s228 + $0x18c] sm:$0xf] %v427
                %v429 = vld [vmem:[%s227 + $0x640] sm:$0xf]
                %430 = vst [vmem:[%s228 + $0x190] sm:$0xf] %v429
                %v431 = vld [vmem:[%s227 + $0x650] sm:$0xf]
                %432 = vst [vmem:[%s228 + $0x194] sm:$0xf] %v431
                %v433 = vld [vmem:[%s227 + $0x660] sm:$0xf]
                %434 = vst [vmem:[%s228 + $0x198] sm:$0xf] %v433
                %v435 = vld [vmem:[%s227 + $0x670] sm:$0xf]
                %436 = vst [vmem:[%s228 + $0x19c] sm:$0xf] %v435
                %v437 = vld [vmem:[%s227 + $0x680] sm:$0xf]
                %438 = vst [vmem:[%s228 + $0x1a0] sm:$0xf] %v437
                %v439 = vld [vmem:[%s227 + $0x690] sm:$0xf]
                %440 = vst [vmem:[%s228 + $0x1a4] sm:$0xf] %v439
                %v441 = vld [vmem:[%s227 + $0x6a0] sm:$0xf]
                %442 = vst [vmem:[%s228 + $0x1a8] sm:$0xf] %v441
                %v443 = vld [vmem:[%s227 + $0x6b0] sm:$0xf]
                %444 = vst [vmem:[%s228 + $0x1ac] sm:$0xf] %v443
                %v445 = vld [vmem:[%s227 + $0x6c0] sm:$0xf]
                %446 = vst [vmem:[%s228 + $0x1b0] sm:$0xf] %v445
                %v447 = vld [vmem:[%s227 + $0x6d0] sm:$0xf]
                %448 = vst [vmem:[%s228 + $0x1b4] sm:$0xf] %v447
                %v449 = vld [vmem:[%s227 + $0x6e0] sm:$0xf]
                %450 = vst [vmem:[%s228 + $0x1b8] sm:$0xf] %v449
                %v451 = vld [vmem:[%s227 + $0x6f0] sm:$0xf]
                %452 = vst [vmem:[%s228 + $0x1bc] sm:$0xf] %v451
                %v453 = vld [vmem:[%s227 + $0x700] sm:$0xf]
                %454 = vst [vmem:[%s228 + $0x1c0] sm:$0xf] %v453
                %v455 = vld [vmem:[%s227 + $0x710] sm:$0xf]
                %456 = vst [vmem:[%s228 + $0x1c4] sm:$0xf] %v455
                %v457 = vld [vmem:[%s227 + $0x720] sm:$0xf]
                %458 = vst [vmem:[%s228 + $0x1c8] sm:$0xf] %v457
                %v459 = vld [vmem:[%s227 + $0x730] sm:$0xf]
                %460 = vst [vmem:[%s228 + $0x1cc] sm:$0xf] %v459
                %v461 = vld [vmem:[%s227 + $0x740] sm:$0xf]
                %462 = vst [vmem:[%s228 + $0x1d0] sm:$0xf] %v461
                %v463 = vld [vmem:[%s227 + $0x750] sm:$0xf]
                %464 = vst [vmem:[%s228 + $0x1d4] sm:$0xf] %v463
                %v465 = vld [vmem:[%s227 + $0x760] sm:$0xf]
                %466 = vst [vmem:[%s228 + $0x1d8] sm:$0xf] %v465
                %v467 = vld [vmem:[%s227 + $0x770] sm:$0xf]
                %468 = vst [vmem:[%s228 + $0x1dc] sm:$0xf] %v467
                %v469 = vld [vmem:[%s227 + $0x780] sm:$0xf]
                %470 = vst [vmem:[%s228 + $0x1e0] sm:$0xf] %v469
                %v471 = vld [vmem:[%s227 + $0x790] sm:$0xf]
                %472 = vst [vmem:[%s228 + $0x1e4] sm:$0xf] %v471
                %v473 = vld [vmem:[%s227 + $0x7a0] sm:$0xf]
                %474 = vst [vmem:[%s228 + $0x1e8] sm:$0xf] %v473
                %v475 = vld [vmem:[%s227 + $0x7b0] sm:$0xf]
                %476 = vst [vmem:[%s228 + $0x1ec] sm:$0xf] %v475
                %v477 = vld [vmem:[%s227 + $0x7c0] sm:$0xf]
                %478 = vst [vmem:[%s228 + $0x1f0] sm:$0xf] %v477
                %v479 = vld [vmem:[%s227 + $0x7d0] sm:$0xf]
                %480 = vst [vmem:[%s228 + $0x1f4] sm:$0xf] %v479
                %v481 = vld [vmem:[%s227 + $0x7e0] sm:$0xf]
                %482 = vst [vmem:[%s228 + $0x1f8] sm:$0xf] %v481
                %v483 = vld [vmem:[%s227 + $0x7f0] sm:$0xf]
                %484 = vst [vmem:[%s228 + $0x1fc] sm:$0xf] %v483
                %v485 = vld [vmem:[%s227 + $0x800] sm:$0xf]
                %486 = vst [vmem:[%s228 + $0x200] sm:$0xf] %v485
                %v487 = vld [vmem:[%s227 + $0x810] sm:$0xf]
                %488 = vst [vmem:[%s228 + $0x204] sm:$0xf] %v487
                %v489 = vld [vmem:[%s227 + $0x820] sm:$0xf]
                %490 = vst [vmem:[%s228 + $0x208] sm:$0xf] %v489
                %v491 = vld [vmem:[%s227 + $0x830] sm:$0xf]
                %492 = vst [vmem:[%s228 + $0x20c] sm:$0xf] %v491
                %v493 = vld [vmem:[%s227 + $0x840] sm:$0xf]
                %494 = vst [vmem:[%s228 + $0x210] sm:$0xf] %v493
                %v495 = vld [vmem:[%s227 + $0x850] sm:$0xf]
                %496 = vst [vmem:[%s228 + $0x214] sm:$0xf] %v495
                %v497 = vld [vmem:[%s227 + $0x860] sm:$0xf]
                %498 = vst [vmem:[%s228 + $0x218] sm:$0xf] %v497
                %v499 = vld [vmem:[%s227 + $0x870] sm:$0xf]
                %500 = vst [vmem:[%s228 + $0x21c] sm:$0xf] %v499
                %v501 = vld [vmem:[%s227 + $0x880] sm:$0xf]
                %502 = vst [vmem:[%s228 + $0x220] sm:$0xf] %v501
                %v503 = vld [vmem:[%s227 + $0x890] sm:$0xf]
                %504 = vst [vmem:[%s228 + $0x224] sm:$0xf] %v503
                %v505 = vld [vmem:[%s227 + $0x8a0] sm:$0xf]
                %506 = vst [vmem:[%s228 + $0x228] sm:$0xf] %v505
                %v507 = vld [vmem:[%s227 + $0x8b0] sm:$0xf]
                %508 = vst [vmem:[%s228 + $0x22c] sm:$0xf] %v507
                %v509 = vld [vmem:[%s227 + $0x8c0] sm:$0xf]
                %510 = vst [vmem:[%s228 + $0x230] sm:$0xf] %v509
                %v511 = vld [vmem:[%s227 + $0x8d0] sm:$0xf]
                %512 = vst [vmem:[%s228 + $0x234] sm:$0xf] %v511
                %v513 = vld [vmem:[%s227 + $0x8e0] sm:$0xf]
                %514 = vst [vmem:[%s228 + $0x238] sm:$0xf] %v513
                %v515 = vld [vmem:[%s227 + $0x8f0] sm:$0xf]
                %516 = vst [vmem:[%s228 + $0x23c] sm:$0xf] %v515
                %v517 = vld [vmem:[%s227 + $0x900] sm:$0xf]
                %518 = vst [vmem:[%s228 + $0x240] sm:$0xf] %v517
                %v519 = vld [vmem:[%s227 + $0x910] sm:$0xf]
                %520 = vst [vmem:[%s228 + $0x244] sm:$0xf] %v519
                %v521 = vld [vmem:[%s227 + $0x920] sm:$0xf]
                %522 = vst [vmem:[%s228 + $0x248] sm:$0xf] %v521
                %v523 = vld [vmem:[%s227 + $0x930] sm:$0xf]
                %524 = vst [vmem:[%s228 + $0x24c] sm:$0xf] %v523
                %v525 = vld [vmem:[%s227 + $0x940] sm:$0xf]
                %526 = vst [vmem:[%s228 + $0x250] sm:$0xf] %v525
                %v527 = vld [vmem:[%s227 + $0x950] sm:$0xf]
                %528 = vst [vmem:[%s228 + $0x254] sm:$0xf] %v527
                %v529 = vld [vmem:[%s227 + $0x960] sm:$0xf]
                %530 = vst [vmem:[%s228 + $0x258] sm:$0xf] %v529
                %v531 = vld [vmem:[%s227 + $0x970] sm:$0xf]
                %532 = vst [vmem:[%s228 + $0x25c] sm:$0xf] %v531
                %v533 = vld [vmem:[%s227 + $0x980] sm:$0xf]
                %534 = vst [vmem:[%s228 + $0x260] sm:$0xf] %v533
                %v535 = vld [vmem:[%s227 + $0x990] sm:$0xf]
                %536 = vst [vmem:[%s228 + $0x264] sm:$0xf] %v535
                %v537 = vld [vmem:[%s227 + $0x9a0] sm:$0xf]
                %538 = vst [vmem:[%s228 + $0x268] sm:$0xf] %v537
                %v539 = vld [vmem:[%s227 + $0x9b0] sm:$0xf]
                %540 = vst [vmem:[%s228 + $0x26c] sm:$0xf] %v539
                %v541 = vld [vmem:[%s227 + $0x9c0] sm:$0xf]
                %542 = vst [vmem:[%s228 + $0x270] sm:$0xf] %v541
                %v543 = vld [vmem:[%s227 + $0x9d0] sm:$0xf]
                %544 = vst [vmem:[%s228 + $0x274] sm:$0xf] %v543
                %v545 = vld [vmem:[%s227 + $0x9e0] sm:$0xf]
                %546 = vst [vmem:[%s228 + $0x278] sm:$0xf] %v545
                %v547 = vld [vmem:[%s227 + $0x9f0] sm:$0xf]
                %548 = vst [vmem:[%s228 + $0x27c] sm:$0xf] %v547
                %v549 = vld [vmem:[%s227 + $0xa00] sm:$0xf]
                %550 = vst [vmem:[%s228 + $0x280] sm:$0xf] %v549
                %v551 = vld [vmem:[%s227 + $0xa10] sm:$0xf]
                %552 = vst [vmem:[%s228 + $0x284] sm:$0xf] %v551
                %v553 = vld [vmem:[%s227 + $0xa20] sm:$0xf]
                %554 = vst [vmem:[%s228 + $0x288] sm:$0xf] %v553
                %v555 = vld [vmem:[%s227 + $0xa30] sm:$0xf]
                %556 = vst [vmem:[%s228 + $0x28c] sm:$0xf] %v555
                %v557 = vld [vmem:[%s227 + $0xa40] sm:$0xf]
                %558 = vst [vmem:[%s228 + $0x290] sm:$0xf] %v557
                %v559 = vld [vmem:[%s227 + $0xa50] sm:$0xf]
                %560 = vst [vmem:[%s228 + $0x294] sm:$0xf] %v559
                %v561 = vld [vmem:[%s227 + $0xa60] sm:$0xf]
                %562 = vst [vmem:[%s228 + $0x298] sm:$0xf] %v561
                %v563 = vld [vmem:[%s227 + $0xa70] sm:$0xf]
                %564 = vst [vmem:[%s228 + $0x29c] sm:$0xf] %v563
                %v565 = vld [vmem:[%s227 + $0xa80] sm:$0xf]
                %566 = vst [vmem:[%s228 + $0x2a0] sm:$0xf] %v565
                %v567 = vld [vmem:[%s227 + $0xa90] sm:$0xf]
                %568 = vst [vmem:[%s228 + $0x2a4] sm:$0xf] %v567
                %v569 = vld [vmem:[%s227 + $0xaa0] sm:$0xf]
                %570 = vst [vmem:[%s228 + $0x2a8] sm:$0xf] %v569
                %v571 = vld [vmem:[%s227 + $0xab0] sm:$0xf]
                %572 = vst [vmem:[%s228 + $0x2ac] sm:$0xf] %v571
                %v573 = vld [vmem:[%s227 + $0xac0] sm:$0xf]
                %574 = vst [vmem:[%s228 + $0x2b0] sm:$0xf] %v573
                %v575 = vld [vmem:[%s227 + $0xad0] sm:$0xf]
                %576 = vst [vmem:[%s228 + $0x2b4] sm:$0xf] %v575
                %v577 = vld [vmem:[%s227 + $0xae0] sm:$0xf]
                %578 = vst [vmem:[%s228 + $0x2b8] sm:$0xf] %v577
                %v579 = vld [vmem:[%s227 + $0xaf0] sm:$0xf]
                %580 = vst [vmem:[%s228 + $0x2bc] sm:$0xf] %v579
                %v581 = vld [vmem:[%s227 + $0xb00] sm:$0xf]
                %582 = vst [vmem:[%s228 + $0x2c0] sm:$0xf] %v581
                %v583 = vld [vmem:[%s227 + $0xb10] sm:$0xf]
                %584 = vst [vmem:[%s228 + $0x2c4] sm:$0xf] %v583
                %v585 = vld [vmem:[%s227 + $0xb20] sm:$0xf]
                %586 = vst [vmem:[%s228 + $0x2c8] sm:$0xf] %v585
                %v587 = vld [vmem:[%s227 + $0xb30] sm:$0xf]
                %588 = vst [vmem:[%s228 + $0x2cc] sm:$0xf] %v587
                %v589 = vld [vmem:[%s227 + $0xb40] sm:$0xf]
                %590 = vst [vmem:[%s228 + $0x2d0] sm:$0xf] %v589
                %v591 = vld [vmem:[%s227 + $0xb50] sm:$0xf]
                %592 = vst [vmem:[%s228 + $0x2d4] sm:$0xf] %v591
                %v593 = vld [vmem:[%s227 + $0xb60] sm:$0xf]
                %594 = vst [vmem:[%s228 + $0x2d8] sm:$0xf] %v593
                %v595 = vld [vmem:[%s227 + $0xb70] sm:$0xf]
                %596 = vst [vmem:[%s228 + $0x2dc] sm:$0xf] %v595
                %v597 = vld [vmem:[%s227 + $0xb80] sm:$0xf]
                %598 = vst [vmem:[%s228 + $0x2e0] sm:$0xf] %v597
                %v599 = vld [vmem:[%s227 + $0xb90] sm:$0xf]
                %600 = vst [vmem:[%s228 + $0x2e4] sm:$0xf] %v599
                %v601 = vld [vmem:[%s227 + $0xba0] sm:$0xf]
                %602 = vst [vmem:[%s228 + $0x2e8] sm:$0xf] %v601
                %v603 = vld [vmem:[%s227 + $0xbb0] sm:$0xf]
                %604 = vst [vmem:[%s228 + $0x2ec] sm:$0xf] %v603
                %v605 = vld [vmem:[%s227 + $0xbc0] sm:$0xf]
                %606 = vst [vmem:[%s228 + $0x2f0] sm:$0xf] %v605
                %v607 = vld [vmem:[%s227 + $0xbd0] sm:$0xf]
                %608 = vst [vmem:[%s228 + $0x2f4] sm:$0xf] %v607
                %v609 = vld [vmem:[%s227 + $0xbe0] sm:$0xf]
                %610 = vst [vmem:[%s228 + $0x2f8] sm:$0xf] %v609
                %v611 = vld [vmem:[%s227 + $0xbf0] sm:$0xf]
                %612 = vst [vmem:[%s228 + $0x2fc] sm:$0xf] %v611
                %v613 = vld [vmem:[%s227 + $0xc00] sm:$0xf]
                %614 = vst [vmem:[%s228 + $0x300] sm:$0xf] %v613
                %v615 = vld [vmem:[%s227 + $0xc10] sm:$0xf]
                %616 = vst [vmem:[%s228 + $0x304] sm:$0xf] %v615
                %v617 = vld [vmem:[%s227 + $0xc20] sm:$0xf]
                %618 = vst [vmem:[%s228 + $0x308] sm:$0xf] %v617
                %v619 = vld [vmem:[%s227 + $0xc30] sm:$0xf]
                %620 = vst [vmem:[%s228 + $0x30c] sm:$0xf] %v619
                %v621 = vld [vmem:[%s227 + $0xc40] sm:$0xf]
                %622 = vst [vmem:[%s228 + $0x310] sm:$0xf] %v621
                %v623 = vld [vmem:[%s227 + $0xc50] sm:$0xf]
                %624 = vst [vmem:[%s228 + $0x314] sm:$0xf] %v623
                %v625 = vld [vmem:[%s227 + $0xc60] sm:$0xf]
                %626 = vst [vmem:[%s228 + $0x318] sm:$0xf] %v625
                %v627 = vld [vmem:[%s227 + $0xc70] sm:$0xf]
                %628 = vst [vmem:[%s228 + $0x31c] sm:$0xf] %v627
                %v629 = vld [vmem:[%s227 + $0xc80] sm:$0xf]
                %630 = vst [vmem:[%s228 + $0x320] sm:$0xf] %v629
                %v631 = vld [vmem:[%s227 + $0xc90] sm:$0xf]
                %632 = vst [vmem:[%s228 + $0x324] sm:$0xf] %v631
                %v633 = vld [vmem:[%s227 + $0xca0] sm:$0xf]
                %634 = vst [vmem:[%s228 + $0x328] sm:$0xf] %v633
                %v635 = vld [vmem:[%s227 + $0xcb0] sm:$0xf]
                %636 = vst [vmem:[%s228 + $0x32c] sm:$0xf] %v635
                %v637 = vld [vmem:[%s227 + $0xcc0] sm:$0xf]
                %638 = vst [vmem:[%s228 + $0x330] sm:$0xf] %v637
                %v639 = vld [vmem:[%s227 + $0xcd0] sm:$0xf]
                %640 = vst [vmem:[%s228 + $0x334] sm:$0xf] %v639
                %v641 = vld [vmem:[%s227 + $0xce0] sm:$0xf]
                %642 = vst [vmem:[%s228 + $0x338] sm:$0xf] %v641
                %v643 = vld [vmem:[%s227 + $0xcf0] sm:$0xf]
                %644 = vst [vmem:[%s228 + $0x33c] sm:$0xf] %v643
              $region45: #{net_forward.7} parent=39 // loop_footer
                %s226 = sadd.s32 1, %s222
              $region46: #{net_forward.7} parent=39 // loop_footer_branch
                %221 = sbr.rel target = $region42
              $region47: #{net_forward.7} parent=39 // loop_exit
                _
            $region40: #{net_forward.7} parent=31 // pred_fallthru
              _
          $region32: #{net_forward.7} parent=27 // pred_fallthru
            _
          %1080 = vnop
        $region28: #{net_forward.7} parent=19 // pred_fallthru
          _
        // Predicated region
        $region66: #{net_forward.7} parent=19 // pred_check
          %p1081 = pneg %p98
        $region67: #{net_forward.7} parent=19 // pred_check_branch
          %1083 = sbr.rel (%p1081) target = $region69
        $region68: #{net_forward.7} parent=19 // pred_region
          %p1084 = scmp.lt.s32.totalorder %s19, 3
          %s1085 = scalar_select %p1084, %s19, 3
          %s1086 = scalar_lea.vmem %s2, %s1085
        $region69: #{net_forward.7} parent=19 // pred_fallthru
          _
        // Predicated region
        $region70: #{net_forward.7} parent=19 // pred_check
          %p1087 = pneg %p124
        $region71: #{net_forward.7} parent=19 // pred_check_branch
          %1089 = sbr.rel (%p1087) target = $region73
        $region72: #{net_forward.7} parent=19 // pred_region
          %s1090 = smul.u32 16, %s19
          %p1091 = scmp.lt.s32.totalorder %s1090, 63
          %s1092 = scalar_select %p1091, %s1090, 63
          %s1093 = smul.addr %s1092, 4
          %s1094 = scalar_lea.vmem %s3, %s1093
          %s1095 = smul.u32 16, %s19
        $region73: #{net_forward.7} parent=19 // pred_fallthru
          _
      $region20: #{net_forward.7} parent=5 // pred_fallthru
        _
      %p1096 = scmp.le.s32.totalorder 1, %s12
      %p1097 = scmp.lt.s32.totalorder %s12, 9
      %p1098 = pnand %p1096, %p1097
      %p1099 = pneg %p1098
      // Predicated region
      $region74: #{net_forward.7} parent=5 // pred_check
        _
      $region75: #{net_forward.7} parent=5 // pred_check_branch
        %1101 = sbr.rel (%p1098) target = $region77
      $region76: #{net_forward.7} parent=5 // pred_region
        %s1102 = ssub.s32 %s12, 1
        %s1103 = sand.u32 %s65, 1
        %s1104 = sand.u32 %s65, 1
        %s1105 = smul.addr %s1104, 832
        %s1106 = scalar_lea.vmem [#allocation4], %s1105
        // Predicated region
        $region78: #{net_forward.7} parent=76 // pred_check
          %p1107 = pneg %p78
        $region79: #{net_forward.7} parent=76 // pred_check_branch
          %1109 = sbr.rel (%p1107) target = $region81
        $region80: #{net_forward.7} parent=76 // pred_region
          _
        $region81: #{net_forward.7} parent=76 // pred_fallthru
          _
        %s1110 = smul.u32 13, %s22
        %p1111 = scmp.lt.s32.totalorder %s1110, 25
        %s1112 = scalar_select %p1111, %s1110, 25
        %s1113 = scalar_lea.vmem %s0, %s1112
        %p1114 = pneg %p50
        %p1115 = pneg %p47
        %s1116 = sand.u32 %s65, 1
        %s1117 = sand.u32 %s65, 1
        %s1118 = smul.addr %s1117, 832
        %s1119 = scalar_lea.vmem [#allocation4], %s1118
        %p1120 = pneg %p78
        %p1121 = pneg %p75
        %p1122 = scmp.lt.s32.totalorder %s21, 3
        %s1123 = scalar_select %p1122, %s21, 3
        %s1124 = scalar_lea.vmem %s2, %s1123
        %p1125 = pneg %p104
        %p1126 = pneg %p101
        %s1127 = smul.u32 16, %s21
        %p1128 = scmp.lt.s32.totalorder %s1127, 63
        %s1129 = scalar_select %p1128, %s1127, 63
        %s1130 = smul.addr %s1129, 4
        %s1131 = scalar_lea.vmem %s3, %s1130
        %p1132 = pneg %p130
        %p1133 = pneg %p127
        %p1134 = pneg %p151
        %p1135 = pneg %p148
        %p1136 = pneg %p172
        %p1137 = pneg %p169
        %s1138 = smul.u32 13, %s22
        %p1139 = scmp.lt.s32.totalorder %s1138, 25
        %s1140 = scalar_select %p1139, %s1138, 25
        %s1141 = scalar_lea.vmem %s0, %s1140
        %s1142 = smul.u32 13, %s22
        %s1143 = smul.u32 208, %s22
        %p1144 = scmp.lt.s32.totalorder %s21, 3
        %s1145 = scalar_select %p1144, %s21, 3
        %s1146 = scalar_lea.vmem %s2, %s1145
        %s1147 = smul.u32 16, %s21
        %p1148 = scmp.lt.s32.totalorder %s1147, 63
        %s1149 = scalar_select %p1148, %s1147, 63
        %s1150 = smul.addr %s1149, 4
        %s1151 = scalar_lea.vmem %s3, %s1150
        %s1152 = smul.u32 16, %s21
        %p1154 = scmp.eq.s32.totalorder %s22, 1
        %p1155 = scmp.eq.s32.totalorder %s21, 3
        %p1156 = scmp.eq.s32.totalorder %s21, 0
        %p1157 = scmp.eq.s32.totalorder %s22, 0
        %p1158 = pnand %p1156, %p1157
        %p1159 = pneg %p1158
        // Predicated region
        $region82: #{net_forward.7} parent=76 // pred_check
          _
        $region83: #{net_forward.7} parent=76 // pred_check_branch
          %1161 = sbr.rel (%p1158) target = $region85
        $region84: #{net_forward.7} parent=76 // pred_region
          %1162 = vst [vmem:[#allocation3] sm:$0x3] 0.0
        $region85: #{net_forward.7} parent=76 // pred_fallthru
          _
        // Predicated region
        $region86: #{net_forward.7} parent=76 // pred_check
          %p1163 = pneg %p1157
        $region87: #{net_forward.7} parent=76 // pred_check_branch
          %1165 = sbr.rel (%p1163) target = $region89
        $region88: #{net_forward.7} parent=76 // pred_region
          %1166 = vst [vmem:[#allocation2] sm:$0x3] 0.0
        $region89: #{net_forward.7} parent=76 // pred_fallthru
          _
        %v1167 = vld [vmem:[#allocation2] sm:$0x3]
        %v1168 = vld [vmem:[%s1141] sm:$0xff]
        %v1169 = vld [vmem:[%s1141 + $0x8] sm:$0x1f]
        %v1170 = vld [vmem:[%s1106] sm:$0xf]
        %v1171 = vld [vmem:[%s1106 + $0x4] sm:$0xf]
        %v1172 = vld [vmem:[%s1106 + $0x8] sm:$0xf]
        %v1173 = vld [vmem:[%s1106 + $0xc] sm:$0xf]
        %v1174 = vld [vmem:[%s1106 + $0x10] sm:$0xf]
        %v1175 = vld [vmem:[%s1106 + $0x14] sm:$0xf]
        %v1176 = vld [vmem:[%s1106 + $0x18] sm:$0xf]
        %v1177 = vld [vmem:[%s1106 + $0x1c] sm:$0xf]
        %v1178 = vld [vmem:[%s1106 + $0x20] sm:$0xf]
        %v1179 = vld [vmem:[%s1106 + $0x24] sm:$0xf]
        %v1180 = vld [vmem:[%s1106 + $0x28] sm:$0xf]
        %v1181 = vld [vmem:[%s1106 + $0x2c] sm:$0xf]
        %v1182 = vld [vmem:[%s1106 + $0x30] sm:$0xf]
        %v1183 = vld [vmem:[%s1106 + $0x34] sm:$0xf]
        %v1184 = vld [vmem:[%s1106 + $0x38] sm:$0xf]
        %v1185 = vld [vmem:[%s1106 + $0x3c] sm:$0xf]
        %v1186 = vld [vmem:[%s1106 + $0x40] sm:$0xf]
        %v1187 = vld [vmem:[%s1106 + $0x44] sm:$0xf]
        %v1188 = vld [vmem:[%s1106 + $0x48] sm:$0xf]
        %v1189 = vld [vmem:[%s1106 + $0x4c] sm:$0xf]
        %v1190 = vld [vmem:[%s1106 + $0x50] sm:$0xf]
        %v1191 = vld [vmem:[%s1106 + $0x54] sm:$0xf]
        %v1192 = vld [vmem:[%s1106 + $0x58] sm:$0xf]
        %v1193 = vld [vmem:[%s1106 + $0x5c] sm:$0xf]
        %v1194 = vld [vmem:[%s1106 + $0x60] sm:$0xf]
        %v1195 = vld [vmem:[%s1106 + $0x64] sm:$0xf]
        %v1196 = vld [vmem:[%s1106 + $0x68] sm:$0xf]
        %v1197 = vld [vmem:[%s1106 + $0x6c] sm:$0xf]
        %v1198 = vld [vmem:[%s1106 + $0x70] sm:$0xf]
        %v1199 = vld [vmem:[%s1106 + $0x74] sm:$0xf]
        %v1200 = vld [vmem:[%s1106 + $0x78] sm:$0xf]
        %v1201 = vld [vmem:[%s1106 + $0x7c] sm:$0xf]
        %v1202 = vld [vmem:[%s1106 + $0x80] sm:$0xf]
        %v1203 = vld [vmem:[%s1106 + $0x84] sm:$0xf]
        %v1204 = vld [vmem:[%s1106 + $0x88] sm:$0xf]
        %v1205 = vld [vmem:[%s1106 + $0x8c] sm:$0xf]
        %v1206 = vld [vmem:[%s1106 + $0x90] sm:$0xf]
        %v1207 = vld [vmem:[%s1106 + $0x94] sm:$0xf]
        %v1208 = vld [vmem:[%s1106 + $0x98] sm:$0xf]
        %v1209 = vld [vmem:[%s1106 + $0x9c] sm:$0xf]
        %v1210 = vld [vmem:[%s1106 + $0xa0] sm:$0xf]
        %v1211 = vld [vmem:[%s1106 + $0xa4] sm:$0xf]
        %v1212 = vld [vmem:[%s1106 + $0xa8] sm:$0xf]
        %v1213 = vld [vmem:[%s1106 + $0xac] sm:$0xf]
        %v1214 = vld [vmem:[%s1106 + $0xb0] sm:$0xf]
        %v1215 = vld [vmem:[%s1106 + $0xb4] sm:$0xf]
        %v1216 = vld [vmem:[%s1106 + $0xb8] sm:$0xf]
        %v1217 = vld [vmem:[%s1106 + $0xbc] sm:$0xf]
        %v1218 = vld [vmem:[%s1106 + $0xc0] sm:$0xf]
        %v1219 = vld [vmem:[%s1106 + $0xc4] sm:$0xf]
        %v1220 = vld [vmem:[%s1106 + $0xc8] sm:$0xf]
        %v1221 = vld [vmem:[%s1106 + $0xcc] sm:$0xf]
        %v1222 = vld [vmem:[%s1106 + $0xd0] sm:$0xf]
        %v1223 = vld [vmem:[%s1106 + $0xd4] sm:$0xf]
        %v1224 = vld [vmem:[%s1106 + $0xd8] sm:$0xf]
        %v1225 = vld [vmem:[%s1106 + $0xdc] sm:$0xf]
        %v1226 = vld [vmem:[%s1106 + $0xe0] sm:$0xf]
        %v1227 = vld [vmem:[%s1106 + $0xe4] sm:$0xf]
        %v1228 = vld [vmem:[%s1106 + $0xe8] sm:$0xf]
        %v1229 = vld [vmem:[%s1106 + $0xec] sm:$0xf]
        %v1230 = vld [vmem:[%s1106 + $0xf0] sm:$0xf]
        %v1231 = vld [vmem:[%s1106 + $0xf4] sm:$0xf]
        %v1232 = vld [vmem:[%s1106 + $0xf8] sm:$0xf]
        %v1233 = vld [vmem:[%s1106 + $0xfc] sm:$0xf]
        %v1234 = vld [vmem:[%s1106 + $0x100] sm:$0xf]
        %v1235 = vld [vmem:[%s1106 + $0x104] sm:$0xf]
        %v1236 = vld [vmem:[%s1106 + $0x108] sm:$0xf]
        %v1237 = vld [vmem:[%s1106 + $0x10c] sm:$0xf]
        %v1238 = vld [vmem:[%s1106 + $0x110] sm:$0xf]
        %v1239 = vld [vmem:[%s1106 + $0x114] sm:$0xf]
        %v1240 = vld [vmem:[%s1106 + $0x118] sm:$0xf]
        %v1241 = vld [vmem:[%s1106 + $0x11c] sm:$0xf]
        %v1242 = vld [vmem:[%s1106 + $0x120] sm:$0xf]
        %v1243 = vld [vmem:[%s1106 + $0x124] sm:$0xf]
        %v1244 = vld [vmem:[%s1106 + $0x128] sm:$0xf]
        %v1245 = vld [vmem:[%s1106 + $0x12c] sm:$0xf]
        %v1246 = vld [vmem:[%s1106 + $0x130] sm:$0xf]
        %v1247 = vld [vmem:[%s1106 + $0x134] sm:$0xf]
        %v1248 = vld [vmem:[%s1106 + $0x138] sm:$0xf]
        %v1249 = vld [vmem:[%s1106 + $0x13c] sm:$0xf]
        %v1250 = vld [vmem:[%s1106 + $0x140] sm:$0xf]
        %v1251 = vld [vmem:[%s1106 + $0x144] sm:$0xf]
        %v1252 = vld [vmem:[%s1106 + $0x148] sm:$0xf]
        %v1253 = vld [vmem:[%s1106 + $0x14c] sm:$0xf]
        %v1254 = vld [vmem:[%s1106 + $0x150] sm:$0xf]
        %v1255 = vld [vmem:[%s1106 + $0x154] sm:$0xf]
        %v1256 = vld [vmem:[%s1106 + $0x158] sm:$0xf]
        %v1257 = vld [vmem:[%s1106 + $0x15c] sm:$0xf]
        %v1258 = vld [vmem:[%s1106 + $0x160] sm:$0xf]
        %v1259 = vld [vmem:[%s1106 + $0x164] sm:$0xf]
        %v1260 = vld [vmem:[%s1106 + $0x168] sm:$0xf]
        %v1261 = vld [vmem:[%s1106 + $0x16c] sm:$0xf]
        %v1262 = vld [vmem:[%s1106 + $0x170] sm:$0xf]
        %v1263 = vld [vmem:[%s1106 + $0x174] sm:$0xf]
        %v1264 = vld [vmem:[%s1106 + $0x178] sm:$0xf]
        %v1265 = vld [vmem:[%s1106 + $0x17c] sm:$0xf]
        %v1266 = vld [vmem:[%s1106 + $0x180] sm:$0xf]
        %v1267 = vld [vmem:[%s1106 + $0x184] sm:$0xf]
        %v1268 = vld [vmem:[%s1106 + $0x188] sm:$0xf]
        %v1269 = vld [vmem:[%s1106 + $0x18c] sm:$0xf]
        %v1270 = vld [vmem:[%s1106 + $0x190] sm:$0xf]
        %v1271 = vld [vmem:[%s1106 + $0x194] sm:$0xf]
        %v1272 = vld [vmem:[%s1106 + $0x198] sm:$0xf]
        %v1273 = vld [vmem:[%s1106 + $0x19c] sm:$0xf]
        %v1274 = vld [vmem:[%s1106 + $0x1a0] sm:$0xf]
        %v1275 = vld [vmem:[%s1106 + $0x1a4] sm:$0xf]
        %v1276 = vld [vmem:[%s1106 + $0x1a8] sm:$0xf]
        %v1277 = vld [vmem:[%s1106 + $0x1ac] sm:$0xf]
        %v1278 = vld [vmem:[%s1106 + $0x1b0] sm:$0xf]
        %v1279 = vld [vmem:[%s1106 + $0x1b4] sm:$0xf]
        %v1280 = vld [vmem:[%s1106 + $0x1b8] sm:$0xf]
        %v1281 = vld [vmem:[%s1106 + $0x1bc] sm:$0xf]
        %v1282 = vld [vmem:[%s1106 + $0x1c0] sm:$0xf]
        %v1283 = vld [vmem:[%s1106 + $0x1c4] sm:$0xf]
        %v1284 = vld [vmem:[%s1106 + $0x1c8] sm:$0xf]
        %v1285 = vld [vmem:[%s1106 + $0x1cc] sm:$0xf]
        %v1286 = vld [vmem:[%s1106 + $0x1d0] sm:$0xf]
        %v1287 = vld [vmem:[%s1106 + $0x1d4] sm:$0xf]
        %v1288 = vld [vmem:[%s1106 + $0x1d8] sm:$0xf]
        %v1289 = vld [vmem:[%s1106 + $0x1dc] sm:$0xf]
        %v1290 = vld [vmem:[%s1106 + $0x1e0] sm:$0xf]
        %v1291 = vld [vmem:[%s1106 + $0x1e4] sm:$0xf]
        %v1292 = vld [vmem:[%s1106 + $0x1e8] sm:$0xf]
        %v1293 = vld [vmem:[%s1106 + $0x1ec] sm:$0xf]
        %v1294 = vld [vmem:[%s1106 + $0x1f0] sm:$0xf]
        %v1295 = vld [vmem:[%s1106 + $0x1f4] sm:$0xf]
        %v1296 = vld [vmem:[%s1106 + $0x1f8] sm:$0xf]
        %v1297 = vld [vmem:[%s1106 + $0x1fc] sm:$0xf]
        %v1298 = vld [vmem:[%s1106 + $0x200] sm:$0xf]
        %v1299 = vld [vmem:[%s1106 + $0x204] sm:$0xf]
        %v1300 = vld [vmem:[%s1106 + $0x208] sm:$0xf]
        %v1301 = vld [vmem:[%s1106 + $0x20c] sm:$0xf]
        %v1302 = vld [vmem:[%s1106 + $0x210] sm:$0xf]
        %v1303 = vld [vmem:[%s1106 + $0x214] sm:$0xf]
        %v1304 = vld [vmem:[%s1106 + $0x218] sm:$0xf]
        %v1305 = vld [vmem:[%s1106 + $0x21c] sm:$0xf]
        %v1306 = vld [vmem:[%s1106 + $0x220] sm:$0xf]
        %v1307 = vld [vmem:[%s1106 + $0x224] sm:$0xf]
        %v1308 = vld [vmem:[%s1106 + $0x228] sm:$0xf]
        %v1309 = vld [vmem:[%s1106 + $0x22c] sm:$0xf]
        %v1310 = vld [vmem:[%s1106 + $0x230] sm:$0xf]
        %v1311 = vld [vmem:[%s1106 + $0x234] sm:$0xf]
        %v1312 = vld [vmem:[%s1106 + $0x238] sm:$0xf]
        %v1313 = vld [vmem:[%s1106 + $0x23c] sm:$0xf]
        %v1314 = vld [vmem:[%s1106 + $0x240] sm:$0xf]
        %v1315 = vld [vmem:[%s1106 + $0x244] sm:$0xf]
        %v1316 = vld [vmem:[%s1106 + $0x248] sm:$0xf]
        %v1317 = vld [vmem:[%s1106 + $0x24c] sm:$0xf]
        %v1318 = vld [vmem:[%s1106 + $0x250] sm:$0xf]
        %v1319 = vld [vmem:[%s1106 + $0x254] sm:$0xf]
        %v1320 = vld [vmem:[%s1106 + $0x258] sm:$0xf]
        %v1321 = vld [vmem:[%s1106 + $0x25c] sm:$0xf]
        %v1322 = vld [vmem:[%s1106 + $0x260] sm:$0xf]
        %v1323 = vld [vmem:[%s1106 + $0x264] sm:$0xf]
        %v1324 = vld [vmem:[%s1106 + $0x268] sm:$0xf]
        %v1325 = vld [vmem:[%s1106 + $0x26c] sm:$0xf]
        %v1326 = vld [vmem:[%s1106 + $0x270] sm:$0xf]
        %v1327 = vld [vmem:[%s1106 + $0x274] sm:$0xf]
        %v1328 = vld [vmem:[%s1106 + $0x278] sm:$0xf]
        %v1329 = vld [vmem:[%s1106 + $0x27c] sm:$0xf]
        %v1330 = vld [vmem:[%s1106 + $0x280] sm:$0xf]
        %v1331 = vld [vmem:[%s1106 + $0x284] sm:$0xf]
        %v1332 = vld [vmem:[%s1106 + $0x288] sm:$0xf]
        %v1333 = vld [vmem:[%s1106 + $0x28c] sm:$0xf]
        %v1334 = vld [vmem:[%s1106 + $0x290] sm:$0xf]
        %v1335 = vld [vmem:[%s1106 + $0x294] sm:$0xf]
        %v1336 = vld [vmem:[%s1106 + $0x298] sm:$0xf]
        %v1337 = vld [vmem:[%s1106 + $0x29c] sm:$0xf]
        %v1338 = vld [vmem:[%s1106 + $0x2a0] sm:$0xf]
        %v1339 = vld [vmem:[%s1106 + $0x2a4] sm:$0xf]
        %v1340 = vld [vmem:[%s1106 + $0x2a8] sm:$0xf]
        %v1341 = vld [vmem:[%s1106 + $0x2ac] sm:$0xf]
        %v1342 = vld [vmem:[%s1106 + $0x2b0] sm:$0xf]
        %v1343 = vld [vmem:[%s1106 + $0x2b4] sm:$0xf]
        %v1344 = vld [vmem:[%s1106 + $0x2b8] sm:$0xf]
        %v1345 = vld [vmem:[%s1106 + $0x2bc] sm:$0xf]
        %v1346 = vld [vmem:[%s1106 + $0x2c0] sm:$0xf]
        %v1347 = vld [vmem:[%s1106 + $0x2c4] sm:$0xf]
        %v1348 = vld [vmem:[%s1106 + $0x2c8] sm:$0xf]
        %v1349 = vld [vmem:[%s1106 + $0x2cc] sm:$0xf]
        %v1350 = vld [vmem:[%s1106 + $0x2d0] sm:$0xf]
        %v1351 = vld [vmem:[%s1106 + $0x2d4] sm:$0xf]
        %v1352 = vld [vmem:[%s1106 + $0x2d8] sm:$0xf]
        %v1353 = vld [vmem:[%s1106 + $0x2dc] sm:$0xf]
        %v1354 = vld [vmem:[%s1106 + $0x2e0] sm:$0xf]
        %v1355 = vld [vmem:[%s1106 + $0x2e4] sm:$0xf]
        %v1356 = vld [vmem:[%s1106 + $0x2e8] sm:$0xf]
        %v1357 = vld [vmem:[%s1106 + $0x2ec] sm:$0xf]
        %v1358 = vld [vmem:[%s1106 + $0x2f0] sm:$0xf]
        %v1359 = vld [vmem:[%s1106 + $0x2f4] sm:$0xf]
        %v1360 = vld [vmem:[%s1106 + $0x2f8] sm:$0xf]
        %v1361 = vld [vmem:[%s1106 + $0x2fc] sm:$0xf]
        %v1362 = vld [vmem:[%s1106 + $0x300] sm:$0xf]
        %v1363 = vld [vmem:[%s1106 + $0x304] sm:$0xf]
        %v1364 = vld [vmem:[%s1106 + $0x308] sm:$0xf]
        %v1365 = vld [vmem:[%s1106 + $0x30c] sm:$0xf]
        %v1366 = vld [vmem:[%s1106 + $0x310] sm:$0xf]
        %v1367 = vld [vmem:[%s1106 + $0x314] sm:$0xf]
        %v1368 = vld [vmem:[%s1106 + $0x318] sm:$0xf]
        %v1369 = vld [vmem:[%s1106 + $0x31c] sm:$0xf]
        %v1370 = vld [vmem:[%s1106 + $0x320] sm:$0xf]
        %v1371 = vld [vmem:[%s1106 + $0x324] sm:$0xf]
        %v1372 = vld [vmem:[%s1106 + $0x328] sm:$0xf]
        %v1373 = vld [vmem:[%s1106 + $0x32c] sm:$0xf]
        %v1374 = vld [vmem:[%s1106 + $0x330] sm:$0xf]
        %v1375 = vld [vmem:[%s1106 + $0x334] sm:$0xf]
        %v1376 = vld [vmem:[%s1106 + $0x338] sm:$0xf]
        %v1377 = vld [vmem:[%s1106 + $0x33c] sm:$0xf]
        %v1380 = vcombine.high %v1168, %v1168
        %v1382 = vunpack.c.l.s4 1966171168
        %v1383 = vunpack.c.0.s8 %v1382
        %v1384 = vlaneseq
        %v1385 = vshrl.u32 %v1384, 7
        %v1386 = vsub.s32 %v1383, %v1385
        %v1387 = vrot.slane %v1168, %v1386
        %v1389 = vunpack.c.l.s4 1966171168
        %v1390 = vunpack.c.0.s8 %v1389
        %v1391 = vlaneseq
        %v1392 = vshrl.u32 %v1391, 7
        %v1393 = vsub.s32 %v1390, %v1392
        %v1394 = vrot.slane %v1380, %v1393
        %v1395 = vcombine.high %v1387, %v1387
        %v1396 = vcombine.high %v1394, %v1394
        %v1398 = vunpack.c.l.s4 1966171168
        %v1399 = vunpack.c.0.s8 %v1398
        %v1400 = vlaneseq
        %v1401 = vshrl.u32 %v1400, 7
        %v1402 = vsub.s32 %v1399, %v1401
        %v1403 = vrot.slane %v1387, %v1402
        %v1405 = vunpack.c.l.s4 1966171168
        %v1406 = vunpack.c.0.s8 %v1405
        %v1407 = vlaneseq
        %v1408 = vshrl.u32 %v1407, 7
        %v1409 = vsub.s32 %v1406, %v1408
        %v1410 = vrot.slane %v1394, %v1409
        %v1412 = vunpack.c.l.s4 1966171168
        %v1413 = vunpack.c.0.s8 %v1412
        %v1414 = vlaneseq
        %v1415 = vshrl.u32 %v1414, 7
        %v1416 = vsub.s32 %v1413, %v1415
        %v1417 = vrot.slane %v1395, %v1416
        %v1419 = vunpack.c.l.s4 1966171168
        %v1420 = vunpack.c.0.s8 %v1419
        %v1421 = vlaneseq
        %v1422 = vshrl.u32 %v1421, 7
        %v1423 = vsub.s32 %v1420, %v1422
        %v1424 = vrot.slane %v1396, %v1423
        %v1425 = vcombine.high %v1403, %v1403
        %v1426 = vcombine.high %v1410, %v1410
        %v1427 = vcombine.high %v1417, %v1417
        %v1428 = vcombine.high %v1424, %v1424
        %v1429 = vcombine.high %v1169, %v1169
        %v1431 = vunpack.c.l.s4 1966171168
        %v1432 = vunpack.c.0.s8 %v1431
        %v1433 = vlaneseq
        %v1434 = vshrl.u32 %v1433, 7
        %v1435 = vsub.s32 %v1432, %v1434
        %v1436 = vrot.slane %v1169, %v1435
        %v1438 = vunpack.c.l.s4 1966171168
        %v1439 = vunpack.c.0.s8 %v1438
        %v1440 = vlaneseq
        %v1441 = vshrl.u32 %v1440, 7
        %v1442 = vsub.s32 %v1439, %v1441
        %v1443 = vrot.slane %v1429, %v1442
        %v1444 = vcombine.high %v1436, %v1436
        %v1446 = vunpack.c.l.s4 1966171168
        %v1447 = vunpack.c.0.s8 %v1446
        %v1448 = vlaneseq
        %v1449 = vshrl.u32 %v1448, 7
        %v1450 = vsub.s32 %v1447, %v1449
        %v1451 = vrot.slane %v1436, %v1450
        %v1453 = vunpack.c.l.s4 1966171168
        %v1454 = vunpack.c.0.s8 %v1453
        %v1455 = vlaneseq
        %v1456 = vshrl.u32 %v1455, 7
        %v1457 = vsub.s32 %v1454, %v1456
        %v1458 = vrot.slane %v1443, %v1457
        %v1460 = vunpack.c.l.s4 1966171168
        %v1461 = vunpack.c.0.s8 %v1460
        %v1462 = vlaneseq
        %v1463 = vshrl.u32 %v1462, 7
        %v1464 = vsub.s32 %v1461, %v1463
        %v1465 = vrot.slane %v1444, %v1464
        %v1466 = vcombine.high %v1451, %v1451
        %v1467 = vcombine.high %v1465, %v1465
        %v1689 = vunpack.c.l.b16 %v1170
        %v1690 = vunpack.c.l.b16 %v1171
        %v1691 = vunpack.c.l.b16 %v1172
        %v1692 = vunpack.c.l.b16 %v1173
        %v1693 = vunpack.c.l.b16 %v1174
        %v1694 = vunpack.c.l.b16 %v1175
        %v1695 = vunpack.c.l.b16 %v1176
        %v1696 = vunpack.c.l.b16 %v1177
        %v1697 = vunpack.c.l.b16 %v1178
        %v1698 = vunpack.c.l.b16 %v1179
        %v1699 = vunpack.c.l.b16 %v1180
        %v1700 = vunpack.c.l.b16 %v1181
        %v1701 = vunpack.c.l.b16 %v1182
        %v1702 = vunpack.c.l.b16 %v1183
        %v1703 = vunpack.c.l.b16 %v1184
        %v1704 = vunpack.c.l.b16 %v1185
        %v1705 = vunpack.c.l.b16 %v1186
        %v1706 = vunpack.c.l.b16 %v1187
        %v1707 = vunpack.c.l.b16 %v1188
        %v1708 = vunpack.c.l.b16 %v1189
        %v1709 = vunpack.c.l.b16 %v1190
        %v1710 = vunpack.c.l.b16 %v1191
        %v1711 = vunpack.c.l.b16 %v1192
        %v1712 = vunpack.c.l.b16 %v1193
        %v1713 = vunpack.c.l.b16 %v1194
        %v1714 = vunpack.c.l.b16 %v1195
        %v1715 = vunpack.c.l.b16 %v1196
        %v1716 = vunpack.c.l.b16 %v1197
        %v1717 = vunpack.c.l.b16 %v1198
        %v1718 = vunpack.c.l.b16 %v1199
        %v1719 = vunpack.c.l.b16 %v1200
        %v1720 = vunpack.c.l.b16 %v1201
        %v1721 = vunpack.c.l.b16 %v1202
        %v1722 = vunpack.c.l.b16 %v1203
        %v1723 = vunpack.c.l.b16 %v1204
        %v1724 = vunpack.c.l.b16 %v1205
        %v1725 = vunpack.c.l.b16 %v1206
        %v1726 = vunpack.c.l.b16 %v1207
        %v1727 = vunpack.c.l.b16 %v1208
        %v1728 = vunpack.c.l.b16 %v1209
        %v1729 = vunpack.c.l.b16 %v1210
        %v1730 = vunpack.c.l.b16 %v1211
        %v1731 = vunpack.c.l.b16 %v1212
        %v1732 = vunpack.c.l.b16 %v1213
        %v1733 = vunpack.c.l.b16 %v1214
        %v1734 = vunpack.c.l.b16 %v1215
        %v1735 = vunpack.c.l.b16 %v1216
        %v1736 = vunpack.c.l.b16 %v1217
        %v1737 = vunpack.c.l.b16 %v1218
        %v1738 = vunpack.c.l.b16 %v1219
        %v1739 = vunpack.c.l.b16 %v1220
        %v1740 = vunpack.c.l.b16 %v1221
        %v1741 = vunpack.c.l.b16 %v1222
        %v1742 = vunpack.c.l.b16 %v1223
        %v1743 = vunpack.c.l.b16 %v1224
        %v1744 = vunpack.c.l.b16 %v1225
        %v1745 = vunpack.c.l.b16 %v1226
        %v1746 = vunpack.c.l.b16 %v1227
        %v1747 = vunpack.c.l.b16 %v1228
        %v1748 = vunpack.c.l.b16 %v1229
        %v1749 = vunpack.c.l.b16 %v1230
        %v1750 = vunpack.c.l.b16 %v1231
        %v1751 = vunpack.c.l.b16 %v1232
        %v1752 = vunpack.c.l.b16 %v1233
        %v1753 = vunpack.c.l.b16 %v1234
        %v1754 = vunpack.c.l.b16 %v1235
        %v1755 = vunpack.c.l.b16 %v1236
        %v1756 = vunpack.c.l.b16 %v1237
        %v1757 = vunpack.c.l.b16 %v1238
        %v1758 = vunpack.c.l.b16 %v1239
        %v1759 = vunpack.c.l.b16 %v1240
        %v1760 = vunpack.c.l.b16 %v1241
        %v1761 = vunpack.c.l.b16 %v1242
        %v1762 = vunpack.c.l.b16 %v1243
        %v1763 = vunpack.c.l.b16 %v1244
        %v1764 = vunpack.c.l.b16 %v1245
        %v1765 = vunpack.c.l.b16 %v1246
        %v1766 = vunpack.c.l.b16 %v1247
        %v1767 = vunpack.c.l.b16 %v1248
        %v1768 = vunpack.c.l.b16 %v1249
        %v1769 = vunpack.c.l.b16 %v1250
        %v1770 = vunpack.c.l.b16 %v1251
        %v1771 = vunpack.c.l.b16 %v1252
        %v1772 = vunpack.c.l.b16 %v1253
        %v1773 = vunpack.c.l.b16 %v1254
        %v1774 = vunpack.c.l.b16 %v1255
        %v1775 = vunpack.c.l.b16 %v1256
        %v1776 = vunpack.c.l.b16 %v1257
        %v1777 = vunpack.c.l.b16 %v1258
        %v1778 = vunpack.c.l.b16 %v1259
        %v1779 = vunpack.c.l.b16 %v1260
        %v1780 = vunpack.c.l.b16 %v1261
        %v1781 = vunpack.c.l.b16 %v1262
        %v1782 = vunpack.c.l.b16 %v1263
        %v1783 = vunpack.c.l.b16 %v1264
        %v1784 = vunpack.c.l.b16 %v1265
        %v1785 = vunpack.c.l.b16 %v1266
        %v1786 = vunpack.c.l.b16 %v1267
        %v1787 = vunpack.c.l.b16 %v1268
        %v1788 = vunpack.c.l.b16 %v1269
        %v1789 = vunpack.c.l.b16 %v1270
        %v1790 = vunpack.c.l.b16 %v1271
        %v1791 = vunpack.c.l.b16 %v1272
        %v1792 = vunpack.c.l.b16 %v1273
        %v1793 = vunpack.c.l.b16 %v1274
        %v1794 = vunpack.c.l.b16 %v1275
        %v1795 = vunpack.c.l.b16 %v1276
        %v1796 = vunpack.c.l.b16 %v1277
        %v1797 = vunpack.c.l.b16 %v1278
        %v1798 = vunpack.c.l.b16 %v1279
        %v1799 = vunpack.c.l.b16 %v1280
        %v1800 = vunpack.c.l.b16 %v1281
        %v1801 = vunpack.c.l.b16 %v1282
        %v1802 = vunpack.c.l.b16 %v1283
        %v1803 = vunpack.c.l.b16 %v1284
        %v1804 = vunpack.c.l.b16 %v1285
        %v1805 = vunpack.c.l.b16 %v1286
        %v1806 = vunpack.c.l.b16 %v1287
        %v1807 = vunpack.c.l.b16 %v1288
        %v1808 = vunpack.c.l.b16 %v1289
        %v1809 = vunpack.c.l.b16 %v1290
        %v1810 = vunpack.c.l.b16 %v1291
        %v1811 = vunpack.c.l.b16 %v1292
        %v1812 = vunpack.c.l.b16 %v1293
        %v1813 = vunpack.c.l.b16 %v1294
        %v1814 = vunpack.c.l.b16 %v1295
        %v1815 = vunpack.c.l.b16 %v1296
        %v1816 = vunpack.c.l.b16 %v1297
        %v1817 = vunpack.c.l.b16 %v1298
        %v1818 = vunpack.c.l.b16 %v1299
        %v1819 = vunpack.c.l.b16 %v1300
        %v1820 = vunpack.c.l.b16 %v1301
        %v1821 = vunpack.c.l.b16 %v1302
        %v1822 = vunpack.c.l.b16 %v1303
        %v1823 = vunpack.c.l.b16 %v1304
        %v1824 = vunpack.c.l.b16 %v1305
        %v1825 = vunpack.c.l.b16 %v1306
        %v1826 = vunpack.c.l.b16 %v1307
        %v1827 = vunpack.c.l.b16 %v1308
        %v1828 = vunpack.c.l.b16 %v1309
        %v1829 = vunpack.c.l.b16 %v1310
        %v1830 = vunpack.c.l.b16 %v1311
        %v1831 = vunpack.c.l.b16 %v1312
        %v1832 = vunpack.c.l.b16 %v1313
        %v1833 = vunpack.c.l.b16 %v1314
        %v1834 = vunpack.c.l.b16 %v1315
        %v1835 = vunpack.c.l.b16 %v1316
        %v1836 = vunpack.c.l.b16 %v1317
        %v1837 = vunpack.c.l.b16 %v1318
        %v1838 = vunpack.c.l.b16 %v1319
        %v1839 = vunpack.c.l.b16 %v1320
        %v1840 = vunpack.c.l.b16 %v1321
        %v1841 = vunpack.c.l.b16 %v1322
        %v1842 = vunpack.c.l.b16 %v1323
        %v1843 = vunpack.c.l.b16 %v1324
        %v1844 = vunpack.c.l.b16 %v1325
        %v1845 = vunpack.c.l.b16 %v1326
        %v1846 = vunpack.c.l.b16 %v1327
        %v1847 = vunpack.c.l.b16 %v1328
        %v1848 = vunpack.c.l.b16 %v1329
        %v1849 = vunpack.c.l.b16 %v1330
        %v1850 = vunpack.c.l.b16 %v1331
        %v1851 = vunpack.c.l.b16 %v1332
        %v1852 = vunpack.c.l.b16 %v1333
        %v1853 = vunpack.c.l.b16 %v1334
        %v1854 = vunpack.c.l.b16 %v1335
        %v1855 = vunpack.c.l.b16 %v1336
        %v1856 = vunpack.c.l.b16 %v1337
        %v1857 = vunpack.c.l.b16 %v1338
        %v1858 = vunpack.c.l.b16 %v1339
        %v1859 = vunpack.c.l.b16 %v1340
        %v1860 = vunpack.c.l.b16 %v1341
        %v1861 = vunpack.c.l.b16 %v1342
        %v1862 = vunpack.c.l.b16 %v1343
        %v1863 = vunpack.c.l.b16 %v1344
        %v1864 = vunpack.c.l.b16 %v1345
        %v1865 = vunpack.c.l.b16 %v1346
        %v1866 = vunpack.c.l.b16 %v1347
        %v1867 = vunpack.c.l.b16 %v1348
        %v1868 = vunpack.c.l.b16 %v1349
        %v1869 = vunpack.c.l.b16 %v1350
        %v1870 = vunpack.c.l.b16 %v1351
        %v1871 = vunpack.c.l.b16 %v1352
        %v1872 = vunpack.c.l.b16 %v1353
        %v1873 = vunpack.c.l.b16 %v1354
        %v1874 = vunpack.c.l.b16 %v1355
        %v1875 = vunpack.c.l.b16 %v1356
        %v1876 = vunpack.c.l.b16 %v1357
        %v1877 = vunpack.c.l.b16 %v1358
        %v1878 = vunpack.c.l.b16 %v1359
        %v1879 = vunpack.c.l.b16 %v1360
        %v1880 = vunpack.c.l.b16 %v1361
        %v1881 = vunpack.c.l.b16 %v1362
        %v1882 = vunpack.c.l.b16 %v1363
        %v1883 = vunpack.c.l.b16 %v1364
        %v1884 = vunpack.c.l.b16 %v1365
        %v1885 = vunpack.c.l.b16 %v1366
        %v1886 = vunpack.c.l.b16 %v1367
        %v1887 = vunpack.c.l.b16 %v1368
        %v1888 = vunpack.c.l.b16 %v1369
        %v1889 = vunpack.c.l.b16 %v1370
        %v1890 = vunpack.c.l.b16 %v1371
        %v1891 = vunpack.c.l.b16 %v1372
        %v1892 = vunpack.c.l.b16 %v1373
        %v1893 = vunpack.c.l.b16 %v1374
        %v1894 = vunpack.c.l.b16 %v1375
        %v1895 = vunpack.c.l.b16 %v1376
        %v1896 = vunpack.c.l.b16 %v1377
        %v1897 = vpack.c.b16 %v1690, %v1689
        %v1898 = vpack.c.b16 %v1692, %v1691
        %v1899 = vpack.c.b16 %v1694, %v1693
        %v1900 = vpack.c.b16 %v1696, %v1695
        %v1901 = vpack.c.b16 %v1698, %v1697
        %v1902 = vpack.c.b16 %v1700, %v1699
        %v1903 = vpack.c.b16 %v1702, %v1701
        %v1904 = vpack.c.b16 %v1704, %v1703
        %v1905 = vpack.c.b16 %v1706, %v1705
        %v1906 = vpack.c.b16 %v1708, %v1707
        %v1907 = vpack.c.b16 %v1710, %v1709
        %v1908 = vpack.c.b16 %v1712, %v1711
        %v1909 = vpack.c.b16 %v1714, %v1713
        %v1910 = vpack.c.b16 %v1716, %v1715
        %v1911 = vpack.c.b16 %v1718, %v1717
        %v1912 = vpack.c.b16 %v1720, %v1719
        %v1913 = vpack.c.b16 %v1722, %v1721
        %v1914 = vpack.c.b16 %v1724, %v1723
        %v1915 = vpack.c.b16 %v1726, %v1725
        %v1916 = vpack.c.b16 %v1728, %v1727
        %v1917 = vpack.c.b16 %v1730, %v1729
        %v1918 = vpack.c.b16 %v1732, %v1731
        %v1919 = vpack.c.b16 %v1734, %v1733
        %v1920 = vpack.c.b16 %v1736, %v1735
        %v1921 = vpack.c.b16 %v1738, %v1737
        %v1922 = vpack.c.b16 %v1740, %v1739
        %v1923 = vpack.c.b16 %v1742, %v1741
        %v1924 = vpack.c.b16 %v1744, %v1743
        %v1925 = vpack.c.b16 %v1746, %v1745
        %v1926 = vpack.c.b16 %v1748, %v1747
        %v1927 = vpack.c.b16 %v1750, %v1749
        %v1928 = vpack.c.b16 %v1752, %v1751
        %v1929 = vpack.c.b16 %v1754, %v1753
        %v1930 = vpack.c.b16 %v1756, %v1755
        %v1931 = vpack.c.b16 %v1758, %v1757
        %v1932 = vpack.c.b16 %v1760, %v1759
        %v1933 = vpack.c.b16 %v1762, %v1761
        %v1934 = vpack.c.b16 %v1764, %v1763
        %v1935 = vpack.c.b16 %v1766, %v1765
        %v1936 = vpack.c.b16 %v1768, %v1767
        %v1937 = vpack.c.b16 %v1770, %v1769
        %v1938 = vpack.c.b16 %v1772, %v1771
        %v1939 = vpack.c.b16 %v1774, %v1773
        %v1940 = vpack.c.b16 %v1776, %v1775
        %v1941 = vpack.c.b16 %v1778, %v1777
        %v1942 = vpack.c.b16 %v1780, %v1779
        %v1943 = vpack.c.b16 %v1782, %v1781
        %v1944 = vpack.c.b16 %v1784, %v1783
        %v1945 = vpack.c.b16 %v1786, %v1785
        %v1946 = vpack.c.b16 %v1788, %v1787
        %v1947 = vpack.c.b16 %v1790, %v1789
        %v1948 = vpack.c.b16 %v1792, %v1791
        %v1949 = vpack.c.b16 %v1794, %v1793
        %v1950 = vpack.c.b16 %v1796, %v1795
        %v1951 = vpack.c.b16 %v1798, %v1797
        %v1952 = vpack.c.b16 %v1800, %v1799
        %v1953 = vpack.c.b16 %v1802, %v1801
        %v1954 = vpack.c.b16 %v1804, %v1803
        %v1955 = vpack.c.b16 %v1806, %v1805
        %v1956 = vpack.c.b16 %v1808, %v1807
        %v1957 = vpack.c.b16 %v1810, %v1809
        %v1958 = vpack.c.b16 %v1812, %v1811
        %v1959 = vpack.c.b16 %v1814, %v1813
        %v1960 = vpack.c.b16 %v1816, %v1815
        %v1961 = vpack.c.b16 %v1818, %v1817
        %v1962 = vpack.c.b16 %v1820, %v1819
        %v1963 = vpack.c.b16 %v1822, %v1821
        %v1964 = vpack.c.b16 %v1824, %v1823
        %v1965 = vpack.c.b16 %v1826, %v1825
        %v1966 = vpack.c.b16 %v1828, %v1827
        %v1967 = vpack.c.b16 %v1830, %v1829
        %v1968 = vpack.c.b16 %v1832, %v1831
        %v1969 = vpack.c.b16 %v1834, %v1833
        %v1970 = vpack.c.b16 %v1836, %v1835
        %v1971 = vpack.c.b16 %v1838, %v1837
        %v1972 = vpack.c.b16 %v1840, %v1839
        %v1973 = vpack.c.b16 %v1842, %v1841
        %v1974 = vpack.c.b16 %v1844, %v1843
        %v1975 = vpack.c.b16 %v1846, %v1845
        %v1976 = vpack.c.b16 %v1848, %v1847
        %v1977 = vpack.c.b16 %v1850, %v1849
        %v1978 = vpack.c.b16 %v1852, %v1851
        %v1979 = vpack.c.b16 %v1854, %v1853
        %v1980 = vpack.c.b16 %v1856, %v1855
        %v1981 = vpack.c.b16 %v1858, %v1857
        %v1982 = vpack.c.b16 %v1860, %v1859
        %v1983 = vpack.c.b16 %v1862, %v1861
        %v1984 = vpack.c.b16 %v1864, %v1863
        %v1985 = vpack.c.b16 %v1866, %v1865
        %v1986 = vpack.c.b16 %v1868, %v1867
        %v1987 = vpack.c.b16 %v1870, %v1869
        %v1988 = vpack.c.b16 %v1872, %v1871
        %v1989 = vpack.c.b16 %v1874, %v1873
        %v1990 = vpack.c.b16 %v1876, %v1875
        %v1991 = vpack.c.b16 %v1878, %v1877
        %v1992 = vpack.c.b16 %v1880, %v1879
        %v1993 = vpack.c.b16 %v1882, %v1881
        %v1994 = vpack.c.b16 %v1884, %v1883
        %v1995 = vpack.c.b16 %v1886, %v1885
        %v1996 = vpack.c.b16 %v1888, %v1887
        %v1997 = vpack.c.b16 %v1890, %v1889
        %v1998 = vpack.c.b16 %v1892, %v1891
        %v1999 = vpack.c.b16 %v1894, %v1893
        %v2000 = vpack.c.b16 %v1896, %v1895
        %2105 = vmatprep.subr.bf16.mxu0 0
        %2106 = vmatpush1.bf16.msra.mxu0 %v1897
        %2107 = vmatprep.subr.bf16.mxu0 0
        %2108 = vmatpush1.bf16.msra.mxu0 %v1898
        %2109 = vmatprep.subr.bf16.mxu0 0
        %2110 = vmatpush1.bf16.msra.mxu0 %v1899
        %2111 = vmatprep.subr.bf16.mxu0 0
        %2112 = vmatpush1.bf16.msra.mxu0 %v1900
        %2113 = vmatprep.subr.bf16.mxu0 0
        %2114 = vmatpush1.bf16.msra.mxu0 %v1901
        %2115 = vmatprep.subr.bf16.mxu0 0
        %2116 = vmatpush1.bf16.msra.mxu0 %v1902
        %2117 = vmatprep.subr.bf16.mxu0 0
        %2118 = vmatpush1.bf16.msra.mxu0 %v1903
        %2119 = vmatprep.subr.bf16.mxu0 0
        %2120 = vmatpush1.bf16.msra.mxu0 %v1904
        %2121 = vmatprep.subr.bf16.mxu0 0
        %2122 = vmatpush1.bf16.msra.mxu0 %v1905
        %2123 = vmatprep.subr.bf16.mxu0 0
        %2124 = vmatpush1.bf16.msra.mxu0 %v1906
        %2125 = vmatprep.subr.bf16.mxu0 0
        %2126 = vmatpush1.bf16.msra.mxu0 %v1907
        %2127 = vmatprep.subr.bf16.mxu0 0
        %2128 = vmatpush1.bf16.msra.mxu0 %v1908
        %2129 = vmatprep.subr.bf16.mxu0 0
        %2130 = vmatpush1.bf16.msra.mxu0 %v1909
        %2131 = vmatprep.subr.bf16.mxu0 0
        %2132 = vmatpush1.bf16.msra.mxu0 %v1910
        %2133 = vmatprep.subr.bf16.mxu0 0
        %2134 = vmatpush1.bf16.msra.mxu0 %v1911
        %2135 = vmatprep.subr.bf16.mxu0 0
        %2136 = vmatpush1.bf16.msra.mxu0 %v1912
        %2137 = vmatprep.mubr.bf16.mxu0 %v1417
        %2138 = vmatmul.mubr.bf16.gmra.mrb[0].mxu0 %v1403
        %v2139 = vpop.f32.mrb[0].mxu0
        %v2140 = vadd.f32 0.0, %v2139
        %v2141 = vpop.f32.mrb[0].mxu0
        %v2142 = vpop.f32.mrb[0].mxu0
        %v2143 = vpop.f32.mrb[0].mxu0
        %2144 = vdwg.mxu0
        %2145 = vmatprep.subr.bf16.mxu0 0
        %2146 = vmatpush1.bf16.msra.mxu0 %v1913
        %2147 = vmatprep.subr.bf16.mxu0 0
        %2148 = vmatpush1.bf16.msra.mxu0 %v1914
        %2149 = vmatprep.subr.bf16.mxu0 0
        %2150 = vmatpush1.bf16.msra.mxu0 %v1915
        %2151 = vmatprep.subr.bf16.mxu0 0
        %2152 = vmatpush1.bf16.msra.mxu0 %v1916
        %2153 = vmatprep.subr.bf16.mxu0 0
        %2154 = vmatpush1.bf16.msra.mxu0 %v1917
        %2155 = vmatprep.subr.bf16.mxu0 0
        %2156 = vmatpush1.bf16.msra.mxu0 %v1918
        %2157 = vmatprep.subr.bf16.mxu0 0
        %2158 = vmatpush1.bf16.msra.mxu0 %v1919
        %2159 = vmatprep.subr.bf16.mxu0 0
        %2160 = vmatpush1.bf16.msra.mxu0 %v1920
        %2161 = vmatprep.subr.bf16.mxu0 0
        %2162 = vmatpush1.bf16.msra.mxu0 %v1921
        %2163 = vmatprep.subr.bf16.mxu0 0
        %2164 = vmatpush1.bf16.msra.mxu0 %v1922
        %2165 = vmatprep.subr.bf16.mxu0 0
        %2166 = vmatpush1.bf16.msra.mxu0 %v1923
        %2167 = vmatprep.subr.bf16.mxu0 0
        %2168 = vmatpush1.bf16.msra.mxu0 %v1924
        %2169 = vmatprep.subr.bf16.mxu0 0
        %2170 = vmatpush1.bf16.msra.mxu0 %v1925
        %2171 = vmatprep.subr.bf16.mxu0 0
        %2172 = vmatpush1.bf16.msra.mxu0 %v1926
        %2173 = vmatprep.subr.bf16.mxu0 0
        %2174 = vmatpush1.bf16.msra.mxu0 %v1927
        %2175 = vmatprep.subr.bf16.mxu0 0
        %2176 = vmatpush1.bf16.msra.mxu0 %v1928
        %2177 = vmatprep.mubr.bf16.mxu0 %v1427
        %2178 = vmatmul.mubr.bf16.gmra.mrb[0].mxu0 %v1425
        %v2179 = vpop.f32.mrb[0].mxu0
        %v2180 = vadd.f32 %v2140, %v2179
        %v2181 = vpop.f32.mrb[0].mxu0
        %v2182 = vpop.f32.mrb[0].mxu0
        %v2183 = vpop.f32.mrb[0].mxu0
        %2184 = vdwg.mxu0
        %2185 = vmatprep.subr.bf16.mxu0 0
        %2186 = vmatpush1.bf16.msra.mxu0 %v1929
        %2187 = vmatprep.subr.bf16.mxu0 0
        %2188 = vmatpush1.bf16.msra.mxu0 %v1930
        %2189 = vmatprep.subr.bf16.mxu0 0
        %2190 = vmatpush1.bf16.msra.mxu0 %v1931
        %2191 = vmatprep.subr.bf16.mxu0 0
        %2192 = vmatpush1.bf16.msra.mxu0 %v1932
        %2193 = vmatprep.subr.bf16.mxu0 0
        %2194 = vmatpush1.bf16.msra.mxu0 %v1933
        %2195 = vmatprep.subr.bf16.mxu0 0
        %2196 = vmatpush1.bf16.msra.mxu0 %v1934
        %2197 = vmatprep.subr.bf16.mxu0 0
        %2198 = vmatpush1.bf16.msra.mxu0 %v1935
        %2199 = vmatprep.subr.bf16.mxu0 0
        %2200 = vmatpush1.bf16.msra.mxu0 %v1936
        %2201 = vmatprep.subr.bf16.mxu0 0
        %2202 = vmatpush1.bf16.msra.mxu0 %v1937
        %2203 = vmatprep.subr.bf16.mxu0 0
        %2204 = vmatpush1.bf16.msra.mxu0 %v1938
        %2205 = vmatprep.subr.bf16.mxu0 0
        %2206 = vmatpush1.bf16.msra.mxu0 %v1939
        %2207 = vmatprep.subr.bf16.mxu0 0
        %2208 = vmatpush1.bf16.msra.mxu0 %v1940
        %2209 = vmatprep.subr.bf16.mxu0 0
        %2210 = vmatpush1.bf16.msra.mxu0 %v1941
        %2211 = vmatprep.subr.bf16.mxu0 0
        %2212 = vmatpush1.bf16.msra.mxu0 %v1942
        %2213 = vmatprep.subr.bf16.mxu0 0
        %2214 = vmatpush1.bf16.msra.mxu0 %v1943
        %2215 = vmatprep.subr.bf16.mxu0 0
        %2216 = vmatpush1.bf16.msra.mxu0 %v1944
        %2217 = vmatprep.mubr.bf16.mxu0 %v1424
        %2218 = vmatmul.mubr.bf16.gmra.mrb[0].mxu0 %v1410
        %v2219 = vpop.f32.mrb[0].mxu0
        %v2220 = vadd.f32 %v2180, %v2219
        %v2221 = vpop.f32.mrb[0].mxu0
        %v2222 = vpop.f32.mrb[0].mxu0
        %v2223 = vpop.f32.mrb[0].mxu0
        %2224 = vdwg.mxu0
        %2225 = vmatprep.subr.bf16.mxu0 0
        %2226 = vmatpush1.bf16.msra.mxu0 %v1945
        %2227 = vmatprep.subr.bf16.mxu0 0
        %2228 = vmatpush1.bf16.msra.mxu0 %v1946
        %2229 = vmatprep.subr.bf16.mxu0 0
        %2230 = vmatpush1.bf16.msra.mxu0 %v1947
        %2231 = vmatprep.subr.bf16.mxu0 0
        %2232 = vmatpush1.bf16.msra.mxu0 %v1948
        %2233 = vmatprep.subr.bf16.mxu0 0
        %2234 = vmatpush1.bf16.msra.mxu0 %v1949
        %2235 = vmatprep.subr.bf16.mxu0 0
        %2236 = vmatpush1.bf16.msra.mxu0 %v1950
        %2237 = vmatprep.subr.bf16.mxu0 0
        %2238 = vmatpush1.bf16.msra.mxu0 %v1951
        %2239 = vmatprep.subr.bf16.mxu0 0
        %2240 = vmatpush1.bf16.msra.mxu0 %v1952
        %2241 = vmatprep.subr.bf16.mxu0 0
        %2242 = vmatpush1.bf16.msra.mxu0 %v1953
        %2243 = vmatprep.subr.bf16.mxu0 0
        %2244 = vmatpush1.bf16.msra.mxu0 %v1954
        %2245 = vmatprep.subr.bf16.mxu0 0
        %2246 = vmatpush1.bf16.msra.mxu0 %v1955
        %2247 = vmatprep.subr.bf16.mxu0 0
        %2248 = vmatpush1.bf16.msra.mxu0 %v1956
        %2249 = vmatprep.subr.bf16.mxu0 0
        %2250 = vmatpush1.bf16.msra.mxu0 %v1957
        %2251 = vmatprep.subr.bf16.mxu0 0
        %2252 = vmatpush1.bf16.msra.mxu0 %v1958
        %2253 = vmatprep.subr.bf16.mxu0 0
        %2254 = vmatpush1.bf16.msra.mxu0 %v1959
        %2255 = vmatprep.subr.bf16.mxu0 0
        %2256 = vmatpush1.bf16.msra.mxu0 %v1960
        %2257 = vmatprep.mubr.bf16.mxu0 %v1428
        %2258 = vmatmul.mubr.bf16.gmra.mrb[0].mxu0 %v1426
        %v2259 = vpop.f32.mrb[0].mxu0
        %v2260 = vadd.f32 %v2220, %v2259
        %v2261 = vpop.f32.mrb[0].mxu0
        %v2262 = vpop.f32.mrb[0].mxu0
        %v2263 = vpop.f32.mrb[0].mxu0
        %2264 = vdwg.mxu0
        %2265 = vmatprep.subr.bf16.mxu0 0
        %2266 = vmatpush1.bf16.msra.mxu0 %v1961
        %2267 = vmatprep.subr.bf16.mxu0 0
        %2268 = vmatpush1.bf16.msra.mxu0 %v1962
        %2269 = vmatprep.subr.bf16.mxu0 0
        %2270 = vmatpush1.bf16.msra.mxu0 %v1963
        %2271 = vmatprep.subr.bf16.mxu0 0
        %2272 = vmatpush1.bf16.msra.mxu0 %v1964
        %2273 = vmatprep.subr.bf16.mxu0 0
        %2274 = vmatpush1.bf16.msra.mxu0 %v1965
        %2275 = vmatprep.subr.bf16.mxu0 0
        %2276 = vmatpush1.bf16.msra.mxu0 %v1966
        %2277 = vmatprep.subr.bf16.mxu0 0
        %2278 = vmatpush1.bf16.msra.mxu0 %v1967
        %2279 = vmatprep.subr.bf16.mxu0 0
        %2280 = vmatpush1.bf16.msra.mxu0 %v1968
        %2281 = vmatprep.subr.bf16.mxu0 0
        %2282 = vmatpush1.bf16.msra.mxu0 %v1969
        %2283 = vmatprep.subr.bf16.mxu0 0
        %2284 = vmatpush1.bf16.msra.mxu0 %v1970
        %2285 = vmatprep.subr.bf16.mxu0 0
        %2286 = vmatpush1.bf16.msra.mxu0 %v1971
        %2287 = vmatprep.subr.bf16.mxu0 0
        %2288 = vmatpush1.bf16.msra.mxu0 %v1972
        %2289 = vmatprep.subr.bf16.mxu0 0
        %2290 = vmatpush1.bf16.msra.mxu0 %v1973
        %2291 = vmatprep.subr.bf16.mxu0 0
        %2292 = vmatpush1.bf16.msra.mxu0 %v1974
        %2293 = vmatprep.subr.bf16.mxu0 0
        %2294 = vmatpush1.bf16.msra.mxu0 %v1975
        %2295 = vmatprep.subr.bf16.mxu0 0
        %2296 = vmatpush1.bf16.msra.mxu0 %v1976
        %2297 = vmatprep.mubr.bf16.mxu0 %v1465
        %2298 = vmatmul.mubr.bf16.gmra.mrb[0].mxu0 %v1451
        %v2299 = vpop.f32.mrb[0].mxu0
        %v2300 = vadd.f32 %v2260, %v2299
        %v2301 = vpop.f32.mrb[0].mxu0
        %v2302 = vpop.f32.mrb[0].mxu0
        %v2303 = vpop.f32.mrb[0].mxu0
        %2304 = vdwg.mxu0
        %2305 = vmatprep.subr.bf16.mxu0 0
        %2306 = vmatpush1.bf16.msra.mxu0 %v1977
        %2307 = vmatprep.subr.bf16.mxu0 0
        %2308 = vmatpush1.bf16.msra.mxu0 %v1978
        %2309 = vmatprep.subr.bf16.mxu0 0
        %2310 = vmatpush1.bf16.msra.mxu0 %v1979
        %2311 = vmatprep.subr.bf16.mxu0 0
        %2312 = vmatpush1.bf16.msra.mxu0 %v1980
        %2313 = vmatprep.subr.bf16.mxu0 0
        %2314 = vmatpush1.bf16.msra.mxu0 %v1981
        %2315 = vmatprep.subr.bf16.mxu0 0
        %2316 = vmatpush1.bf16.msra.mxu0 %v1982
        %2317 = vmatprep.subr.bf16.mxu0 0
        %2318 = vmatpush1.bf16.msra.mxu0 %v1983
        %2319 = vmatprep.subr.bf16.mxu0 0
        %2320 = vmatpush1.bf16.msra.mxu0 %v1984
        %2321 = vmatprep.subr.bf16.mxu0 0
        %2322 = vmatpush1.bf16.msra.mxu0 %v1985
        %2323 = vmatprep.subr.bf16.mxu0 0
        %2324 = vmatpush1.bf16.msra.mxu0 %v1986
        %2325 = vmatprep.subr.bf16.mxu0 0
        %2326 = vmatpush1.bf16.msra.mxu0 %v1987
        %2327 = vmatprep.subr.bf16.mxu0 0
        %2328 = vmatpush1.bf16.msra.mxu0 %v1988
        %2329 = vmatprep.subr.bf16.mxu0 0
        %2330 = vmatpush1.bf16.msra.mxu0 %v1989
        %2331 = vmatprep.subr.bf16.mxu0 0
        %2332 = vmatpush1.bf16.msra.mxu0 %v1990
        %2333 = vmatprep.subr.bf16.mxu0 0
        %2334 = vmatpush1.bf16.msra.mxu0 %v1991
        %2335 = vmatprep.subr.bf16.mxu0 0
        %2336 = vmatpush1.bf16.msra.mxu0 %v1992
        %2337 = vmatprep.mubr.bf16.mxu0 %v1467
        %2338 = vmatmul.mubr.bf16.gmra.mrb[0].mxu0 %v1466
        %v2339 = vpop.f32.mrb[0].mxu0
        %v2340 = vadd.f32 %v2300, %v2339
        %v2341 = vpop.f32.mrb[0].mxu0
        %v2342 = vpop.f32.mrb[0].mxu0
        %v2343 = vpop.f32.mrb[0].mxu0
        %2344 = vdwg.mxu0
        %2345 = vmatprep.subr.bf16.mxu0 0
        %2346 = vmatpush1.bf16.msra.mxu0 %v1993
        %2347 = vmatprep.subr.bf16.mxu0 0
        %2348 = vmatpush1.bf16.msra.mxu0 %v1994
        %2349 = vmatprep.subr.bf16.mxu0 0
        %2350 = vmatpush1.bf16.msra.mxu0 %v1995
        %2351 = vmatprep.subr.bf16.mxu0 0
        %2352 = vmatpush1.bf16.msra.mxu0 %v1996
        %2353 = vmatprep.subr.bf16.mxu0 0
        %2354 = vmatpush1.bf16.msra.mxu0 %v1997
        %2355 = vmatprep.subr.bf16.mxu0 0
        %2356 = vmatpush1.bf16.msra.mxu0 %v1998
        %2357 = vmatprep.subr.bf16.mxu0 0
        %2358 = vmatpush1.bf16.msra.mxu0 %v1999
        %2359 = vmatprep.subr.bf16.mxu0 0
        %2360 = vmatpush1.bf16.msra.mxu0 %v2000
        %2361 = vmatprep.subr.bf16.mxu0 0
        %2362 = vmatpush1.bf16.msra.mxu0 0
        %2363 = vmatprep.subr.bf16.mxu0 0
        %2364 = vmatpush1.bf16.msra.mxu0 0
        %2365 = vmatprep.subr.bf16.mxu0 0
        %2366 = vmatpush1.bf16.msra.mxu0 0
        %2367 = vmatprep.subr.bf16.mxu0 0
        %2368 = vmatpush1.bf16.msra.mxu0 0
        %2369 = vmatprep.subr.bf16.mxu0 0
        %2370 = vmatpush1.bf16.msra.mxu0 0
        %2371 = vmatprep.subr.bf16.mxu0 0
        %2372 = vmatpush1.bf16.msra.mxu0 0
        %2373 = vmatprep.subr.bf16.mxu0 0
        %2374 = vmatpush1.bf16.msra.mxu0 0
        %2375 = vmatprep.subr.bf16.mxu0 0
        %2376 = vmatpush1.bf16.msra.mxu0 0
        %2377 = vmatprep.mubr.bf16.mxu0 0
        %2378 = vmatmul.mubr.bf16.gmra.mrb[0].mxu0 %v1458
        %v2379 = vpop.f32.mrb[0].mxu0
        %v2380 = vadd.f32 %v2340, %v2379
        %v2381 = vpop.f32.mrb[0].mxu0
        %v2382 = vpop.f32.mrb[0].mxu0
        %v2383 = vpop.f32.mrb[0].mxu0
        %2384 = vdwg.mxu0
        %v2385 = vadd.f32 %v1167, %v2380
        %2386 = vst [vmem:[#allocation2] sm:$0x3] %v2385
        // Predicated region
        $region90: #{net_forward.7} parent=76 // pred_check
          %p2387 = pneg %p1154
        $region91: #{net_forward.7} parent=76 // pred_check_branch
          %2389 = sbr.rel (%p2387) target = $region93
        $region92: #{net_forward.7} parent=76 // pred_region
          %v2390 = vld [vmem:[#allocation2] sm:$0x3]
          %v2391 = vld [vmem:[%s1146] sm:$0x1]
          %v2393 = vlaneseq
          %v2394 = vshrl.u32 %v2393, 7
          %v2395 = vsub.s32 0, %v2394
          %v2396 = vrot.slane %v2391, %v2395
          %v2398 = vadd.f32 %v2390, %v2396
          %v2399 = vmax.f32 %v2398, 0.0
          %v2400 = vld [vmem:[#allocation3] sm:$0x3]
          %v2401 = vpack.c.bf16 %v2399, %v2399
          %v2402 = vld [vmem:[%s1151] sm:$0xf]
          %v2403 = vld [vmem:[%s1151 + $0x4] sm:$0xf]
          %v2404 = vld [vmem:[%s1151 + $0x8] sm:$0xf]
          %v2405 = vld [vmem:[%s1151 + $0xc] sm:$0xf]
          %v2406 = vld [vmem:[%s1151 + $0x10] sm:$0xf]
          %v2407 = vld [vmem:[%s1151 + $0x14] sm:$0xf]
          %v2408 = vld [vmem:[%s1151 + $0x18] sm:$0xf]
          %v2409 = vld [vmem:[%s1151 + $0x1c] sm:$0xf]
          %v2410 = vld [vmem:[%s1151 + $0x20] sm:$0xf]
          %v2411 = vld [vmem:[%s1151 + $0x24] sm:$0xf]
          %v2412 = vld [vmem:[%s1151 + $0x28] sm:$0xf]
          %v2413 = vld [vmem:[%s1151 + $0x2c] sm:$0xf]
          %v2414 = vld [vmem:[%s1151 + $0x30] sm:$0xf]
          %v2415 = vld [vmem:[%s1151 + $0x34] sm:$0xf]
          %v2416 = vld [vmem:[%s1151 + $0x38] sm:$0xf]
          %v2417 = vld [vmem:[%s1151 + $0x3c] sm:$0xf]
          %v2434 = vunpack.c.l.b16 %v2402
          %v2435 = vunpack.c.l.b16 %v2403
          %v2436 = vunpack.c.l.b16 %v2404
          %v2437 = vunpack.c.l.b16 %v2405
          %v2438 = vunpack.c.l.b16 %v2406
          %v2439 = vunpack.c.l.b16 %v2407
          %v2440 = vunpack.c.l.b16 %v2408
          %v2441 = vunpack.c.l.b16 %v2409
          %v2442 = vunpack.c.l.b16 %v2410
          %v2443 = vunpack.c.l.b16 %v2411
          %v2444 = vunpack.c.l.b16 %v2412
          %v2445 = vunpack.c.l.b16 %v2413
          %v2446 = vunpack.c.l.b16 %v2414
          %v2447 = vunpack.c.l.b16 %v2415
          %v2448 = vunpack.c.l.b16 %v2416
          %v2449 = vunpack.c.l.b16 %v2417
          %v2450 = vpack.c.b16 %v2435, %v2434
          %v2451 = vpack.c.b16 %v2437, %v2436
          %v2452 = vpack.c.b16 %v2439, %v2438
          %v2453 = vpack.c.b16 %v2441, %v2440
          %v2454 = vpack.c.b16 %v2443, %v2442
          %v2455 = vpack.c.b16 %v2445, %v2444
          %v2456 = vpack.c.b16 %v2447, %v2446
          %v2457 = vpack.c.b16 %v2449, %v2448
          %2466 = vmatprep.subr.bf16.mxu0 0
          %2467 = vmatpush1.bf16.msra.mxu0 %v2450
          %2468 = vmatprep.subr.bf16.mxu0 0
          %2469 = vmatpush1.bf16.msra.mxu0 %v2451
          %2470 = vmatprep.subr.bf16.mxu0 0
          %2471 = vmatpush1.bf16.msra.mxu0 %v2452
          %2472 = vmatprep.subr.bf16.mxu0 0
          %2473 = vmatpush1.bf16.msra.mxu0 %v2453
          %2474 = vmatprep.subr.bf16.mxu0 0
          %2475 = vmatpush1.bf16.msra.mxu0 %v2454
          %2476 = vmatprep.subr.bf16.mxu0 0
          %2477 = vmatpush1.bf16.msra.mxu0 %v2455
          %2478 = vmatprep.subr.bf16.mxu0 0
          %2479 = vmatpush1.bf16.msra.mxu0 %v2456
          %2480 = vmatprep.subr.bf16.mxu0 0
          %2481 = vmatpush1.bf16.msra.mxu0 %v2457
          %2482 = vmatprep.subr.bf16.mxu0 0
          %2483 = vmatpush1.bf16.msra.mxu0 0
          %2484 = vmatprep.subr.bf16.mxu0 0
          %2485 = vmatpush1.bf16.msra.mxu0 0
          %2486 = vmatprep.subr.bf16.mxu0 0
          %2487 = vmatpush1.bf16.msra.mxu0 0
          %2488 = vmatprep.subr.bf16.mxu0 0
          %2489 = vmatpush1.bf16.msra.mxu0 0
          %2490 = vmatprep.subr.bf16.mxu0 0
          %2491 = vmatpush1.bf16.msra.mxu0 0
          %2492 = vmatprep.subr.bf16.mxu0 0
          %2493 = vmatpush1.bf16.msra.mxu0 0
          %2494 = vmatprep.subr.bf16.mxu0 0
          %2495 = vmatpush1.bf16.msra.mxu0 0
          %2496 = vmatprep.subr.bf16.mxu0 0
          %2497 = vmatpush1.bf16.msra.mxu0 0
          %2498 = vmatprep.mubr.bf16.mxu0 0
          %2499 = vmatmul.mubr.bf16.gmra.mrb[0].mxu0 %v2401
          %v2500 = vpop.f32.mrb[0].mxu0
          %v2501 = vadd.f32 0.0, %v2500
          %v2502 = vpop.f32.mrb[0].mxu0
          %v2503 = vpop.f32.mrb[0].mxu0
          %v2504 = vpop.f32.mrb[0].mxu0
          %2505 = vdwg.mxu0
          %v2506 = vadd.f32 %v2400, %v2501
          %2507 = vst [vmem:[#allocation3] sm:$0x3] %v2506
        $region93: #{net_forward.7} parent=76 // pred_fallthru
          _
        %p2508 = pnand %p1154, %p1155
        %p2509 = pneg %p2508
        // Predicated region
        $region94: #{net_forward.7} parent=76 // pred_check
          _
        $region95: #{net_forward.7} parent=76 // pred_check_branch
          %2511 = sbr.rel (%p2508) target = $region97
        $region96: #{net_forward.7} parent=76 // pred_region
          %v2512 = vld [vmem:[#allocation3] sm:$0x3]
          %v2513 = vld [vmem:[%s4] sm:$0x1]
          %v2515 = vlaneseq
          %v2516 = vshrl.u32 %v2515, 7
          %v2517 = vsub.s32 0, %v2516
          %v2518 = vrot.slane %v2513, %v2517
          %v2520 = vadd.f32 %v2512, %v2518
          %2521 = vst [vmem:[#allocation5] sm:$0x3] %v2520
        $region97: #{net_forward.7} parent=76 // pred_fallthru
          _
        // Predicated region
        $region98: #{net_forward.7} parent=76 // pred_check
          %p2522 = pneg %p169
        $region99: #{net_forward.7} parent=76 // pred_check_branch
          %2524 = sbr.rel (%p2522) target = $region101
        $region100: #{net_forward.7} parent=76 // pred_region
          %s2526 = ssub.s32 32, 32
          %2527 = vsyncadd [#allocation6], %s2526
          %s2529 = sshll.u32 [#allocation5], 4
          %s2530 = int_to_ptr.vmem [resolvable:$true] %s2529
          %2532 = dma.vmem_to_hbm [thread:$0]  %s2530, 32, %s5, [#allocation6]
        $region101: #{net_forward.7} parent=76 // pred_fallthru
          _
        // Predicated region
        $region102: #{net_forward.7} parent=76 // pred_check
          %p2533 = pneg %p169
        $region103: #{net_forward.7} parent=76 // pred_check_branch
          %2535 = sbr.rel (%p2533) target = $region105
        $region104: #{net_forward.7} parent=76 // pred_region
          %2536 = dma.done [#allocation6], 32
        $region105: #{net_forward.7} parent=76 // pred_fallthru
          _
      $region77: #{net_forward.7} parent=5 // pred_fallthru
        _
      %p2537 = scmp.le.s32.totalorder 2, %s12
      // Predicated region
      $region106: #{net_forward.7} parent=5 // pred_check
        %p2538 = pneg %p2537
      $region107: #{net_forward.7} parent=5 // pred_check_branch
        %2540 = sbr.rel (%p2538) target = $region109
      $region108: #{net_forward.7} parent=5 // pred_region
        %s2541 = ssub.s32 %s12, 2
      $region109: #{net_forward.7} parent=5 // pred_fallthru
        _
    $region6: #{net_forward.7} parent=1 // loop_footer
      %s16 = sadd.s32 1, %s12
    $region7: #{net_forward.7} parent=1 // loop_footer_branch
      %11 = sbr.rel target = $region3
    $region8: #{net_forward.7} parent=1 // loop_exit
      _
    %2542 = vsyncpa [#allocation6], 1
    %s2543 = scalar_lea.sflag [#allocation6], 1
    %2544 = vsyncpa %s2543, 1

</llo_original>
